<compile_context>
chip_gen: v6e
topology: v6e:2x2x1
jax: 0.10.0
libtpu: 0.0.40
codegen_flags: <defaults>
</compile_context>

<pallas_src>
import functools
import math

import jax
import jax.numpy as jnp
from jax.experimental import pallas as pl
from jax.experimental.pallas import tpu as pltpu


# ----------------------------------------------------------------------------
# Block-size helper: largest legal tile <= target (either a multiple of
# `quantum` dividing `dim`, or the full dim).
# ----------------------------------------------------------------------------
def _pick_block(dim, target, quantum):
    if dim <= target:
        return dim
    b = (target // quantum) * quantum
    while b >= quantum:
        if dim % b == 0:
            return b
        b -= quantum
    return dim


# ----------------------------------------------------------------------------
# Fused Linear (+ bias + optional Swish) matmul kernel.
# ----------------------------------------------------------------------------
def _linear_kernel(x_ref, w_ref, b_ref, o_ref, acc_ref, *, act):
    @pl.when(pl.program_id(2) == 0)
    def _():
        acc_ref[...] = jnp.zeros_like(acc_ref)

    acc_ref[...] += jnp.dot(
        x_ref[...].astype(jnp.float32),
        w_ref[...].astype(jnp.float32),
        preferred_element_type=jnp.float32,
    )

    @pl.when(pl.program_id(2) == pl.num_programs(2) - 1)
    def _():
        y = acc_ref[...] + b_ref[...].astype(jnp.float32)
        if act == "swish":
            y = y * jax.nn.sigmoid(y)
        o_ref[...] = y.astype(o_ref.dtype)


def linear(x, w, b, act="none", *, bm=512, bn=512, bk=512):
    M, K = x.shape
    _, N = w.shape
    b2 = b.reshape(1, N).astype(x.dtype)
    bm = _pick_block(M, bm, 8)
    bn = _pick_block(N, bn, 128)
    bk = _pick_block(K, bk, 128)
    grid = (M // bm, N // bn, K // bk)
    return pl.pallas_call(
        functools.partial(_linear_kernel, act=act),
        out_shape=jax.ShapeDtypeStruct((M, N), x.dtype),
        grid_spec=pltpu.PrefetchScalarGridSpec(
            num_scalar_prefetch=0,
            grid=grid,
            in_specs=[
                pl.BlockSpec((bm, bk), lambda i, j, k: (i, k)),
                pl.BlockSpec((bk, bn), lambda i, j, k: (k, j)),
                pl.BlockSpec((1, bn), lambda i, j, k: (0, j)),
            ],
            out_specs=pl.BlockSpec((bm, bn), lambda i, j, k: (i, j)),
            scratch_shapes=[pltpu.VMEM((bm, bn), jnp.float32)],
        ),
        compiler_params=pltpu.CompilerParams(
            dimension_semantics=("parallel", "parallel", "arbitrary")
        ),
    )(x, w.astype(x.dtype), b2)


# ----------------------------------------------------------------------------
# Fused pointwise-conv-1 + GLU kernel:  out = (x@Wa + ba) * sigmoid(x@Wb + bb)
# ----------------------------------------------------------------------------
def _glu_linear_kernel(x_ref, wa_ref, wb_ref, ba_ref, bb_ref, o_ref, acc_a, acc_b):
    @pl.when(pl.program_id(2) == 0)
    def _():
        acc_a[...] = jnp.zeros_like(acc_a)
        acc_b[...] = jnp.zeros_like(acc_b)

    xf = x_ref[...].astype(jnp.float32)
    acc_a[...] += jnp.dot(xf, wa_ref[...].astype(jnp.float32),
                          preferred_element_type=jnp.float32)
    acc_b[...] += jnp.dot(xf, wb_ref[...].astype(jnp.float32),
                          preferred_element_type=jnp.float32)

    @pl.when(pl.program_id(2) == pl.num_programs(2) - 1)
    def _():
        a = acc_a[...] + ba_ref[...].astype(jnp.float32)
        g = acc_b[...] + bb_ref[...].astype(jnp.float32)
        o_ref[...] = (a * jax.nn.sigmoid(g)).astype(o_ref.dtype)


def glu_linear(x, wa, ba, wb, bb, *, bm=512, bn=512, bk=512):
    M, K = x.shape
    _, N = wa.shape
    ba2 = ba.reshape(1, N).astype(x.dtype)
    bb2 = bb.reshape(1, N).astype(x.dtype)
    bm = _pick_block(M, bm, 8)
    bn = _pick_block(N, bn, 128)
    bk = _pick_block(K, bk, 128)
    grid = (M // bm, N // bn, K // bk)
    return pl.pallas_call(
        _glu_linear_kernel,
        out_shape=jax.ShapeDtypeStruct((M, N), x.dtype),
        grid_spec=pltpu.PrefetchScalarGridSpec(
            num_scalar_prefetch=0,
            grid=grid,
            in_specs=[
                pl.BlockSpec((bm, bk), lambda i, j, k: (i, k)),
                pl.BlockSpec((bk, bn), lambda i, j, k: (k, j)),
                pl.BlockSpec((bk, bn), lambda i, j, k: (k, j)),
                pl.BlockSpec((1, bn), lambda i, j, k: (0, j)),
                pl.BlockSpec((1, bn), lambda i, j, k: (0, j)),
            ],
            out_specs=pl.BlockSpec((bm, bn), lambda i, j, k: (i, j)),
            scratch_shapes=[
                pltpu.VMEM((bm, bn), jnp.float32),
                pltpu.VMEM((bm, bn), jnp.float32),
            ],
        ),
        compiler_params=pltpu.CompilerParams(
            dimension_semantics=("parallel", "parallel", "arbitrary")
        ),
    )(x, wa.astype(x.dtype), wb.astype(x.dtype), ba2, bb2)


# ----------------------------------------------------------------------------
# LayerNorm kernel (with optional fused residual add).
# ----------------------------------------------------------------------------
def _ln_body(x, g_ref, b_ref, o_ref, eps):
    mu = jnp.mean(x, axis=-1, keepdims=True)
    xc = x - mu
    var = jnp.mean(xc * xc, axis=-1, keepdims=True)
    y = xc * jax.lax.rsqrt(var + eps)
    y = y * g_ref[...].astype(jnp.float32) + b_ref[...].astype(jnp.float32)
    o_ref[...] = y.astype(o_ref.dtype)


def _ln_kernel(x_ref, g_ref, b_ref, o_ref, *, eps):
    _ln_body(x_ref[...].astype(jnp.float32), g_ref, b_ref, o_ref, eps)


def _add_ln_kernel(x_ref, r_ref, g_ref, b_ref, o_ref, *, eps):
    x = x_ref[...].astype(jnp.float32) + r_ref[...].astype(jnp.float32)
    _ln_body(x, g_ref, b_ref, o_ref, eps)


def layer_norm(x, gamma, beta, residual=None, *, eps=1e-5, bm=512):
    M, D = x.shape
    g2 = gamma.reshape(1, D).astype(x.dtype)
    b2 = beta.reshape(1, D).astype(x.dtype)
    bm = _pick_block(M, bm, 8)
    grid = (M // bm,)
    if residual is None:
        kernel = functools.partial(_ln_kernel, eps=eps)
        in_specs = [
            pl.BlockSpec((bm, D), lambda i: (i, 0)),
            pl.BlockSpec((1, D), lambda i: (0, 0)),
            pl.BlockSpec((1, D), lambda i: (0, 0)),
        ]
        args = (x, g2, b2)
    else:
        kernel = functools.partial(_add_ln_kernel, eps=eps)
        in_specs = [
            pl.BlockSpec((bm, D), lambda i: (i, 0)),
            pl.BlockSpec((bm, D), lambda i: (i, 0)),
            pl.BlockSpec((1, D), lambda i: (0, 0)),
            pl.BlockSpec((1, D), lambda i: (0, 0)),
        ]
        args = (x, residual.astype(x.dtype), g2, b2)
    return pl.pallas_call(
        kernel,
        out_shape=jax.ShapeDtypeStruct((M, D), x.dtype),
        grid_spec=pltpu.PrefetchScalarGridSpec(
            num_scalar_prefetch=0,
            grid=grid,
            in_specs=in_specs,
            out_specs=pl.BlockSpec((bm, D), lambda i: (i, 0)),
        ),
        compiler_params=pltpu.CompilerParams(dimension_semantics=("parallel",)),
    )(*args)


# ----------------------------------------------------------------------------
# Fused depthwise-conv (over time) + eval-BatchNorm + Swish kernel.
#   x_padded: (B, T_out + K - 1, D)  (halo-padded along time)
#   w       : (K, D)   bn_scale/bn_shift : (1, D)
# ----------------------------------------------------------------------------
def _dwconv_bn_swish_kernel(x_ref, w_ref, s_ref, t_ref, o_ref, *, kernel_size):
    t_out = o_ref.shape[1]
    x = x_ref[0].astype(jnp.float32)            # (T_out + K - 1, D)
    w = w_ref[...].astype(jnp.float32)          # (K, D)
    acc = jnp.zeros((t_out, x.shape[1]), jnp.float32)
    for k in range(kernel_size):                # static unroll (K is small)
        acc = acc + x[k:k + t_out, :] * w[k, :][None, :]
    y = acc * s_ref[...].astype(jnp.float32) + t_ref[...].astype(jnp.float32)
    o_ref[0] = (y * jax.nn.sigmoid(y)).astype(o_ref.dtype)


def dwconv_bn_swish(x_padded, w_dw, bn_scale, bn_shift, t_out):
    B, Tp, D = x_padded.shape
    K = w_dw.shape[0]
    return pl.pallas_call(
        functools.partial(_dwconv_bn_swish_kernel, kernel_size=K),
        out_shape=jax.ShapeDtypeStruct((B, t_out, D), x_padded.dtype),
        grid_spec=pltpu.PrefetchScalarGridSpec(
            num_scalar_prefetch=0,
            grid=(B,),
            in_specs=[
                pl.BlockSpec((1, Tp, D), lambda b: (b, 0, 0)),
                pl.BlockSpec((K, D), lambda b: (0, 0)),
                pl.BlockSpec((1, D), lambda b: (0, 0)),
                pl.BlockSpec((1, D), lambda b: (0, 0)),
            ],
            out_specs=pl.BlockSpec((1, t_out, D), lambda b: (b, 0, 0)),
        ),
        compiler_params=pltpu.CompilerParams(dimension_semantics=("parallel",)),
    )(x_padded, w_dw.astype(x_padded.dtype),
      bn_scale.astype(x_padded.dtype), bn_shift.astype(x_padded.dtype))


# ----------------------------------------------------------------------------
# Relative positional encoding (matches RelPositionalEncoding slice semantics):
# pos_emb[j] encodes relative position r = (T-1) - j, r in [T-1, ..., -(T-1)].
# ----------------------------------------------------------------------------
def rel_pos_emb(T, D):
    r = jnp.arange(T - 1, -T, -1, dtype=jnp.float32)            # (2T-1,)
    div = jnp.exp(jnp.arange(0, D, 2, dtype=jnp.float32)
                  * (-(math.log(10000.0) / D)))
    ang = r[:, None] * div[None, :]
    pe = jnp.zeros((2 * T - 1, D), jnp.float32)
    pe = pe.at[:, 0::2].set(jnp.sin(ang))
    pe = pe.at[:, 1::2].set(jnp.cos(ang))
    return pe


def _fold_scale_bias(scale, bias, W, b):
    """Fold y = (x*scale + bias) @ W + b  into  y = x @ W' + b'."""
    return scale[:, None] * W, bias @ W + b


# ----------------------------------------------------------------------------
# Main forward pass (Pallas kernels + XLA glue).
# ----------------------------------------------------------------------------
def block_forward(x, mask, p, *, num_heads, conv_kernel_size):
    B, T, D = x.shape
    assert T % 4 == 0, "time length must be divisible by 4 (downsampling x4)"
    H = num_heads
    dh = D // H
    maskb = mask.astype(bool)                                        # (B, T)
    att_mask = ~(maskb[:, :, None] & maskb[:, None, :])              # True = masked
    pos = rel_pos_emb(T, D).astype(x.dtype)                          # (2T-1, D)

    rows = x.reshape(-1, D)

    # ---- MHSA (scale_mhsa / bias_mhsa folded into q/k/v projections) ----
    Wq, bq = _fold_scale_bias(p["scale_mhsa"], p["bias_mhsa"], p["Wq"], p["bq"])
    Wk, bk = _fold_scale_bias(p["scale_mhsa"], p["bias_mhsa"], p["Wk"], p["bk"])
    Wv, bv = _fold_scale_bias(p["scale_mhsa"], p["bias_mhsa"], p["Wv"], p["bv"])
    q = linear(rows, Wq, bq).reshape(B, T, H, dh)
    k = linear(rows, Wk, bk).reshape(B, T, H, dh)
    v = linear(rows, Wv, bv).reshape(B, T, H, dh)
    pe = linear(pos, p["Wp"], jnp.zeros((D,), x.dtype)).reshape(2 * T - 1, H, dh)

    content = jnp.einsum("bihd,bjhd->bhij", q + p["u_bias"], k)
    pos_score = jnp.einsum("bihd,mhd->bhim", q + p["v_bias"], pe)    # (B,H,T,2T-1)
    # relative shift: shifted[i, j] = pos_score[i, (T-1) - i + j]
    shift_idx = (T - 1) - jnp.arange(T)[:, None] + jnp.arange(T)[None, :]
    idx = jnp.broadcast_to(shift_idx[None, None, :, :], (B, H, T, T))
    pos_score = jnp.take_along_axis(pos_score, idx, axis=-1)
    # TODO(synk): fuse scores + rel-shift + masked softmax + context into a
    #             flash-style Pallas attention kernel.
    score = (content + pos_score) * (1.0 / math.sqrt(dh))
    score = jnp.where(att_mask[:, None, :, :], -1e9, score)
    attn = jax.nn.softmax(score, axis=-1)
    ctx = jnp.einsum("bhij,bjhd->bihd", attn, v).reshape(-1, D)
    rows = rows + linear(ctx, p["Wo"], p["bo"])                      # residual

    # ---- LN -> (scale/bias folded) FFN -> add+LN, masked write-back ----
    x_ln = layer_norm(rows, p["ln_mhsa_g"], p["ln_mhsa_b"])
    W1, b1 = _fold_scale_bias(p["scale_ff_mhsa"], p["bias_ff_mhsa"],
                              p["ff1_W1"], p["ff1_b1"])
    h = linear(x_ln, W1, b1, act="swish")
    ff = linear(h, p["ff1_W2"], p["ff1_b2"])
    x_ff = layer_norm(x_ln, p["ln_ff_mhsa_g"], p["ln_ff_mhsa_b"], residual=ff)
    rows = jnp.where(maskb.reshape(-1, 1), x_ff, rows)
    x = rows.reshape(B, T, D)

    # ---- Convolution module with time downsampling (x4 total) ----
    xc = jnp.where(maskb[:, :, None],
                   x * p["scale_conv"][None, None, :] + p["bias_conv"][None, None, :],
                   0.0)
    x2 = xc[:, ::2, :]                                               # pw_conv_1 stride 2
    T2 = x2.shape[1]
    h = glu_linear(x2.reshape(-1, D), p["pw1_Wa"], p["pw1_ba"],
                   p["pw1_Wb"], p["pw1_bb"]).reshape(B, T2, D)

    pad = (conv_kernel_size - 1) // 2
    hp = jnp.pad(h, ((0, 0), (pad, pad), (0, 0)))                    # halo pad only
    bn_inv = p["bn_g"] / jnp.sqrt(p["bn_rv"] + 1e-5)
    bn_scale = bn_inv.reshape(1, D)
    bn_shift = (p["bn_b"] - p["bn_rm"] * bn_inv).reshape(1, D)
    hc = dwconv_bn_swish(hp, p["dw_w"], bn_scale, bn_shift, T2)      # (B, T2, D)

    h4 = hc[:, ::2, :]                                               # pw_conv_2 stride 2
    T4 = h4.shape[1]
    y = linear(h4.reshape(-1, D), p["pw2_W"], p["pw2_b"]).reshape(B, T4, D)
    mask4 = maskb[:, ::4]
    y = jnp.where(mask4[:, :, None], y, 0.0)

    rows4 = y.reshape(-1, D)
    y_ln = layer_norm(rows4, p["ln_conv_g"], p["ln_conv_b"])
    Wc1, bc1 = _fold_scale_bias(p["scale_ff_conv"], p["bias_ff_conv"],
                                p["ff2_W1"], p["ff2_b1"])
    h = linear(y_ln, Wc1, bc1, act="swish")
    ff = linear(h, p["ff2_W2"], p["ff2_b2"])
    y_ff = layer_norm(y_ln, p["ln_ff_conv_g"], p["ln_ff_conv_b"], residual=ff)
    rows4 = jnp.where(mask4.reshape(-1, 1), y_ff, rows4)
    return rows4.reshape(B, T // 4, D)


# ----------------------------------------------------------------------------
# Pure-JAX reference (literal translation of the PyTorch forward, eval mode).
# ----------------------------------------------------------------------------
def _ln_ref(x, g, b, eps=1e-5):
    mu = jnp.mean(x, -1, keepdims=True)
    var = jnp.mean((x - mu) ** 2, -1, keepdims=True)
    return (x - mu) / jnp.sqrt(var + eps) * g + b


def _rel_shift_torch(ps):
    B, H, T, M = ps.shape
    padded = jnp.concatenate([jnp.zeros((B, H, T, 1), ps.dtype), ps], axis=-1)
    padded = padded.reshape(B, H, M + 1, T)
    out = padded[:, :, 1:].reshape(B, H, T, M)
    return out[:, :, :, : M // 2 + 1]


def reference_forward(x, mask, p, *, num_heads, conv_kernel_size):
    B, T, D = x.shape
    H = num_heads
    dh = D // H
    maskb = mask.astype(bool)
    att_mask = ~(maskb[:, :, None] & maskb[:, None, :])
    pos = rel_pos_emb(T, D)

    x1 = x * p["scale_mhsa"][None, None, :] + p["bias_mhsa"][None, None, :]
    q = (x1 @ p["Wq"] + p["bq"]).reshape(B, T, H, dh)
    k = (x1 @ p["Wk"] + p["bk"]).reshape(B, T, H, dh)
    v = (x1 @ p["Wv"] + p["bv"]).reshape(B, T, H, dh)
    pe = (pos @ p["Wp"]).reshape(2 * T - 1, H, dh)
    content = jnp.einsum("bihd,bjhd->bhij", q + p["u_bias"], k)
    pos_score = _rel_shift_torch(jnp.einsum("bihd,mhd->bhim", q + p["v_bias"], pe))
    score = (content + pos_score) / math.sqrt(dh)
    score = jnp.where(att_mask[:, None, :, :], -1e9, score)
    attn = jax.nn.softmax(score, axis=-1)
    ctx = jnp.einsum("bhij,bjhd->bihd", attn, v).reshape(B, T, D)
    x = x + (ctx @ p["Wo"] + p["bo"])

    rows = x.reshape(-1, D)
    x_ln = _ln_ref(rows, p["ln_mhsa_g"], p["ln_mhsa_b"])
    h = x_ln * p["scale_ff_mhsa"] + p["bias_ff_mhsa"]
    h = h @ p["ff1_W1"] + p["ff1_b1"]
    h = h * jax.nn.sigmoid(h)
    h = h @ p["ff1_W2"] + p["ff1_b2"]
    x_ff = _ln_ref(x_ln + h, p["ln_ff_mhsa_g"], p["ln_ff_mhsa_b"])
    rows = jnp.where(maskb.reshape(-1, 1), x_ff, rows)
    x = rows.reshape(B, T, D)

    xc = x * p["scale_conv"][None, None, :] + p["bias_conv"][None, None, :]
    xc = jnp.where(maskb[:, :, None], xc, 0.0)
    x2 = xc[:, ::2, :]
    a = x2 @ p["pw1_Wa"] + p["pw1_ba"]
    g = x2 @ p["pw1_Wb"] + p["pw1_bb"]
    h = a * jax.nn.sigmoid(g)                                        # (B, T2, D)
    hin = jnp.transpose(h, (0, 2, 1))                                # (B, D, T2)
    wconv = jnp.transpose(p["dw_w"], (1, 0))[:, None, :]             # (D, 1, K)
    pad = (conv_kernel_size - 1) // 2
    hc = jax.lax.conv_general_dilated(
        hin, wconv, window_strides=(1,), padding=[(pad, pad)],
        dimension_numbers=("NCH", "OIH", "NCH"), feature_group_count=D)
    hc = jnp.transpose(hc, (0, 2, 1))
    bn = (hc - p["bn_rm"]) / jnp.sqrt(p["bn_rv"] + 1e-5) * p["bn_g"] + p["bn_b"]
    s = bn * jax.nn.sigmoid(bn)
    y = s[:, ::2, :] @ p["pw2_W"] + p["pw2_b"]
    mask4 = maskb[:, ::4]
    y = jnp.where(mask4[:, :, None], y, 0.0)

    rows4 = y.reshape(-1, D)
    y_ln = _ln_ref(rows4, p["ln_conv_g"], p["ln_conv_b"])
    h = y_ln * p["scale_ff_conv"] + p["bias_ff_conv"]
    h = h @ p["ff2_W1"] + p["ff2_b1"]
    h = h * jax.nn.sigmoid(h)
    h = h @ p["ff2_W2"] + p["ff2_b2"]
    y_ff = _ln_ref(y_ln + h, p["ln_ff_conv_g"], p["ln_ff_conv_b"])
    rows4 = jnp.where(mask4.reshape(-1, 1), y_ff, rows4)
    return rows4.reshape(B, T // 4, D)


# ----------------------------------------------------------------------------
# Parameter initialization (module parameters / buffers as JAX arrays).
# ----------------------------------------------------------------------------
def init_params(key, D, H, ff_mult, K):
    dh = D // H
    keys = iter(jax.random.split(key, 64))

    def nrm(shape, scale):
        return (jax.random.normal(next(keys), shape) * scale).astype(jnp.float32)

    def lin(din, dout):
        return nrm((din, dout), 1.0 / math.sqrt(din)), nrm((dout,), 0.02)

    p = {}
    for name in ("mhsa", "ff_mhsa", "conv", "ff_conv"):
        p[f"scale_{name}"] = 1.0 + nrm((D,), 0.1)
        p[f"bias_{name}"] = nrm((D,), 0.1)
    p["Wq"], p["bq"] = lin(D, D)
    p["Wk"], p["bk"] = lin(D, D)
    p["Wv"], p["bv"] = lin(D, D)
    p["Wp"] = nrm((D, D), 1.0 / math.sqrt(D))
    p["u_bias"] = nrm((H, dh), 0.1)
    p["v_bias"] = nrm((H, dh), 0.1)
    p["Wo"], p["bo"] = lin(D, D)
    for name in ("ln_mhsa", "ln_ff_mhsa", "ln_conv", "ln_ff_conv"):
        p[f"{name}_g"] = 1.0 + nrm((D,), 0.1)
        p[f"{name}_b"] = nrm((D,), 0.1)
    p["ff1_W1"], p["ff1_b1"] = lin(D, D * ff_mult)
    p["ff1_W2"], p["ff1_b2"] = lin(D * ff_mult, D)
    p["ff2_W1"], p["ff2_b1"] = lin(D, D * ff_mult)
    p["ff2_W2"], p["ff2_b2"] = lin(D * ff_mult, D)
    p["pw1_Wa"], p["pw1_ba"] = lin(D, D)
    p["pw1_Wb"], p["pw1_bb"] = lin(D, D)
    p["dw_w"] = nrm((K, D), 1.0 / math.sqrt(K))
    p["bn_g"] = 1.0 + nrm((D,), 0.1)
    p["bn_b"] = nrm((D,), 0.1)
    p["bn_rm"] = nrm((D,), 0.1)
    p["bn_rv"] = 1.0 + jnp.abs(nrm((D,), 0.1))
    p["pw2_W"], p["pw2_b"] = lin(D, D)
    return p


if __name__ == "__main__":
    B, T, D, H, K, FF = 2, 16, 64, 4, 7, 4

    key = jax.random.PRNGKey(0)
    kp, kx = jax.random.split(key)
    params = init_params(kp, D, H, FF, K)
    x = jax.random.normal(kx, (B, T, D), dtype=jnp.float32)
    lengths = jnp.array([T, 12], dtype=jnp.int32)
    mask = (jnp.arange(T)[None, :] < lengths[:, None]).astype(jnp.int32)  # (B, T)

    fwd = jax.jit(functools.partial(block_forward, num_heads=H, conv_kernel_size=K))
    y = fwd(x, mask, params)
    y = jax.block_until_ready(y)

    ref = jax.jit(functools.partial(reference_forward, num_heads=H, conv_kernel_size=K))
    y_ref = jax.block_until_ready(ref(x, mask, params))

    assert y.shape == (B, T // 4, D) and y.dtype == x.dtype
    err = float(jnp.max(jnp.abs(y - y_ref)) / (jnp.max(jnp.abs(y_ref)) + 1e-6))
    assert err < 2e-2, f"mismatch vs reference: normalized max err = {err}"

    print("KERNEL_OK")
</pallas_src>

<mosaic_0001>
module attributes {stable_mosaic.version = 11 : i64} {
  func.func @_linear_kernel(%arg0: i32, %arg1: i32, %arg2: i32, %arg3: memref<32x64xf32, #tpu.memory_space<vmem>>, %arg4: memref<64x64xf32, #tpu.memory_space<vmem>>, %arg5: memref<1x64xf32, #tpu.memory_space<vmem>>, %arg6: memref<32x64xf32, #tpu.memory_space<vmem>>, %arg7: memref<32x64xf32, #tpu.memory_space<vmem>>) attributes {dimension_semantics = [#tpu.dimension_semantics<parallel>, #tpu.dimension_semantics<parallel>, #tpu.dimension_semantics<arbitrary>], iteration_bounds = array<i64: 1, 1, 1>, scalar_prefetch = 0 : i64, scratch_operands = 1 : i64, tpu.core_type = #tpu.core_type<tc>, window_params = [{transform_indices = @transform_0, window_bounds = array<i64: 32, 64>}, {transform_indices = @transform_1, window_bounds = array<i64: 64, 64>}, {transform_indices = @transform_2, window_bounds = array<i64: 1, 64>}, {transform_indices = @transform_3, window_bounds = array<i64: 32, 64>}]} {
    %c0_i32 = arith.constant 0 : i32
    %0 = arith.cmpi eq, %arg2, %c0_i32 : i32
    %1 = arith.extui %0 : i1 to i32
    %c0_i32_0 = arith.constant 0 : i32
    %2 = arith.cmpi ne, %1, %c0_i32_0 : i32
    scf.if %2 {
      %cst_10 = arith.constant 0.000000e+00 : f32
      %12 = vector.broadcast %cst_10 : f32 to vector<32x64xf32>
      %c0_11 = arith.constant 0 : index
      %c0_12 = arith.constant 0 : index
      %13 = vector.load %arg7[%c0_11, %c0_12] : memref<32x64xf32, #tpu.memory_space<vmem>>, vector<32x64xf32>
      tpu.vector_store %arg7[%c0_11, %c0_12], %12 {strides = array<i32>} : memref<32x64xf32, #tpu.memory_space<vmem>>, vector<32x64xf32>,
    } else {
    }
    %c0 = arith.constant 0 : index
    %c0_1 = arith.constant 0 : index
    %3 = vector.load %arg7[%c0, %c0_1] : memref<32x64xf32, #tpu.memory_space<vmem>>, vector<32x64xf32>
    %c0_2 = arith.constant 0 : index
    %c0_3 = arith.constant 0 : index
    %4 = vector.load %arg3[%c0_2, %c0_3] : memref<32x64xf32, #tpu.memory_space<vmem>>, vector<32x64xf32>
    %c0_4 = arith.constant 0 : index
    %c0_5 = arith.constant 0 : index
    %5 = vector.load %arg4[%c0_4, %c0_5] : memref<64x64xf32, #tpu.memory_space<vmem>>, vector<64x64xf32>
    %cst = arith.constant dense<0.000000e+00> : vector<32x64xf32>
    %6 = tpu.matmul %4, %5, %cst {dimension_numbers = #tpu.dot_dimension_numbers<[1], [0], [0], [1], [0, 0, 1, 1], [], []>} : vector<32x64xf32>, vector<64x64xf32>, vector<32x64xf32> -> vector<32x64xf32>
    %7 = arith.addf %3, %6 : vector<32x64xf32>
    %c0_6 = arith.constant 0 : index
    %c0_7 = arith.constant 0 : index
    %8 = vector.load %arg7[%c0_6, %c0_7] : memref<32x64xf32, #tpu.memory_space<vmem>>, vector<32x64xf32>
    tpu.vector_store %arg7[%c0_6, %c0_7], %7 {strides = array<i32>} : memref<32x64xf32, #tpu.memory_space<vmem>>, vector<32x64xf32>,
    %c0_i32_8 = arith.constant 0 : i32
    %9 = arith.cmpi eq, %arg2, %c0_i32_8 : i32
    %10 = arith.extui %9 : i1 to i32
    %c0_i32_9 = arith.constant 0 : i32
    %11 = arith.cmpi ne, %10, %c0_i32_9 : i32
    scf.if %11 {
      %c0_10 = arith.constant 0 : index
      %c0_11 = arith.constant 0 : index
      %12 = vector.load %arg7[%c0_10, %c0_11] : memref<32x64xf32, #tpu.memory_space<vmem>>, vector<32x64xf32>
      %c0_12 = arith.constant 0 : index
      %c0_13 = arith.constant 0 : index
      %13 = vector.load %arg5[%c0_12, %c0_13] : memref<1x64xf32, #tpu.memory_space<vmem>>, vector<1x64xf32>
      %14 = vector.broadcast %13 : vector<1x64xf32> to vector<32x64xf32>
      %15 = arith.addf %12, %14 : vector<32x64xf32>
      %c0_14 = arith.constant 0 : index
      %c0_15 = arith.constant 0 : index
      %16 = vector.load %arg6[%c0_14, %c0_15] : memref<32x64xf32, #tpu.memory_space<vmem>>, vector<32x64xf32>
      tpu.vector_store %arg6[%c0_14, %c0_15], %15 {strides = array<i32>} : memref<32x64xf32, #tpu.memory_space<vmem>>, vector<32x64xf32>,
    } else {
    }
    return
  }
  func.func @transform_0(%arg0: i32, %arg1: i32, %arg2: i32) -> (i32, i32) {
    %c0_i32 = arith.constant 0 : i32
    return %arg0, %arg2 : i32, i32
  }
  func.func @transform_1(%arg0: i32, %arg1: i32, %arg2: i32) -> (i32, i32) {
    %c0_i32 = arith.constant 0 : i32
    return %arg2, %arg1 : i32, i32
  }
  func.func @transform_2(%arg0: i32, %arg1: i32, %arg2: i32) -> (i32, i32) {
    %c0_i32 = arith.constant 0 : i32
    %c0_i32_0 = arith.constant 0 : i32
    return %c0_i32, %arg1 : i32, i32
  }
  func.func @transform_3(%arg0: i32, %arg1: i32, %arg2: i32) -> (i32, i32) {
    %c0_i32 = arith.constant 0 : i32
    return %arg0, %arg1 : i32, i32
  }
}

module attributes {stable_mosaic.version = 11 : i64} {
  func.func @_linear_kernel(%arg0: i32, %arg1: i32, %arg2: i32, %arg3: memref<31x64xf32, #tpu.memory_space<vmem>>, %arg4: memref<64x64xf32, #tpu.memory_space<vmem>>, %arg5: memref<1x64xf32, #tpu.memory_space<vmem>>, %arg6: memref<31x64xf32, #tpu.memory_space<vmem>>, %arg7: memref<31x64xf32, #tpu.memory_space<vmem>>) attributes {dimension_semantics = [#tpu.dimension_semantics<parallel>, #tpu.dimension_semantics<parallel>, #tpu.dimension_semantics<arbitrary>], iteration_bounds = array<i64: 1, 1, 1>, scalar_prefetch = 0 : i64, scratch_operands = 1 : i64, tpu.core_type = #tpu.core_type<tc>, window_params = [{transform_indices = @transform_0, window_bounds = array<i64: 31, 64>}, {transform_indices = @transform_1, window_bounds = array<i64: 64, 64>}, {transform_indices = @transform_2, window_bounds = array<i64: 1, 64>}, {transform_indices = @transform_3, window_bounds = array<i64: 31, 64>}]} {
    %c0_i32 = arith.constant 0 : i32
    %0 = arith.cmpi eq, %arg2, %c0_i32 : i32
    %1 = arith.extui %0 : i1 to i32
    %c0_i32_0 = arith.constant 0 : i32
    %2 = arith.cmpi ne, %1, %c0_i32_0 : i32
    scf.if %2 {
      %cst_10 = arith.constant 0.000000e+00 : f32
      %12 = vector.broadcast %cst_10 : f32 to vector<31x64xf32>
      %c0_11 = arith.constant 0 : index
      %c0_12 = arith.constant 0 : index
      %13 = vector.load %arg7[%c0_11, %c0_12] : memref<31x64xf32, #tpu.memory_space<vmem>>, vector<31x64xf32>
      tpu.vector_store %arg7[%c0_11, %c0_12], %12 {strides = array<i32>} : memref<31x64xf32, #tpu.memory_space<vmem>>, vector<31x64xf32>,
    } else {
    }
    %c0 = arith.constant 0 : index
    %c0_1 = arith.constant 0 : index
    %3 = vector.load %arg7[%c0, %c0_1] : memref<31x64xf32, #tpu.memory_space<vmem>>, vector<31x64xf32>
    %c0_2 = arith.constant 0 : index
    %c0_3 = arith.constant 0 : index
    %4 = vector.load %arg3[%c0_2, %c0_3] : memref<31x64xf32, #tpu.memory_space<vmem>>, vector<31x64xf32>
    %c0_4 = arith.constant 0 : index
    %c0_5 = arith.constant 0 : index
    %5 = vector.load %arg4[%c0_4, %c0_5] : memref<64x64xf32, #tpu.memory_space<vmem>>, vector<64x64xf32>
    %cst = arith.constant dense<0.000000e+00> : vector<31x64xf32>
    %6 = tpu.matmul %4, %5, %cst {dimension_numbers = #tpu.dot_dimension_numbers<[1], [0], [0], [1], [0, 0, 1, 1], [], []>} : vector<31x64xf32>, vector<64x64xf32>, vector<31x64xf32> -> vector<31x64xf32>
    %7 = arith.addf %3, %6 : vector<31x64xf32>
    %c0_6 = arith.constant 0 : index
    %c0_7 = arith.constant 0 : index
    %8 = vector.load %arg7[%c0_6, %c0_7] : memref<31x64xf32, #tpu.memory_space<vmem>>, vector<31x64xf32>
    tpu.vector_store %arg7[%c0_6, %c0_7], %7 {strides = array<i32>} : memref<31x64xf32, #tpu.memory_space<vmem>>, vector<31x64xf32>,
    %c0_i32_8 = arith.constant 0 : i32
    %9 = arith.cmpi eq, %arg2, %c0_i32_8 : i32
    %10 = arith.extui %9 : i1 to i32
    %c0_i32_9 = arith.constant 0 : i32
    %11 = arith.cmpi ne, %10, %c0_i32_9 : i32
    scf.if %11 {
      %c0_10 = arith.constant 0 : index
      %c0_11 = arith.constant 0 : index
      %12 = vector.load %arg7[%c0_10, %c0_11] : memref<31x64xf32, #tpu.memory_space<vmem>>, vector<31x64xf32>
      %c0_12 = arith.constant 0 : index
      %c0_13 = arith.constant 0 : index
      %13 = vector.load %arg5[%c0_12, %c0_13] : memref<1x64xf32, #tpu.memory_space<vmem>>, vector<1x64xf32>
      %14 = vector.broadcast %13 : vector<1x64xf32> to vector<31x64xf32>
      %15 = arith.addf %12, %14 : vector<31x64xf32>
      %c0_14 = arith.constant 0 : index
      %c0_15 = arith.constant 0 : index
      %16 = vector.load %arg6[%c0_14, %c0_15] : memref<31x64xf32, #tpu.memory_space<vmem>>, vector<31x64xf32>
      tpu.vector_store %arg6[%c0_14, %c0_15], %15 {strides = array<i32>} : memref<31x64xf32, #tpu.memory_space<vmem>>, vector<31x64xf32>,
    } else {
    }
    return
  }
  func.func @transform_0(%arg0: i32, %arg1: i32, %arg2: i32) -> (i32, i32) {
    %c0_i32 = arith.constant 0 : i32
    return %arg0, %arg2 : i32, i32
  }
  func.func @transform_1(%arg0: i32, %arg1: i32, %arg2: i32) -> (i32, i32) {
    %c0_i32 = arith.constant 0 : i32
    return %arg2, %arg1 : i32, i32
  }
  func.func @transform_2(%arg0: i32, %arg1: i32, %arg2: i32) -> (i32, i32) {
    %c0_i32 = arith.constant 0 : i32
    %c0_i32_0 = arith.constant 0 : i32
    return %c0_i32, %arg1 : i32, i32
  }
  func.func @transform_3(%arg0: i32, %arg1: i32, %arg2: i32) -> (i32, i32) {
    %c0_i32 = arith.constant 0 : i32
    return %arg0, %arg1 : i32, i32
  }
}

module attributes {stable_mosaic.version = 11 : i64} {
  func.func @_ln_kernel(%arg0: i32, %arg1: memref<32x64xf32, #tpu.memory_space<vmem>>, %arg2: memref<1x64xf32, #tpu.memory_space<vmem>>, %arg3: memref<1x64xf32, #tpu.memory_space<vmem>>, %arg4: memref<32x64xf32, #tpu.memory_space<vmem>>) attributes {dimension_semantics = [#tpu.dimension_semantics<parallel>], iteration_bounds = array<i64: 1>, scalar_prefetch = 0 : i64, scratch_operands = 0 : i64, tpu.core_type = #tpu.core_type<tc>, window_params = [{transform_indices = @transform_0, window_bounds = array<i64: 32, 64>}, {pipeline_mode = #tpu.pipeline_mode<synchronous>, transform_indices = @transform_1, window_bounds = array<i64: 1, 64>}, {pipeline_mode = #tpu.pipeline_mode<synchronous>, transform_indices = @transform_2, window_bounds = array<i64: 1, 64>}, {transform_indices = @transform_3, window_bounds = array<i64: 32, 64>}]} {
    %c0 = arith.constant 0 : index
    %c0_0 = arith.constant 0 : index
    %0 = vector.load %arg1[%c0, %c0_0] : memref<32x64xf32, #tpu.memory_space<vmem>>, vector<32x64xf32>
    %cst = arith.constant dense<0.000000e+00> : vector<32xf32>
    %1 = vector.multi_reduction <add>, %0, %cst [1] : vector<32x64xf32> to vector<32xf32>
    %2 = vector.shape_cast %1 : vector<32xf32> to vector<32x1xf32>
    %cst_1 = arith.constant 6.400000e+01 : f32
    %3 = vector.broadcast %cst_1 : f32 to vector<32x1xf32>
    %4 = arith.divf %2, %3 : vector<32x1xf32>
    %5 = vector.broadcast %4 : vector<32x1xf32> to vector<32x64xf32>
    %6 = arith.subf %0, %5 : vector<32x64xf32>
    %7 = arith.mulf %6, %6 : vector<32x64xf32>
    %cst_2 = arith.constant dense<0.000000e+00> : vector<32xf32>
    %8 = vector.multi_reduction <add>, %7, %cst_2 [1] : vector<32x64xf32> to vector<32xf32>
    %9 = vector.shape_cast %8 : vector<32xf32> to vector<32x1xf32>
    %cst_3 = arith.constant 6.400000e+01 : f32
    %10 = vector.broadcast %cst_3 : f32 to vector<32x1xf32>
    %11 = arith.divf %9, %10 : vector<32x1xf32>
    %cst_4 = arith.constant 9.99999974E-6 : f32
    %12 = vector.broadcast %cst_4 : f32 to vector<32x1xf32>
    %13 = arith.addf %11, %12 : vector<32x1xf32>
    %14 = math.rsqrt %13 : vector<32x1xf32>
    %15 = vector.broadcast %14 : vector<32x1xf32> to vector<32x64xf32>
    %16 = arith.mulf %6, %15 : vector<32x64xf32>
    %c0_5 = arith.constant 0 : index
    %c0_6 = arith.constant 0 : index
    %17 = vector.load %arg2[%c0_5, %c0_6] : memref<1x64xf32, #tpu.memory_space<vmem>>, vector<1x64xf32>
    %18 = vector.broadcast %17 : vector<1x64xf32> to vector<32x64xf32>
    %19 = arith.mulf %16, %18 : vector<32x64xf32>
    %c0_7 = arith.constant 0 : index
    %c0_8 = arith.constant 0 : index
    %20 = vector.load %arg3[%c0_7, %c0_8] : memref<1x64xf32, #tpu.memory_space<vmem>>, vector<1x64xf32>
    %21 = vector.broadcast %20 : vector<1x64xf32> to vector<32x64xf32>
    %22 = arith.addf %19, %21 : vector<32x64xf32>
    %c0_9 = arith.constant 0 : index
    %c0_10 = arith.constant 0 : index
    %23 = vector.load %arg4[%c0_9, %c0_10] : memref<32x64xf32, #tpu.memory_space<vmem>>, vector<32x64xf32>
    tpu.vector_store %arg4[%c0_9, %c0_10], %22 {strides = array<i32>} : memref<32x64xf32, #tpu.memory_space<vmem>>, vector<32x64xf32>,
    return
  }
  func.func @transform_0(%arg0: i32) -> (i32, i32) {
    %c0_i32 = arith.constant 0 : i32
    %c0_i32_0 = arith.constant 0 : i32
    return %arg0, %c0_i32 : i32, i32
  }
  func.func @transform_1(%arg0: i32) -> (i32, i32) {
    %c0_i32 = arith.constant 0 : i32
    %c0_i32_0 = arith.constant 0 : i32
    %c0_i32_1 = arith.constant 0 : i32
    return %c0_i32, %c0_i32_0 : i32, i32
  }
  func.func @transform_2(%arg0: i32) -> (i32, i32) {
    %c0_i32 = arith.constant 0 : i32
    %c0_i32_0 = arith.constant 0 : i32
    %c0_i32_1 = arith.constant 0 : i32
    return %c0_i32, %c0_i32_0 : i32, i32
  }
  func.func @transform_3(%arg0: i32) -> (i32, i32) {
    %c0_i32 = arith.constant 0 : i32
    %c0_i32_0 = arith.constant 0 : i32
    return %arg0, %c0_i32 : i32, i32
  }
}

module attributes {stable_mosaic.version = 11 : i64} {
  func.func @_linear_kernel(%arg0: i32, %arg1: i32, %arg2: i32, %arg3: memref<32x64xf32, #tpu.memory_space<vmem>>, %arg4: memref<64x256xf32, #tpu.memory_space<vmem>>, %arg5: memref<1x256xf32, #tpu.memory_space<vmem>>, %arg6: memref<32x256xf32, #tpu.memory_space<vmem>>, %arg7: memref<32x256xf32, #tpu.memory_space<vmem>>) attributes {dimension_semantics = [#tpu.dimension_semantics<parallel>, #tpu.dimension_semantics<parallel>, #tpu.dimension_semantics<arbitrary>], iteration_bounds = array<i64: 1, 1, 1>, scalar_prefetch = 0 : i64, scratch_operands = 1 : i64, tpu.core_type = #tpu.core_type<tc>, window_params = [{transform_indices = @transform_0, window_bounds = array<i64: 32, 64>}, {transform_indices = @transform_1, window_bounds = array<i64: 64, 256>}, {transform_indices = @transform_2, window_bounds = array<i64: 1, 256>}, {transform_indices = @transform_3, window_bounds = array<i64: 32, 256>}]} {
    %c0_i32 = arith.constant 0 : i32
    %0 = arith.cmpi eq, %arg2, %c0_i32 : i32
    %1 = arith.extui %0 : i1 to i32
    %c0_i32_0 = arith.constant 0 : i32
    %2 = arith.cmpi ne, %1, %c0_i32_0 : i32
    scf.if %2 {
      %cst_10 = arith.constant 0.000000e+00 : f32
      %12 = vector.broadcast %cst_10 : f32 to vector<32x256xf32>
      %c0_11 = arith.constant 0 : index
      %c0_12 = arith.constant 0 : index
      %13 = vector.load %arg7[%c0_11, %c0_12] : memref<32x256xf32, #tpu.memory_space<vmem>>, vector<32x256xf32>
      tpu.vector_store %arg7[%c0_11, %c0_12], %12 {strides = array<i32>} : memref<32x256xf32, #tpu.memory_space<vmem>>, vector<32x256xf32>,
    } else {
    }
    %c0 = arith.constant 0 : index
    %c0_1 = arith.constant 0 : index
    %3 = vector.load %arg7[%c0, %c0_1] : memref<32x256xf32, #tpu.memory_space<vmem>>, vector<32x256xf32>
    %c0_2 = arith.constant 0 : index
    %c0_3 = arith.constant 0 : index
    %4 = vector.load %arg3[%c0_2, %c0_3] : memref<32x64xf32, #tpu.memory_space<vmem>>, vector<32x64xf32>
    %c0_4 = arith.constant 0 : index
    %c0_5 = arith.constant 0 : index
    %5 = vector.load %arg4[%c0_4, %c0_5] : memref<64x256xf32, #tpu.memory_space<vmem>>, vector<64x256xf32>
    %cst = arith.constant dense<0.000000e+00> : vector<32x256xf32>
    %6 = tpu.matmul %4, %5, %cst {dimension_numbers = #tpu.dot_dimension_numbers<[1], [0], [0], [1], [0, 0, 1, 1], [], []>} : vector<32x64xf32>, vector<64x256xf32>, vector<32x256xf32> -> vector<32x256xf32>
    %7 = arith.addf %3, %6 : vector<32x256xf32>
    %c0_6 = arith.constant 0 : index
    %c0_7 = arith.constant 0 : index
    %8 = vector.load %arg7[%c0_6, %c0_7] : memref<32x256xf32, #tpu.memory_space<vmem>>, vector<32x256xf32>
    tpu.vector_store %arg7[%c0_6, %c0_7], %7 {strides = array<i32>} : memref<32x256xf32, #tpu.memory_space<vmem>>, vector<32x256xf32>,
    %c0_i32_8 = arith.constant 0 : i32
    %9 = arith.cmpi eq, %arg2, %c0_i32_8 : i32
    %10 = arith.extui %9 : i1 to i32
    %c0_i32_9 = arith.constant 0 : i32
    %11 = arith.cmpi ne, %10, %c0_i32_9 : i32
    scf.if %11 {
      %c0_10 = arith.constant 0 : index
      %c0_11 = arith.constant 0 : index
      %12 = vector.load %arg7[%c0_10, %c0_11] : memref<32x256xf32, #tpu.memory_space<vmem>>, vector<32x256xf32>
      %c0_12 = arith.constant 0 : index
      %c0_13 = arith.constant 0 : index
      %13 = vector.load %arg5[%c0_12, %c0_13] : memref<1x256xf32, #tpu.memory_space<vmem>>, vector<1x256xf32>
      %14 = vector.broadcast %13 : vector<1x256xf32> to vector<32x256xf32>
      %15 = arith.addf %12, %14 : vector<32x256xf32>
      %16 = arith.negf %15 : vector<32x256xf32>
      %17 = math.exp %16 : vector<32x256xf32>
      %cst_14 = arith.constant 1.000000e+00 : f32
      %18 = vector.broadcast %cst_14 : f32 to vector<32x256xf32>
      %19 = arith.addf %18, %17 : vector<32x256xf32>
      %20 = arith.divf %18, %19 : vector<32x256xf32>
      %21 = arith.mulf %15, %20 : vector<32x256xf32>
      %c0_15 = arith.constant 0 : index
      %c0_16 = arith.constant 0 : index
      %22 = vector.load %arg6[%c0_15, %c0_16] : memref<32x256xf32, #tpu.memory_space<vmem>>, vector<32x256xf32>
      tpu.vector_store %arg6[%c0_15, %c0_16], %21 {strides = array<i32>} : memref<32x256xf32, #tpu.memory_space<vmem>>, vector<32x256xf32>,
    } else {
    }
    return
  }
  func.func @transform_0(%arg0: i32, %arg1: i32, %arg2: i32) -> (i32, i32) {
    %c0_i32 = arith.constant 0 : i32
    return %arg0, %arg2 : i32, i32
  }
  func.func @transform_1(%arg0: i32, %arg1: i32, %arg2: i32) -> (i32, i32) {
    %c0_i32 = arith.constant 0 : i32
    return %arg2, %arg1 : i32, i32
  }
  func.func @transform_2(%arg0: i32, %arg1: i32, %arg2: i32) -> (i32, i32) {
    %c0_i32 = arith.constant 0 : i32
    %c0_i32_0 = arith.constant 0 : i32
    return %c0_i32, %arg1 : i32, i32
  }
  func.func @transform_3(%arg0: i32, %arg1: i32, %arg2: i32) -> (i32, i32) {
    %c0_i32 = arith.constant 0 : i32
    return %arg0, %arg1 : i32, i32
  }
}

module attributes {stable_mosaic.version = 11 : i64} {
  func.func @_linear_kernel(%arg0: i32, %arg1: i32, %arg2: i32, %arg3: memref<32x256xf32, #tpu.memory_space<vmem>>, %arg4: memref<256x64xf32, #tpu.memory_space<vmem>>, %arg5: memref<1x64xf32, #tpu.memory_space<vmem>>, %arg6: memref<32x64xf32, #tpu.memory_space<vmem>>, %arg7: memref<32x64xf32, #tpu.memory_space<vmem>>) attributes {dimension_semantics = [#tpu.dimension_semantics<parallel>, #tpu.dimension_semantics<parallel>, #tpu.dimension_semantics<arbitrary>], iteration_bounds = array<i64: 1, 1, 1>, scalar_prefetch = 0 : i64, scratch_operands = 1 : i64, tpu.core_type = #tpu.core_type<tc>, window_params = [{transform_indices = @transform_0, window_bounds = array<i64: 32, 256>}, {transform_indices = @transform_1, window_bounds = array<i64: 256, 64>}, {transform_indices = @transform_2, window_bounds = array<i64: 1, 64>}, {transform_indices = @transform_3, window_bounds = array<i64: 32, 64>}]} {
    %c0_i32 = arith.constant 0 : i32
    %0 = arith.cmpi eq, %arg2, %c0_i32 : i32
    %1 = arith.extui %0 : i1 to i32
    %c0_i32_0 = arith.constant 0 : i32
    %2 = arith.cmpi ne, %1, %c0_i32_0 : i32
    scf.if %2 {
      %cst_10 = arith.constant 0.000000e+00 : f32
      %12 = vector.broadcast %cst_10 : f32 to vector<32x64xf32>
      %c0_11 = arith.constant 0 : index
      %c0_12 = arith.constant 0 : index
      %13 = vector.load %arg7[%c0_11, %c0_12] : memref<32x64xf32, #tpu.memory_space<vmem>>, vector<32x64xf32>
      tpu.vector_store %arg7[%c0_11, %c0_12], %12 {strides = array<i32>} : memref<32x64xf32, #tpu.memory_space<vmem>>, vector<32x64xf32>,
    } else {
    }
    %c0 = arith.constant 0 : index
    %c0_1 = arith.constant 0 : index
    %3 = vector.load %arg7[%c0, %c0_1] : memref<32x64xf32, #tpu.memory_space<vmem>>, vector<32x64xf32>
    %c0_2 = arith.constant 0 : index
    %c0_3 = arith.constant 0 : index
    %4 = vector.load %arg3[%c0_2, %c0_3] : memref<32x256xf32, #tpu.memory_space<vmem>>, vector<32x256xf32>
    %c0_4 = arith.constant 0 : index
    %c0_5 = arith.constant 0 : index
    %5 = vector.load %arg4[%c0_4, %c0_5] : memref<256x64xf32, #tpu.memory_space<vmem>>, vector<256x64xf32>
    %cst = arith.constant dense<0.000000e+00> : vector<32x64xf32>
    %6 = tpu.matmul %4, %5, %cst {dimension_numbers = #tpu.dot_dimension_numbers<[1], [0], [0], [1], [0, 0, 1, 1], [], []>} : vector<32x256xf32>, vector<256x64xf32>, vector<32x64xf32> -> vector<32x64xf32>
    %7 = arith.addf %3, %6 : vector<32x64xf32>
    %c0_6 = arith.constant 0 : index
    %c0_7 = arith.constant 0 : index
    %8 = vector.load %arg7[%c0_6, %c0_7] : memref<32x64xf32, #tpu.memory_space<vmem>>, vector<32x64xf32>
    tpu.vector_store %arg7[%c0_6, %c0_7], %7 {strides = array<i32>} : memref<32x64xf32, #tpu.memory_space<vmem>>, vector<32x64xf32>,
    %c0_i32_8 = arith.constant 0 : i32
    %9 = arith.cmpi eq, %arg2, %c0_i32_8 : i32
    %10 = arith.extui %9 : i1 to i32
    %c0_i32_9 = arith.constant 0 : i32
    %11 = arith.cmpi ne, %10, %c0_i32_9 : i32
    scf.if %11 {
      %c0_10 = arith.constant 0 : index
      %c0_11 = arith.constant 0 : index
      %12 = vector.load %arg7[%c0_10, %c0_11] : memref<32x64xf32, #tpu.memory_space<vmem>>, vector<32x64xf32>
      %c0_12 = arith.constant 0 : index
      %c0_13 = arith.constant 0 : index
      %13 = vector.load %arg5[%c0_12, %c0_13] : memref<1x64xf32, #tpu.memory_space<vmem>>, vector<1x64xf32>
      %14 = vector.broadcast %13 : vector<1x64xf32> to vector<32x64xf32>
      %15 = arith.addf %12, %14 : vector<32x64xf32>
      %c0_14 = arith.constant 0 : index
      %c0_15 = arith.constant 0 : index
      %16 = vector.load %arg6[%c0_14, %c0_15] : memref<32x64xf32, #tpu.memory_space<vmem>>, vector<32x64xf32>
      tpu.vector_store %arg6[%c0_14, %c0_15], %15 {strides = array<i32>} : memref<32x64xf32, #tpu.memory_space<vmem>>, vector<32x64xf32>,
    } else {
    }
    return
  }
  func.func @transform_0(%arg0: i32, %arg1: i32, %arg2: i32) -> (i32, i32) {
    %c0_i32 = arith.constant 0 : i32
    return %arg0, %arg2 : i32, i32
  }
  func.func @transform_1(%arg0: i32, %arg1: i32, %arg2: i32) -> (i32, i32) {
    %c0_i32 = arith.constant 0 : i32
    return %arg2, %arg1 : i32, i32
  }
  func.func @transform_2(%arg0: i32, %arg1: i32, %arg2: i32) -> (i32, i32) {
    %c0_i32 = arith.constant 0 : i32
    %c0_i32_0 = arith.constant 0 : i32
    return %c0_i32, %arg1 : i32, i32
  }
  func.func @transform_3(%arg0: i32, %arg1: i32, %arg2: i32) -> (i32, i32) {
    %c0_i32 = arith.constant 0 : i32
    return %arg0, %arg1 : i32, i32
  }
}

module attributes {stable_mosaic.version = 11 : i64} {
  func.func @_add_ln_kernel(%arg0: i32, %arg1: memref<32x64xf32, #tpu.memory_space<vmem>>, %arg2: memref<32x64xf32, #tpu.memory_space<vmem>>, %arg3: memref<1x64xf32, #tpu.memory_space<vmem>>, %arg4: memref<1x64xf32, #tpu.memory_space<vmem>>, %arg5: memref<32x64xf32, #tpu.memory_space<vmem>>) attributes {dimension_semantics = [#tpu.dimension_semantics<parallel>], iteration_bounds = array<i64: 1>, scalar_prefetch = 0 : i64, scratch_operands = 0 : i64, tpu.core_type = #tpu.core_type<tc>, window_params = [{transform_indices = @transform_0, window_bounds = array<i64: 32, 64>}, {transform_indices = @transform_1, window_bounds = array<i64: 32, 64>}, {pipeline_mode = #tpu.pipeline_mode<synchronous>, transform_indices = @transform_2, window_bounds = array<i64: 1, 64>}, {pipeline_mode = #tpu.pipeline_mode<synchronous>, transform_indices = @transform_3, window_bounds = array<i64: 1, 64>}, {transform_indices = @transform_4, window_bounds = array<i64: 32, 64>}]} {
    %c0 = arith.constant 0 : index
    %c0_0 = arith.constant 0 : index
    %0 = vector.load %arg1[%c0, %c0_0] : memref<32x64xf32, #tpu.memory_space<vmem>>, vector<32x64xf32>
    %c0_1 = arith.constant 0 : index
    %c0_2 = arith.constant 0 : index
    %1 = vector.load %arg2[%c0_1, %c0_2] : memref<32x64xf32, #tpu.memory_space<vmem>>, vector<32x64xf32>
    %2 = arith.addf %0, %1 : vector<32x64xf32>
    %cst = arith.constant dense<0.000000e+00> : vector<32xf32>
    %3 = vector.multi_reduction <add>, %2, %cst [1] : vector<32x64xf32> to vector<32xf32>
    %4 = vector.shape_cast %3 : vector<32xf32> to vector<32x1xf32>
    %cst_3 = arith.constant 6.400000e+01 : f32
    %5 = vector.broadcast %cst_3 : f32 to vector<32x1xf32>
    %6 = arith.divf %4, %5 : vector<32x1xf32>
    %7 = vector.broadcast %6 : vector<32x1xf32> to vector<32x64xf32>
    %8 = arith.subf %2, %7 : vector<32x64xf32>
    %9 = arith.mulf %8, %8 : vector<32x64xf32>
    %cst_4 = arith.constant dense<0.000000e+00> : vector<32xf32>
    %10 = vector.multi_reduction <add>, %9, %cst_4 [1] : vector<32x64xf32> to vector<32xf32>
    %11 = vector.shape_cast %10 : vector<32xf32> to vector<32x1xf32>
    %cst_5 = arith.constant 6.400000e+01 : f32
    %12 = vector.broadcast %cst_5 : f32 to vector<32x1xf32>
    %13 = arith.divf %11, %12 : vector<32x1xf32>
    %cst_6 = arith.constant 9.99999974E-6 : f32
    %14 = vector.broadcast %cst_6 : f32 to vector<32x1xf32>
    %15 = arith.addf %13, %14 : vector<32x1xf32>
    %16 = math.rsqrt %15 : vector<32x1xf32>
    %17 = vector.broadcast %16 : vector<32x1xf32> to vector<32x64xf32>
    %18 = arith.mulf %8, %17 : vector<32x64xf32>
    %c0_7 = arith.constant 0 : index
    %c0_8 = arith.constant 0 : index
    %19 = vector.load %arg3[%c0_7, %c0_8] : memref<1x64xf32, #tpu.memory_space<vmem>>, vector<1x64xf32>
    %20 = vector.broadcast %19 : vector<1x64xf32> to vector<32x64xf32>
    %21 = arith.mulf %18, %20 : vector<32x64xf32>
    %c0_9 = arith.constant 0 : index
    %c0_10 = arith.constant 0 : index
    %22 = vector.load %arg4[%c0_9, %c0_10] : memref<1x64xf32, #tpu.memory_space<vmem>>, vector<1x64xf32>
    %23 = vector.broadcast %22 : vector<1x64xf32> to vector<32x64xf32>
    %24 = arith.addf %21, %23 : vector<32x64xf32>
    %c0_11 = arith.constant 0 : index
    %c0_12 = arith.constant 0 : index
    %25 = vector.load %arg5[%c0_11, %c0_12] : memref<32x64xf32, #tpu.memory_space<vmem>>, vector<32x64xf32>
    tpu.vector_store %arg5[%c0_11, %c0_12], %24 {strides = array<i32>} : memref<32x64xf32, #tpu.memory_space<vmem>>, vector<32x64xf32>,
    return
  }
  func.func @transform_0(%arg0: i32) -> (i32, i32) {
    %c0_i32 = arith.constant 0 : i32
    %c0_i32_0 = arith.constant 0 : i32
    return %arg0, %c0_i32 : i32, i32
  }
  func.func @transform_1(%arg0: i32) -> (i32, i32) {
    %c0_i32 = arith.constant 0 : i32
    %c0_i32_0 = arith.constant 0 : i32
    return %arg0, %c0_i32 : i32, i32
  }
  func.func @transform_2(%arg0: i32) -> (i32, i32) {
    %c0_i32 = arith.constant 0 : i32
    %c0_i32_0 = arith.constant 0 : i32
    %c0_i32_1 = arith.constant 0 : i32
    return %c0_i32, %c0_i32_0 : i32, i32
  }
  func.func @transform_3(%arg0: i32) -> (i32, i32) {
    %c0_i32 = arith.constant 0 : i32
    %c0_i32_0 = arith.constant 0 : i32
    %c0_i32_1 = arith.constant 0 : i32
    return %c0_i32, %c0_i32_0 : i32, i32
  }
  func.func @transform_4(%arg0: i32) -> (i32, i32) {
    %c0_i32 = arith.constant 0 : i32
    %c0_i32_0 = arith.constant 0 : i32
    return %arg0, %c0_i32 : i32, i32
  }
}

module attributes {stable_mosaic.version = 11 : i64} {
  func.func @_glu_linear_kernel(%arg0: i32, %arg1: i32, %arg2: i32, %arg3: memref<16x64xf32, #tpu.memory_space<vmem>>, %arg4: memref<64x64xf32, #tpu.memory_space<vmem>>, %arg5: memref<64x64xf32, #tpu.memory_space<vmem>>, %arg6: memref<1x64xf32, #tpu.memory_space<vmem>>, %arg7: memref<1x64xf32, #tpu.memory_space<vmem>>, %arg8: memref<16x64xf32, #tpu.memory_space<vmem>>, %arg9: memref<16x64xf32, #tpu.memory_space<vmem>>, %arg10: memref<16x64xf32, #tpu.memory_space<vmem>>) attributes {dimension_semantics = [#tpu.dimension_semantics<parallel>, #tpu.dimension_semantics<parallel>, #tpu.dimension_semantics<arbitrary>], iteration_bounds = array<i64: 1, 1, 1>, scalar_prefetch = 0 : i64, scratch_operands = 2 : i64, tpu.core_type = #tpu.core_type<tc>, window_params = [{transform_indices = @transform_0, window_bounds = array<i64: 16, 64>}, {transform_indices = @transform_1, window_bounds = array<i64: 64, 64>}, {transform_indices = @transform_2, window_bounds = array<i64: 64, 64>}, {transform_indices = @transform_3, window_bounds = array<i64: 1, 64>}, {transform_indices = @transform_4, window_bounds = array<i64: 1, 64>}, {transform_indices = @transform_5, window_bounds = array<i64: 16, 64>}]} {
    %c0_i32 = arith.constant 0 : i32
    %0 = arith.cmpi eq, %arg2, %c0_i32 : i32
    %1 = arith.extui %0 : i1 to i32
    %c0_i32_0 = arith.constant 0 : i32
    %2 = arith.cmpi ne, %1, %c0_i32_0 : i32
    scf.if %2 {
      %cst_17 = arith.constant 0.000000e+00 : f32
      %17 = vector.broadcast %cst_17 : f32 to vector<16x64xf32>
      %c0_18 = arith.constant 0 : index
      %c0_19 = arith.constant 0 : index
      %18 = vector.load %arg9[%c0_18, %c0_19] : memref<16x64xf32, #tpu.memory_space<vmem>>, vector<16x64xf32>
      tpu.vector_store %arg9[%c0_18, %c0_19], %17 {strides = array<i32>} : memref<16x64xf32, #tpu.memory_space<vmem>>, vector<16x64xf32>,
      %cst_20 = arith.constant 0.000000e+00 : f32
      %19 = vector.broadcast %cst_20 : f32 to vector<16x64xf32>
      %c0_21 = arith.constant 0 : index
      %c0_22 = arith.constant 0 : index
      %20 = vector.load %arg10[%c0_21, %c0_22] : memref<16x64xf32, #tpu.memory_space<vmem>>, vector<16x64xf32>
      tpu.vector_store %arg10[%c0_21, %c0_22], %19 {strides = array<i32>} : memref<16x64xf32, #tpu.memory_space<vmem>>, vector<16x64xf32>,
    } else {
    }
    %c0 = arith.constant 0 : index
    %c0_1 = arith.constant 0 : index
    %3 = vector.load %arg3[%c0, %c0_1] : memref<16x64xf32, #tpu.memory_space<vmem>>, vector<16x64xf32>
    %c0_2 = arith.constant 0 : index
    %c0_3 = arith.constant 0 : index
    %4 = vector.load %arg9[%c0_2, %c0_3] : memref<16x64xf32, #tpu.memory_space<vmem>>, vector<16x64xf32>
    %c0_4 = arith.constant 0 : index
    %c0_5 = arith.constant 0 : index
    %5 = vector.load %arg4[%c0_4, %c0_5] : memref<64x64xf32, #tpu.memory_space<vmem>>, vector<64x64xf32>
    %cst = arith.constant dense<0.000000e+00> : vector<16x64xf32>
    %6 = tpu.matmul %3, %5, %cst {dimension_numbers = #tpu.dot_dimension_numbers<[1], [0], [0], [1], [0, 0, 1, 1], [], []>} : vector<16x64xf32>, vector<64x64xf32>, vector<16x64xf32> -> vector<16x64xf32>
    %7 = arith.addf %4, %6 : vector<16x64xf32>
    %c0_6 = arith.constant 0 : index
    %c0_7 = arith.constant 0 : index
    %8 = vector.load %arg9[%c0_6, %c0_7] : memref<16x64xf32, #tpu.memory_space<vmem>>, vector<16x64xf32>
    tpu.vector_store %arg9[%c0_6, %c0_7], %7 {strides = array<i32>} : memref<16x64xf32, #tpu.memory_space<vmem>>, vector<16x64xf32>,
    %c0_8 = arith.constant 0 : index
    %c0_9 = arith.constant 0 : index
    %9 = vector.load %arg10[%c0_8, %c0_9] : memref<16x64xf32, #tpu.memory_space<vmem>>, vector<16x64xf32>
    %c0_10 = arith.constant 0 : index
    %c0_11 = arith.constant 0 : index
    %10 = vector.load %arg5[%c0_10, %c0_11] : memref<64x64xf32, #tpu.memory_space<vmem>>, vector<64x64xf32>
    %cst_12 = arith.constant dense<0.000000e+00> : vector<16x64xf32>
    %11 = tpu.matmul %3, %10, %cst_12 {dimension_numbers = #tpu.dot_dimension_numbers<[1], [0], [0], [1], [0, 0, 1, 1], [], []>} : vector<16x64xf32>, vector<64x64xf32>, vector<16x64xf32> -> vector<16x64xf32>
    %12 = arith.addf %9, %11 : vector<16x64xf32>
    %c0_13 = arith.constant 0 : index
    %c0_14 = arith.constant 0 : index
    %13 = vector.load %arg10[%c0_13, %c0_14] : memref<16x64xf32, #tpu.memory_space<vmem>>, vector<16x64xf32>
    tpu.vector_store %arg10[%c0_13, %c0_14], %12 {strides = array<i32>} : memref<16x64xf32, #tpu.memory_space<vmem>>, vector<16x64xf32>,
    %c0_i32_15 = arith.constant 0 : i32
    %14 = arith.cmpi eq, %arg2, %c0_i32_15 : i32
    %15 = arith.extui %14 : i1 to i32
    %c0_i32_16 = arith.constant 0 : i32
    %16 = arith.cmpi ne, %15, %c0_i32_16 : i32
    scf.if %16 {
      %c0_17 = arith.constant 0 : index
      %c0_18 = arith.constant 0 : index
      %17 = vector.load %arg9[%c0_17, %c0_18] : memref<16x64xf32, #tpu.memory_space<vmem>>, vector<16x64xf32>
      %c0_19 = arith.constant 0 : index
      %c0_20 = arith.constant 0 : index
      %18 = vector.load %arg6[%c0_19, %c0_20] : memref<1x64xf32, #tpu.memory_space<vmem>>, vector<1x64xf32>
      %19 = vector.broadcast %18 : vector<1x64xf32> to vector<16x64xf32>
      %20 = arith.addf %17, %19 : vector<16x64xf32>
      %c0_21 = arith.constant 0 : index
      %c0_22 = arith.constant 0 : index
      %21 = vector.load %arg10[%c0_21, %c0_22] : memref<16x64xf32, #tpu.memory_space<vmem>>, vector<16x64xf32>
      %c0_23 = arith.constant 0 : index
      %c0_24 = arith.constant 0 : index
      %22 = vector.load %arg7[%c0_23, %c0_24] : memref<1x64xf32, #tpu.memory_space<vmem>>, vector<1x64xf32>
      %23 = vector.broadcast %22 : vector<1x64xf32> to vector<16x64xf32>
      %24 = arith.addf %21, %23 : vector<16x64xf32>
      %25 = arith.negf %24 : vector<16x64xf32>
      %26 = math.exp %25 : vector<16x64xf32>
      %cst_25 = arith.constant 1.000000e+00 : f32
      %27 = vector.broadcast %cst_25 : f32 to vector<16x64xf32>
      %28 = arith.addf %27, %26 : vector<16x64xf32>
      %29 = arith.divf %27, %28 : vector<16x64xf32>
      %30 = arith.mulf %20, %29 : vector<16x64xf32>
      %c0_26 = arith.constant 0 : index
      %c0_27 = arith.constant 0 : index
      %31 = vector.load %arg8[%c0_26, %c0_27] : memref<16x64xf32, #tpu.memory_space<vmem>>, vector<16x64xf32>
      tpu.vector_store %arg8[%c0_26, %c0_27], %30 {strides = array<i32>} : memref<16x64xf32, #tpu.memory_space<vmem>>, vector<16x64xf32>,
    } else {
    }
    return
  }
  func.func @transform_0(%arg0: i32, %arg1: i32, %arg2: i32) -> (i32, i32) {
    %c0_i32 = arith.constant 0 : i32
    return %arg0, %arg2 : i32, i32
  }
  func.func @transform_1(%arg0: i32, %arg1: i32, %arg2: i32) -> (i32, i32) {
    %c0_i32 = arith.constant 0 : i32
    return %arg2, %arg1 : i32, i32
  }
  func.func @transform_2(%arg0: i32, %arg1: i32, %arg2: i32) -> (i32, i32) {
    %c0_i32 = arith.constant 0 : i32
    return %arg2, %arg1 : i32, i32
  }
  func.func @transform_3(%arg0: i32, %arg1: i32, %arg2: i32) -> (i32, i32) {
    %c0_i32 = arith.constant 0 : i32
    %c0_i32_0 = arith.constant 0 : i32
    return %c0_i32, %arg1 : i32, i32
  }
  func.func @transform_4(%arg0: i32, %arg1: i32, %arg2: i32) -> (i32, i32) {
    %c0_i32 = arith.constant 0 : i32
    %c0_i32_0 = arith.constant 0 : i32
    return %c0_i32, %arg1 : i32, i32
  }
  func.func @transform_5(%arg0: i32, %arg1: i32, %arg2: i32) -> (i32, i32) {
    %c0_i32 = arith.constant 0 : i32
    return %arg0, %arg1 : i32, i32
  }
}

module attributes {stable_mosaic.version = 11 : i64} {
  func.func @_dwconv_bn_swish_kernel(%arg0: i32, %arg1: memref<1x14x64xf32, #tpu.memory_space<vmem>>, %arg2: memref<7x64xf32, #tpu.memory_space<vmem>>, %arg3: memref<1x64xf32, #tpu.memory_space<vmem>>, %arg4: memref<1x64xf32, #tpu.memory_space<vmem>>, %arg5: memref<1x8x64xf32, #tpu.memory_space<vmem>>) attributes {dimension_semantics = [#tpu.dimension_semantics<parallel>], iteration_bounds = array<i64: 2>, scalar_prefetch = 0 : i64, scratch_operands = 0 : i64, tpu.core_type = #tpu.core_type<tc>, window_params = [{transform_indices = @transform_0, window_bounds = array<i64: 1, 14, 64>}, {pipeline_mode = #tpu.pipeline_mode<synchronous>, transform_indices = @transform_1, window_bounds = array<i64: 7, 64>}, {pipeline_mode = #tpu.pipeline_mode<synchronous>, transform_indices = @transform_2, window_bounds = array<i64: 1, 64>}, {pipeline_mode = #tpu.pipeline_mode<synchronous>, transform_indices = @transform_3, window_bounds = array<i64: 1, 64>}, {transform_indices = @transform_4, window_bounds = array<i64: 1, 8, 64>}]} {
    %c0 = arith.constant 0 : index
    %c0_0 = arith.constant 0 : index
    %c0_1 = arith.constant 0 : index
    %0 = vector.load %arg1[%c0, %c0_0, %c0_1] : memref<1x14x64xf32, #tpu.memory_space<vmem>>, vector<1x14x64xf32>
    %1 = vector.shape_cast %0 : vector<1x14x64xf32> to vector<14x64xf32>
    %c0_2 = arith.constant 0 : index
    %c0_3 = arith.constant 0 : index
    %2 = vector.load %arg2[%c0_2, %c0_3] : memref<7x64xf32, #tpu.memory_space<vmem>>, vector<7x64xf32>
    %cst = arith.constant 0.000000e+00 : f32
    %3 = vector.broadcast %cst : f32 to vector<8x64xf32>
    %4 = vector.extract_strided_slice %1 {offsets = [0, 0], sizes = [8, 64], strides = [1, 1]} : vector<14x64xf32> to vector<8x64xf32>
    %5 = vector.extract_strided_slice %2 {offsets = [0, 0], sizes = [1, 64], strides = [1, 1]} : vector<7x64xf32> to vector<1x64xf32>
    %6 = vector.shape_cast %5 : vector<1x64xf32> to vector<64xf32>
    %7 = vector.shape_cast %6 : vector<64xf32> to vector<1x64xf32>
    %8 = vector.broadcast %7 : vector<1x64xf32> to vector<8x64xf32>
    %9 = arith.mulf %4, %8 : vector<8x64xf32>
    %10 = arith.addf %3, %9 : vector<8x64xf32>
    %11 = vector.extract_strided_slice %1 {offsets = [1, 0], sizes = [8, 64], strides = [1, 1]} : vector<14x64xf32> to vector<8x64xf32>
    %12 = vector.extract_strided_slice %2 {offsets = [1, 0], sizes = [1, 64], strides = [1, 1]} : vector<7x64xf32> to vector<1x64xf32>
    %13 = vector.shape_cast %12 : vector<1x64xf32> to vector<64xf32>
    %14 = vector.shape_cast %13 : vector<64xf32> to vector<1x64xf32>
    %15 = vector.broadcast %14 : vector<1x64xf32> to vector<8x64xf32>
    %16 = arith.mulf %11, %15 : vector<8x64xf32>
    %17 = arith.addf %10, %16 : vector<8x64xf32>
    %18 = vector.extract_strided_slice %1 {offsets = [2, 0], sizes = [8, 64], strides = [1, 1]} : vector<14x64xf32> to vector<8x64xf32>
    %19 = vector.extract_strided_slice %2 {offsets = [2, 0], sizes = [1, 64], strides = [1, 1]} : vector<7x64xf32> to vector<1x64xf32>
    %20 = vector.shape_cast %19 : vector<1x64xf32> to vector<64xf32>
    %21 = vector.shape_cast %20 : vector<64xf32> to vector<1x64xf32>
    %22 = vector.broadcast %21 : vector<1x64xf32> to vector<8x64xf32>
    %23 = arith.mulf %18, %22 : vector<8x64xf32>
    %24 = arith.addf %17, %23 : vector<8x64xf32>
    %25 = vector.extract_strided_slice %1 {offsets = [3, 0], sizes = [8, 64], strides = [1, 1]} : vector<14x64xf32> to vector<8x64xf32>
    %26 = vector.extract_strided_slice %2 {offsets = [3, 0], sizes = [1, 64], strides = [1, 1]} : vector<7x64xf32> to vector<1x64xf32>
    %27 = vector.shape_cast %26 : vector<1x64xf32> to vector<64xf32>
    %28 = vector.shape_cast %27 : vector<64xf32> to vector<1x64xf32>
    %29 = vector.broadcast %28 : vector<1x64xf32> to vector<8x64xf32>
    %30 = arith.mulf %25, %29 : vector<8x64xf32>
    %31 = arith.addf %24, %30 : vector<8x64xf32>
    %32 = vector.extract_strided_slice %1 {offsets = [4, 0], sizes = [8, 64], strides = [1, 1]} : vector<14x64xf32> to vector<8x64xf32>
    %33 = vector.extract_strided_slice %2 {offsets = [4, 0], sizes = [1, 64], strides = [1, 1]} : vector<7x64xf32> to vector<1x64xf32>
    %34 = vector.shape_cast %33 : vector<1x64xf32> to vector<64xf32>
    %35 = vector.shape_cast %34 : vector<64xf32> to vector<1x64xf32>
    %36 = vector.broadcast %35 : vector<1x64xf32> to vector<8x64xf32>
    %37 = arith.mulf %32, %36 : vector<8x64xf32>
    %38 = arith.addf %31, %37 : vector<8x64xf32>
    %39 = vector.extract_strided_slice %1 {offsets = [5, 0], sizes = [8, 64], strides = [1, 1]} : vector<14x64xf32> to vector<8x64xf32>
    %40 = vector.extract_strided_slice %2 {offsets = [5, 0], sizes = [1, 64], strides = [1, 1]} : vector<7x64xf32> to vector<1x64xf32>
    %41 = vector.shape_cast %40 : vector<1x64xf32> to vector<64xf32>
    %42 = vector.shape_cast %41 : vector<64xf32> to vector<1x64xf32>
    %43 = vector.broadcast %42 : vector<1x64xf32> to vector<8x64xf32>
    %44 = arith.mulf %39, %43 : vector<8x64xf32>
    %45 = arith.addf %38, %44 : vector<8x64xf32>
    %46 = vector.extract_strided_slice %1 {offsets = [6, 0], sizes = [8, 64], strides = [1, 1]} : vector<14x64xf32> to vector<8x64xf32>
    %47 = vector.extract_strided_slice %2 {offsets = [6, 0], sizes = [1, 64], strides = [1, 1]} : vector<7x64xf32> to vector<1x64xf32>
    %48 = vector.shape_cast %47 : vector<1x64xf32> to vector<64xf32>
    %49 = vector.shape_cast %48 : vector<64xf32> to vector<1x64xf32>
    %50 = vector.broadcast %49 : vector<1x64xf32> to vector<8x64xf32>
    %51 = arith.mulf %46, %50 : vector<8x64xf32>
    %52 = arith.addf %45, %51 : vector<8x64xf32>
    %c0_4 = arith.constant 0 : index
    %c0_5 = arith.constant 0 : index
    %53 = vector.load %arg3[%c0_4, %c0_5] : memref<1x64xf32, #tpu.memory_space<vmem>>, vector<1x64xf32>
    %54 = vector.broadcast %53 : vector<1x64xf32> to vector<8x64xf32>
    %55 = arith.mulf %52, %54 : vector<8x64xf32>
    %c0_6 = arith.constant 0 : index
    %c0_7 = arith.constant 0 : index
    %56 = vector.load %arg4[%c0_6, %c0_7] : memref<1x64xf32, #tpu.memory_space<vmem>>, vector<1x64xf32>
    %57 = vector.broadcast %56 : vector<1x64xf32> to vector<8x64xf32>
    %58 = arith.addf %55, %57 : vector<8x64xf32>
    %59 = arith.negf %58 : vector<8x64xf32>
    %60 = math.exp %59 : vector<8x64xf32>
    %cst_8 = arith.constant 1.000000e+00 : f32
    %61 = vector.broadcast %cst_8 : f32 to vector<8x64xf32>
    %62 = arith.addf %61, %60 : vector<8x64xf32>
    %63 = arith.divf %61, %62 : vector<8x64xf32>
    %64 = arith.mulf %58, %63 : vector<8x64xf32>
    %c0_9 = arith.constant 0 : index
    %c0_10 = arith.constant 0 : index
    %c0_11 = arith.constant 0 : index
    %65 = vector.load %arg5[%c0_9, %c0_10, %c0_11] : memref<1x8x64xf32, #tpu.memory_space<vmem>>, vector<1x8x64xf32>
    %66 = vector.shape_cast %65 : vector<1x8x64xf32> to vector<8x64xf32>
    %67 = vector.shape_cast %64 : vector<8x64xf32> to vector<1x8x64xf32>
    tpu.vector_store %arg5[%c0_9, %c0_10, %c0_11], %67 {strides = array<i32>} : memref<1x8x64xf32, #tpu.memory_space<vmem>>, vector<1x8x64xf32>,
    return
  }
  func.func @transform_0(%arg0: i32) -> (i32, i32, i32) {
    %c0_i32 = arith.constant 0 : i32
    %c0_i32_0 = arith.constant 0 : i32
    %c0_i32_1 = arith.constant 0 : i32
    return %arg0, %c0_i32, %c0_i32_0 : i32, i32, i32
  }
  func.func @transform_1(%arg0: i32) -> (i32, i32) {
    %c0_i32 = arith.constant 0 : i32
    %c0_i32_0 = arith.constant 0 : i32
    %c0_i32_1 = arith.constant 0 : i32
    return %c0_i32, %c0_i32_0 : i32, i32
  }
  func.func @transform_2(%arg0: i32) -> (i32, i32) {
    %c0_i32 = arith.constant 0 : i32
    %c0_i32_0 = arith.constant 0 : i32
    %c0_i32_1 = arith.constant 0 : i32
    return %c0_i32, %c0_i32_0 : i32, i32
  }
  func.func @transform_3(%arg0: i32) -> (i32, i32) {
    %c0_i32 = arith.constant 0 : i32
    %c0_i32_0 = arith.constant 0 : i32
    %c0_i32_1 = arith.constant 0 : i32
    return %c0_i32, %c0_i32_0 : i32, i32
  }
  func.func @transform_4(%arg0: i32) -> (i32, i32, i32) {
    %c0_i32 = arith.constant 0 : i32
    %c0_i32_0 = arith.constant 0 : i32
    %c0_i32_1 = arith.constant 0 : i32
    return %arg0, %c0_i32, %c0_i32_0 : i32, i32, i32
  }
}

module attributes {stable_mosaic.version = 11 : i64} {
  func.func @_linear_kernel(%arg0: i32, %arg1: i32, %arg2: i32, %arg3: memref<8x64xf32, #tpu.memory_space<vmem>>, %arg4: memref<64x64xf32, #tpu.memory_space<vmem>>, %arg5: memref<1x64xf32, #tpu.memory_space<vmem>>, %arg6: memref<8x64xf32, #tpu.memory_space<vmem>>, %arg7: memref<8x64xf32, #tpu.memory_space<vmem>>) attributes {dimension_semantics = [#tpu.dimension_semantics<parallel>, #tpu.dimension_semantics<parallel>, #tpu.dimension_semantics<arbitrary>], iteration_bounds = array<i64: 1, 1, 1>, scalar_prefetch = 0 : i64, scratch_operands = 1 : i64, tpu.core_type = #tpu.core_type<tc>, window_params = [{transform_indices = @transform_0, window_bounds = array<i64: 8, 64>}, {transform_indices = @transform_1, window_bounds = array<i64: 64, 64>}, {transform_indices = @transform_2, window_bounds = array<i64: 1, 64>}, {transform_indices = @transform_3, window_bounds = array<i64: 8, 64>}]} {
    %c0_i32 = arith.constant 0 : i32
    %0 = arith.cmpi eq, %arg2, %c0_i32 : i32
    %1 = arith.extui %0 : i1 to i32
    %c0_i32_0 = arith.constant 0 : i32
    %2 = arith.cmpi ne, %1, %c0_i32_0 : i32
    scf.if %2 {
      %cst_10 = arith.constant 0.000000e+00 : f32
      %12 = vector.broadcast %cst_10 : f32 to vector<8x64xf32>
      %c0_11 = arith.constant 0 : index
      %c0_12 = arith.constant 0 : index
      %13 = vector.load %arg7[%c0_11, %c0_12] : memref<8x64xf32, #tpu.memory_space<vmem>>, vector<8x64xf32>
      tpu.vector_store %arg7[%c0_11, %c0_12], %12 {strides = array<i32>} : memref<8x64xf32, #tpu.memory_space<vmem>>, vector<8x64xf32>,
    } else {
    }
    %c0 = arith.constant 0 : index
    %c0_1 = arith.constant 0 : index
    %3 = vector.load %arg7[%c0, %c0_1] : memref<8x64xf32, #tpu.memory_space<vmem>>, vector<8x64xf32>
    %c0_2 = arith.constant 0 : index
    %c0_3 = arith.constant 0 : index
    %4 = vector.load %arg3[%c0_2, %c0_3] : memref<8x64xf32, #tpu.memory_space<vmem>>, vector<8x64xf32>
    %c0_4 = arith.constant 0 : index
    %c0_5 = arith.constant 0 : index
    %5 = vector.load %arg4[%c0_4, %c0_5] : memref<64x64xf32, #tpu.memory_space<vmem>>, vector<64x64xf32>
    %cst = arith.constant dense<0.000000e+00> : vector<8x64xf32>
    %6 = tpu.matmul %4, %5, %cst {dimension_numbers = #tpu.dot_dimension_numbers<[1], [0], [0], [1], [0, 0, 1, 1], [], []>} : vector<8x64xf32>, vector<64x64xf32>, vector<8x64xf32> -> vector<8x64xf32>
    %7 = arith.addf %3, %6 : vector<8x64xf32>
    %c0_6 = arith.constant 0 : index
    %c0_7 = arith.constant 0 : index
    %8 = vector.load %arg7[%c0_6, %c0_7] : memref<8x64xf32, #tpu.memory_space<vmem>>, vector<8x64xf32>
    tpu.vector_store %arg7[%c0_6, %c0_7], %7 {strides = array<i32>} : memref<8x64xf32, #tpu.memory_space<vmem>>, vector<8x64xf32>,
    %c0_i32_8 = arith.constant 0 : i32
    %9 = arith.cmpi eq, %arg2, %c0_i32_8 : i32
    %10 = arith.extui %9 : i1 to i32
    %c0_i32_9 = arith.constant 0 : i32
    %11 = arith.cmpi ne, %10, %c0_i32_9 : i32
    scf.if %11 {
      %c0_10 = arith.constant 0 : index
      %c0_11 = arith.constant 0 : index
      %12 = vector.load %arg7[%c0_10, %c0_11] : memref<8x64xf32, #tpu.memory_space<vmem>>, vector<8x64xf32>
      %c0_12 = arith.constant 0 : index
      %c0_13 = arith.constant 0 : index
      %13 = vector.load %arg5[%c0_12, %c0_13] : memref<1x64xf32, #tpu.memory_space<vmem>>, vector<1x64xf32>
      %14 = vector.broadcast %13 : vector<1x64xf32> to vector<8x64xf32>
      %15 = arith.addf %12, %14 : vector<8x64xf32>
      %c0_14 = arith.constant 0 : index
      %c0_15 = arith.constant 0 : index
      %16 = vector.load %arg6[%c0_14, %c0_15] : memref<8x64xf32, #tpu.memory_space<vmem>>, vector<8x64xf32>
      tpu.vector_store %arg6[%c0_14, %c0_15], %15 {strides = array<i32>} : memref<8x64xf32, #tpu.memory_space<vmem>>, vector<8x64xf32>,
    } else {
    }
    return
  }
  func.func @transform_0(%arg0: i32, %arg1: i32, %arg2: i32) -> (i32, i32) {
    %c0_i32 = arith.constant 0 : i32
    return %arg0, %arg2 : i32, i32
  }
  func.func @transform_1(%arg0: i32, %arg1: i32, %arg2: i32) -> (i32, i32) {
    %c0_i32 = arith.constant 0 : i32
    return %arg2, %arg1 : i32, i32
  }
  func.func @transform_2(%arg0: i32, %arg1: i32, %arg2: i32) -> (i32, i32) {
    %c0_i32 = arith.constant 0 : i32
    %c0_i32_0 = arith.constant 0 : i32
    return %c0_i32, %arg1 : i32, i32
  }
  func.func @transform_3(%arg0: i32, %arg1: i32, %arg2: i32) -> (i32, i32) {
    %c0_i32 = arith.constant 0 : i32
    return %arg0, %arg1 : i32, i32
  }
}

module attributes {stable_mosaic.version = 11 : i64} {
  func.func @_ln_kernel(%arg0: i32, %arg1: memref<8x64xf32, #tpu.memory_space<vmem>>, %arg2: memref<1x64xf32, #tpu.memory_space<vmem>>, %arg3: memref<1x64xf32, #tpu.memory_space<vmem>>, %arg4: memref<8x64xf32, #tpu.memory_space<vmem>>) attributes {dimension_semantics = [#tpu.dimension_semantics<parallel>], iteration_bounds = array<i64: 1>, scalar_prefetch = 0 : i64, scratch_operands = 0 : i64, tpu.core_type = #tpu.core_type<tc>, window_params = [{transform_indices = @transform_0, window_bounds = array<i64: 8, 64>}, {pipeline_mode = #tpu.pipeline_mode<synchronous>, transform_indices = @transform_1, window_bounds = array<i64: 1, 64>}, {pipeline_mode = #tpu.pipeline_mode<synchronous>, transform_indices = @transform_2, window_bounds = array<i64: 1, 64>}, {transform_indices = @transform_3, window_bounds = array<i64: 8, 64>}]} {
    %c0 = arith.constant 0 : index
    %c0_0 = arith.constant 0 : index
    %0 = vector.load %arg1[%c0, %c0_0] : memref<8x64xf32, #tpu.memory_space<vmem>>, vector<8x64xf32>
    %cst = arith.constant dense<0.000000e+00> : vector<8xf32>
    %1 = vector.multi_reduction <add>, %0, %cst [1] : vector<8x64xf32> to vector<8xf32>
    %2 = vector.shape_cast %1 : vector<8xf32> to vector<8x1xf32>
    %cst_1 = arith.constant 6.400000e+01 : f32
    %3 = vector.broadcast %cst_1 : f32 to vector<8x1xf32>
    %4 = arith.divf %2, %3 : vector<8x1xf32>
    %5 = vector.broadcast %4 : vector<8x1xf32> to vector<8x64xf32>
    %6 = arith.subf %0, %5 : vector<8x64xf32>
    %7 = arith.mulf %6, %6 : vector<8x64xf32>
    %cst_2 = arith.constant dense<0.000000e+00> : vector<8xf32>
    %8 = vector.multi_reduction <add>, %7, %cst_2 [1] : vector<8x64xf32> to vector<8xf32>
    %9 = vector.shape_cast %8 : vector<8xf32> to vector<8x1xf32>
    %cst_3 = arith.constant 6.400000e+01 : f32
    %10 = vector.broadcast %cst_3 : f32 to vector<8x1xf32>
    %11 = arith.divf %9, %10 : vector<8x1xf32>
    %cst_4 = arith.constant 9.99999974E-6 : f32
    %12 = vector.broadcast %cst_4 : f32 to vector<8x1xf32>
    %13 = arith.addf %11, %12 : vector<8x1xf32>
    %14 = math.rsqrt %13 : vector<8x1xf32>
    %15 = vector.broadcast %14 : vector<8x1xf32> to vector<8x64xf32>
    %16 = arith.mulf %6, %15 : vector<8x64xf32>
    %c0_5 = arith.constant 0 : index
    %c0_6 = arith.constant 0 : index
    %17 = vector.load %arg2[%c0_5, %c0_6] : memref<1x64xf32, #tpu.memory_space<vmem>>, vector<1x64xf32>
    %18 = vector.broadcast %17 : vector<1x64xf32> to vector<8x64xf32>
    %19 = arith.mulf %16, %18 : vector<8x64xf32>
    %c0_7 = arith.constant 0 : index
    %c0_8 = arith.constant 0 : index
    %20 = vector.load %arg3[%c0_7, %c0_8] : memref<1x64xf32, #tpu.memory_space<vmem>>, vector<1x64xf32>
    %21 = vector.broadcast %20 : vector<1x64xf32> to vector<8x64xf32>
    %22 = arith.addf %19, %21 : vector<8x64xf32>
    %c0_9 = arith.constant 0 : index
    %c0_10 = arith.constant 0 : index
    %23 = vector.load %arg4[%c0_9, %c0_10] : memref<8x64xf32, #tpu.memory_space<vmem>>, vector<8x64xf32>
    tpu.vector_store %arg4[%c0_9, %c0_10], %22 {strides = array<i32>} : memref<8x64xf32, #tpu.memory_space<vmem>>, vector<8x64xf32>,
    return
  }
  func.func @transform_0(%arg0: i32) -> (i32, i32) {
    %c0_i32 = arith.constant 0 : i32
    %c0_i32_0 = arith.constant 0 : i32
    return %arg0, %c0_i32 : i32, i32
  }
  func.func @transform_1(%arg0: i32) -> (i32, i32) {
    %c0_i32 = arith.constant 0 : i32
    %c0_i32_0 = arith.constant 0 : i32
    %c0_i32_1 = arith.constant 0 : i32
    return %c0_i32, %c0_i32_0 : i32, i32
  }
  func.func @transform_2(%arg0: i32) -> (i32, i32) {
    %c0_i32 = arith.constant 0 : i32
    %c0_i32_0 = arith.constant 0 : i32
    %c0_i32_1 = arith.constant 0 : i32
    return %c0_i32, %c0_i32_0 : i32, i32
  }
  func.func @transform_3(%arg0: i32) -> (i32, i32) {
    %c0_i32 = arith.constant 0 : i32
    %c0_i32_0 = arith.constant 0 : i32
    return %arg0, %c0_i32 : i32, i32
  }
}

module attributes {stable_mosaic.version = 11 : i64} {
  func.func @_linear_kernel(%arg0: i32, %arg1: i32, %arg2: i32, %arg3: memref<8x256xf32, #tpu.memory_space<vmem>>, %arg4: memref<256x64xf32, #tpu.memory_space<vmem>>, %arg5: memref<1x64xf32, #tpu.memory_space<vmem>>, %arg6: memref<8x64xf32, #tpu.memory_space<vmem>>, %arg7: memref<8x64xf32, #tpu.memory_space<vmem>>) attributes {dimension_semantics = [#tpu.dimension_semantics<parallel>, #tpu.dimension_semantics<parallel>, #tpu.dimension_semantics<arbitrary>], iteration_bounds = array<i64: 1, 1, 1>, scalar_prefetch = 0 : i64, scratch_operands = 1 : i64, tpu.core_type = #tpu.core_type<tc>, window_params = [{transform_indices = @transform_0, window_bounds = array<i64: 8, 256>}, {transform_indices = @transform_1, window_bounds = array<i64: 256, 64>}, {transform_indices = @transform_2, window_bounds = array<i64: 1, 64>}, {transform_indices = @transform_3, window_bounds = array<i64: 8, 64>}]} {
    %c0_i32 = arith.constant 0 : i32
    %0 = arith.cmpi eq, %arg2, %c0_i32 : i32
    %1 = arith.extui %0 : i1 to i32
    %c0_i32_0 = arith.constant 0 : i32
    %2 = arith.cmpi ne, %1, %c0_i32_0 : i32
    scf.if %2 {
      %cst_10 = arith.constant 0.000000e+00 : f32
      %12 = vector.broadcast %cst_10 : f32 to vector<8x64xf32>
      %c0_11 = arith.constant 0 : index
      %c0_12 = arith.constant 0 : index
      %13 = vector.load %arg7[%c0_11, %c0_12] : memref<8x64xf32, #tpu.memory_space<vmem>>, vector<8x64xf32>
      tpu.vector_store %arg7[%c0_11, %c0_12], %12 {strides = array<i32>} : memref<8x64xf32, #tpu.memory_space<vmem>>, vector<8x64xf32>,
    } else {
    }
    %c0 = arith.constant 0 : index
    %c0_1 = arith.constant 0 : index
    %3 = vector.load %arg7[%c0, %c0_1] : memref<8x64xf32, #tpu.memory_space<vmem>>, vector<8x64xf32>
    %c0_2 = arith.constant 0 : index
    %c0_3 = arith.constant 0 : index
    %4 = vector.load %arg3[%c0_2, %c0_3] : memref<8x256xf32, #tpu.memory_space<vmem>>, vector<8x256xf32>
    %c0_4 = arith.constant 0 : index
    %c0_5 = arith.constant 0 : index
    %5 = vector.load %arg4[%c0_4, %c0_5] : memref<256x64xf32, #tpu.memory_space<vmem>>, vector<256x64xf32>
    %cst = arith.constant dense<0.000000e+00> : vector<8x64xf32>
    %6 = tpu.matmul %4, %5, %cst {dimension_numbers = #tpu.dot_dimension_numbers<[1], [0], [0], [1], [0, 0, 1, 1], [], []>} : vector<8x256xf32>, vector<256x64xf32>, vector<8x64xf32> -> vector<8x64xf32>
    %7 = arith.addf %3, %6 : vector<8x64xf32>
    %c0_6 = arith.constant 0 : index
    %c0_7 = arith.constant 0 : index
    %8 = vector.load %arg7[%c0_6, %c0_7] : memref<8x64xf32, #tpu.memory_space<vmem>>, vector<8x64xf32>
    tpu.vector_store %arg7[%c0_6, %c0_7], %7 {strides = array<i32>} : memref<8x64xf32, #tpu.memory_space<vmem>>, vector<8x64xf32>,
    %c0_i32_8 = arith.constant 0 : i32
    %9 = arith.cmpi eq, %arg2, %c0_i32_8 : i32
    %10 = arith.extui %9 : i1 to i32
    %c0_i32_9 = arith.constant 0 : i32
    %11 = arith.cmpi ne, %10, %c0_i32_9 : i32
    scf.if %11 {
      %c0_10 = arith.constant 0 : index
      %c0_11 = arith.constant 0 : index
      %12 = vector.load %arg7[%c0_10, %c0_11] : memref<8x64xf32, #tpu.memory_space<vmem>>, vector<8x64xf32>
      %c0_12 = arith.constant 0 : index
      %c0_13 = arith.constant 0 : index
      %13 = vector.load %arg5[%c0_12, %c0_13] : memref<1x64xf32, #tpu.memory_space<vmem>>, vector<1x64xf32>
      %14 = vector.broadcast %13 : vector<1x64xf32> to vector<8x64xf32>
      %15 = arith.addf %12, %14 : vector<8x64xf32>
      %c0_14 = arith.constant 0 : index
      %c0_15 = arith.constant 0 : index
      %16 = vector.load %arg6[%c0_14, %c0_15] : memref<8x64xf32, #tpu.memory_space<vmem>>, vector<8x64xf32>
      tpu.vector_store %arg6[%c0_14, %c0_15], %15 {strides = array<i32>} : memref<8x64xf32, #tpu.memory_space<vmem>>, vector<8x64xf32>,
    } else {
    }
    return
  }
  func.func @transform_0(%arg0: i32, %arg1: i32, %arg2: i32) -> (i32, i32) {
    %c0_i32 = arith.constant 0 : i32
    return %arg0, %arg2 : i32, i32
  }
  func.func @transform_1(%arg0: i32, %arg1: i32, %arg2: i32) -> (i32, i32) {
    %c0_i32 = arith.constant 0 : i32
    return %arg2, %arg1 : i32, i32
  }
  func.func @transform_2(%arg0: i32, %arg1: i32, %arg2: i32) -> (i32, i32) {
    %c0_i32 = arith.constant 0 : i32
    %c0_i32_0 = arith.constant 0 : i32
    return %c0_i32, %arg1 : i32, i32
  }
  func.func @transform_3(%arg0: i32, %arg1: i32, %arg2: i32) -> (i32, i32) {
    %c0_i32 = arith.constant 0 : i32
    return %arg0, %arg1 : i32, i32
  }
}

module attributes {stable_mosaic.version = 11 : i64} {
  func.func @_linear_kernel(%arg0: i32, %arg1: i32, %arg2: i32, %arg3: memref<8x64xf32, #tpu.memory_space<vmem>>, %arg4: memref<64x256xf32, #tpu.memory_space<vmem>>, %arg5: memref<1x256xf32, #tpu.memory_space<vmem>>, %arg6: memref<8x256xf32, #tpu.memory_space<vmem>>, %arg7: memref<8x256xf32, #tpu.memory_space<vmem>>) attributes {dimension_semantics = [#tpu.dimension_semantics<parallel>, #tpu.dimension_semantics<parallel>, #tpu.dimension_semantics<arbitrary>], iteration_bounds = array<i64: 1, 1, 1>, scalar_prefetch = 0 : i64, scratch_operands = 1 : i64, tpu.core_type = #tpu.core_type<tc>, window_params = [{transform_indices = @transform_0, window_bounds = array<i64: 8, 64>}, {transform_indices = @transform_1, window_bounds = array<i64: 64, 256>}, {transform_indices = @transform_2, window_bounds = array<i64: 1, 256>}, {transform_indices = @transform_3, window_bounds = array<i64: 8, 256>}]} {
    %c0_i32 = arith.constant 0 : i32
    %0 = arith.cmpi eq, %arg2, %c0_i32 : i32
    %1 = arith.extui %0 : i1 to i32
    %c0_i32_0 = arith.constant 0 : i32
    %2 = arith.cmpi ne, %1, %c0_i32_0 : i32
    scf.if %2 {
      %cst_10 = arith.constant 0.000000e+00 : f32
      %12 = vector.broadcast %cst_10 : f32 to vector<8x256xf32>
      %c0_11 = arith.constant 0 : index
      %c0_12 = arith.constant 0 : index
      %13 = vector.load %arg7[%c0_11, %c0_12] : memref<8x256xf32, #tpu.memory_space<vmem>>, vector<8x256xf32>
      tpu.vector_store %arg7[%c0_11, %c0_12], %12 {strides = array<i32>} : memref<8x256xf32, #tpu.memory_space<vmem>>, vector<8x256xf32>,
    } else {
    }
    %c0 = arith.constant 0 : index
    %c0_1 = arith.constant 0 : index
    %3 = vector.load %arg7[%c0, %c0_1] : memref<8x256xf32, #tpu.memory_space<vmem>>, vector<8x256xf32>
    %c0_2 = arith.constant 0 : index
    %c0_3 = arith.constant 0 : index
    %4 = vector.load %arg3[%c0_2, %c0_3] : memref<8x64xf32, #tpu.memory_space<vmem>>, vector<8x64xf32>
    %c0_4 = arith.constant 0 : index
    %c0_5 = arith.constant 0 : index
    %5 = vector.load %arg4[%c0_4, %c0_5] : memref<64x256xf32, #tpu.memory_space<vmem>>, vector<64x256xf32>
    %cst = arith.constant dense<0.000000e+00> : vector<8x256xf32>
    %6 = tpu.matmul %4, %5, %cst {dimension_numbers = #tpu.dot_dimension_numbers<[1], [0], [0], [1], [0, 0, 1, 1], [], []>} : vector<8x64xf32>, vector<64x256xf32>, vector<8x256xf32> -> vector<8x256xf32>
    %7 = arith.addf %3, %6 : vector<8x256xf32>
    %c0_6 = arith.constant 0 : index
    %c0_7 = arith.constant 0 : index
    %8 = vector.load %arg7[%c0_6, %c0_7] : memref<8x256xf32, #tpu.memory_space<vmem>>, vector<8x256xf32>
    tpu.vector_store %arg7[%c0_6, %c0_7], %7 {strides = array<i32>} : memref<8x256xf32, #tpu.memory_space<vmem>>, vector<8x256xf32>,
    %c0_i32_8 = arith.constant 0 : i32
    %9 = arith.cmpi eq, %arg2, %c0_i32_8 : i32
    %10 = arith.extui %9 : i1 to i32
    %c0_i32_9 = arith.constant 0 : i32
    %11 = arith.cmpi ne, %10, %c0_i32_9 : i32
    scf.if %11 {
      %c0_10 = arith.constant 0 : index
      %c0_11 = arith.constant 0 : index
      %12 = vector.load %arg7[%c0_10, %c0_11] : memref<8x256xf32, #tpu.memory_space<vmem>>, vector<8x256xf32>
      %c0_12 = arith.constant 0 : index
      %c0_13 = arith.constant 0 : index
      %13 = vector.load %arg5[%c0_12, %c0_13] : memref<1x256xf32, #tpu.memory_space<vmem>>, vector<1x256xf32>
      %14 = vector.broadcast %13 : vector<1x256xf32> to vector<8x256xf32>
      %15 = arith.addf %12, %14 : vector<8x256xf32>
      %16 = arith.negf %15 : vector<8x256xf32>
      %17 = math.exp %16 : vector<8x256xf32>
      %cst_14 = arith.constant 1.000000e+00 : f32
      %18 = vector.broadcast %cst_14 : f32 to vector<8x256xf32>
      %19 = arith.addf %18, %17 : vector<8x256xf32>
      %20 = arith.divf %18, %19 : vector<8x256xf32>
      %21 = arith.mulf %15, %20 : vector<8x256xf32>
      %c0_15 = arith.constant 0 : index
      %c0_16 = arith.constant 0 : index
      %22 = vector.load %arg6[%c0_15, %c0_16] : memref<8x256xf32, #tpu.memory_space<vmem>>, vector<8x256xf32>
      tpu.vector_store %arg6[%c0_15, %c0_16], %21 {strides = array<i32>} : memref<8x256xf32, #tpu.memory_space<vmem>>, vector<8x256xf32>,
    } else {
    }
    return
  }
  func.func @transform_0(%arg0: i32, %arg1: i32, %arg2: i32) -> (i32, i32) {
    %c0_i32 = arith.constant 0 : i32
    return %arg0, %arg2 : i32, i32
  }
  func.func @transform_1(%arg0: i32, %arg1: i32, %arg2: i32) -> (i32, i32) {
    %c0_i32 = arith.constant 0 : i32
    return %arg2, %arg1 : i32, i32
  }
  func.func @transform_2(%arg0: i32, %arg1: i32, %arg2: i32) -> (i32, i32) {
    %c0_i32 = arith.constant 0 : i32
    %c0_i32_0 = arith.constant 0 : i32
    return %c0_i32, %arg1 : i32, i32
  }
  func.func @transform_3(%arg0: i32, %arg1: i32, %arg2: i32) -> (i32, i32) {
    %c0_i32 = arith.constant 0 : i32
    return %arg0, %arg1 : i32, i32
  }
}

module attributes {stable_mosaic.version = 11 : i64} {
  func.func @_add_ln_kernel(%arg0: i32, %arg1: memref<8x64xf32, #tpu.memory_space<vmem>>, %arg2: memref<8x64xf32, #tpu.memory_space<vmem>>, %arg3: memref<1x64xf32, #tpu.memory_space<vmem>>, %arg4: memref<1x64xf32, #tpu.memory_space<vmem>>, %arg5: memref<8x64xf32, #tpu.memory_space<vmem>>) attributes {dimension_semantics = [#tpu.dimension_semantics<parallel>], iteration_bounds = array<i64: 1>, scalar_prefetch = 0 : i64, scratch_operands = 0 : i64, tpu.core_type = #tpu.core_type<tc>, window_params = [{transform_indices = @transform_0, window_bounds = array<i64: 8, 64>}, {transform_indices = @transform_1, window_bounds = array<i64: 8, 64>}, {pipeline_mode = #tpu.pipeline_mode<synchronous>, transform_indices = @transform_2, window_bounds = array<i64: 1, 64>}, {pipeline_mode = #tpu.pipeline_mode<synchronous>, transform_indices = @transform_3, window_bounds = array<i64: 1, 64>}, {transform_indices = @transform_4, window_bounds = array<i64: 8, 64>}]} {
    %c0 = arith.constant 0 : index
    %c0_0 = arith.constant 0 : index
    %0 = vector.load %arg1[%c0, %c0_0] : memref<8x64xf32, #tpu.memory_space<vmem>>, vector<8x64xf32>
    %c0_1 = arith.constant 0 : index
    %c0_2 = arith.constant 0 : index
    %1 = vector.load %arg2[%c0_1, %c0_2] : memref<8x64xf32, #tpu.memory_space<vmem>>, vector<8x64xf32>
    %2 = arith.addf %0, %1 : vector<8x64xf32>
    %cst = arith.constant dense<0.000000e+00> : vector<8xf32>
    %3 = vector.multi_reduction <add>, %2, %cst [1] : vector<8x64xf32> to vector<8xf32>
    %4 = vector.shape_cast %3 : vector<8xf32> to vector<8x1xf32>
    %cst_3 = arith.constant 6.400000e+01 : f32
    %5 = vector.broadcast %cst_3 : f32 to vector<8x1xf32>
    %6 = arith.divf %4, %5 : vector<8x1xf32>
    %7 = vector.broadcast %6 : vector<8x1xf32> to vector<8x64xf32>
    %8 = arith.subf %2, %7 : vector<8x64xf32>
    %9 = arith.mulf %8, %8 : vector<8x64xf32>
    %cst_4 = arith.constant dense<0.000000e+00> : vector<8xf32>
    %10 = vector.multi_reduction <add>, %9, %cst_4 [1] : vector<8x64xf32> to vector<8xf32>
    %11 = vector.shape_cast %10 : vector<8xf32> to vector<8x1xf32>
    %cst_5 = arith.constant 6.400000e+01 : f32
    %12 = vector.broadcast %cst_5 : f32 to vector<8x1xf32>
    %13 = arith.divf %11, %12 : vector<8x1xf32>
    %cst_6 = arith.constant 9.99999974E-6 : f32
    %14 = vector.broadcast %cst_6 : f32 to vector<8x1xf32>
    %15 = arith.addf %13, %14 : vector<8x1xf32>
    %16 = math.rsqrt %15 : vector<8x1xf32>
    %17 = vector.broadcast %16 : vector<8x1xf32> to vector<8x64xf32>
    %18 = arith.mulf %8, %17 : vector<8x64xf32>
    %c0_7 = arith.constant 0 : index
    %c0_8 = arith.constant 0 : index
    %19 = vector.load %arg3[%c0_7, %c0_8] : memref<1x64xf32, #tpu.memory_space<vmem>>, vector<1x64xf32>
    %20 = vector.broadcast %19 : vector<1x64xf32> to vector<8x64xf32>
    %21 = arith.mulf %18, %20 : vector<8x64xf32>
    %c0_9 = arith.constant 0 : index
    %c0_10 = arith.constant 0 : index
    %22 = vector.load %arg4[%c0_9, %c0_10] : memref<1x64xf32, #tpu.memory_space<vmem>>, vector<1x64xf32>
    %23 = vector.broadcast %22 : vector<1x64xf32> to vector<8x64xf32>
    %24 = arith.addf %21, %23 : vector<8x64xf32>
    %c0_11 = arith.constant 0 : index
    %c0_12 = arith.constant 0 : index
    %25 = vector.load %arg5[%c0_11, %c0_12] : memref<8x64xf32, #tpu.memory_space<vmem>>, vector<8x64xf32>
    tpu.vector_store %arg5[%c0_11, %c0_12], %24 {strides = array<i32>} : memref<8x64xf32, #tpu.memory_space<vmem>>, vector<8x64xf32>,
    return
  }
  func.func @transform_0(%arg0: i32) -> (i32, i32) {
    %c0_i32 = arith.constant 0 : i32
    %c0_i32_0 = arith.constant 0 : i32
    return %arg0, %c0_i32 : i32, i32
  }
  func.func @transform_1(%arg0: i32) -> (i32, i32) {
    %c0_i32 = arith.constant 0 : i32
    %c0_i32_0 = arith.constant 0 : i32
    return %arg0, %c0_i32 : i32, i32
  }
  func.func @transform_2(%arg0: i32) -> (i32, i32) {
    %c0_i32 = arith.constant 0 : i32
    %c0_i32_0 = arith.constant 0 : i32
    %c0_i32_1 = arith.constant 0 : i32
    return %c0_i32, %c0_i32_0 : i32, i32
  }
  func.func @transform_3(%arg0: i32) -> (i32, i32) {
    %c0_i32 = arith.constant 0 : i32
    %c0_i32_0 = arith.constant 0 : i32
    %c0_i32_1 = arith.constant 0 : i32
    return %c0_i32, %c0_i32_0 : i32, i32
  }
  func.func @transform_4(%arg0: i32) -> (i32, i32) {
    %c0_i32 = arith.constant 0 : i32
    %c0_i32_0 = arith.constant 0 : i32
    return %arg0, %c0_i32 : i32, i32
  }
}

</mosaic_0001>

<llo_original>
// kernel: block_forward.18
$region0: #{block_forward.18}
  #allocation0 [shape = 'u32[]', space=smem, size = 0x4, offset = 0x4, fixed_abs, tag = 'smem constant byte address 0x4 - core index']
  #allocation1 [shape = 'u32[144,128]{1,0:T(1,128)}', space=vmem, size = 0x12000, scoped, tag = 'internal scratch']
  #allocation2 [shape = 'f32[32,64]{1,0:T(8,128)}', space=vmem, size = 0x4000, scoped, tag = 'scratch operand']
  %s0 = inlined_call_operand.vmem [shape: f32[32,64], index: 0, kind: input, shape index: {}]
  %s1 = inlined_call_operand.vmem [shape: f32[64,64], index: 1, kind: input, shape index: {}]
  %s2 = inlined_call_operand.vmem [shape: f32[1,64], index: 2, kind: input, shape index: {}]
  %s3 = inlined_call_operand.vmem [shape: f32[32,64], index: 3, kind: output, shape index: {}]
  %s4 = sld [smem:[#allocation0]]
  $region30: #{block_forward.18} parent=0
    _
  %s6 = ssub.s32 1, %s4
  %s7 = scalar_select 0, %s6, %s4
  // Predicated region
  $region2: #{block_forward.18} parent=0 // pred_check
    _
  $region3: #{block_forward.18} parent=0 // pred_check_branch
    %9 = sbr.rel (0) target = $region5
  $region4: #{block_forward.18} parent=0 // pred_region
    _
  $region5: #{block_forward.18} parent=0 // pred_fallthru
    _
  // Predicated region
  $region6: #{block_forward.18} parent=0 // pred_check
    _
  $region7: #{block_forward.18} parent=0 // pred_check_branch
    %11 = sbr.rel (0) target = $region9
  $region8: #{block_forward.18} parent=0 // pred_region
    _
  $region9: #{block_forward.18} parent=0 // pred_fallthru
    _
  // Predicated region
  $region10: #{block_forward.18} parent=0 // pred_check
    _
  $region11: #{block_forward.18} parent=0 // pred_check_branch
    %13 = sbr.rel (0) target = $region13
  $region12: #{block_forward.18} parent=0 // pred_region
    _
  $region13: #{block_forward.18} parent=0 // pred_fallthru
    _
  %p14 = scmp.eq.s32.totalorder 0, 0
  // Predicated region
  $region14: #{block_forward.18} parent=0 // pred_check
    %p15 = pneg %p14
  $region15: #{block_forward.18} parent=0 // pred_check_branch
    %17 = sbr.rel (%p15) target = $region17
  $region16: #{block_forward.18} parent=0 // pred_region
    %vm18 = vcmask 523264
    %19 = vst.msk [vmem:[#allocation2] sm:$0xff] %vm18, 0.0
    %20 = vst.msk [vmem:[#allocation2 + $0x8] sm:$0xff] %vm18, 0.0
    %21 = vst.msk [vmem:[#allocation2 + $0x10] sm:$0xff] %vm18, 0.0
    %22 = vst.msk [vmem:[#allocation2 + $0x18] sm:$0xff] %vm18, 0.0
  $region17: #{block_forward.18} parent=0 // pred_fallthru
    _
  %v23 = vld [vmem:[#allocation2] sm:$0xff]
  %v24 = vld [vmem:[#allocation2 + $0x8] sm:$0xff]
  %v25 = vld [vmem:[#allocation2 + $0x10] sm:$0xff]
  %v26 = vld [vmem:[#allocation2 + $0x18] sm:$0xff]
  %v27 = vld [vmem:[%s0] sm:$0xff]
  %v28 = vld [vmem:[%s0 + $0x8] sm:$0xff]
  %v29 = vld [vmem:[%s0 + $0x10] sm:$0xff]
  %v30 = vld [vmem:[%s0 + $0x18] sm:$0xff]
  %v31 = vld [vmem:[%s1] sm:$0xff]
  %v32 = vld [vmem:[%s1 + $0x8] sm:$0xff]
  %v33 = vld [vmem:[%s1 + $0x10] sm:$0xff]
  %v34 = vld [vmem:[%s1 + $0x18] sm:$0xff]
  %v35 = vld [vmem:[%s1 + $0x20] sm:$0xff]
  %v36 = vld [vmem:[%s1 + $0x28] sm:$0xff]
  %v37 = vld [vmem:[%s1 + $0x30] sm:$0xff]
  %v38 = vld [vmem:[%s1 + $0x38] sm:$0xff]
  %vm39 = vcmask 523264
  %v41 = vsel %vm39, %v27, 0
  %v44 = vsel %vm39, %v28, 0
  %v47 = vsel %vm39, %v29, 0
  %v50 = vsel %vm39, %v30, 0
  %52 = vmatprep.subr.mxu0 0.0
  %53 = vmatpush1.msra.mxu0 0.0
  %54 = vmatprep.subr.mxu0 0.0
  %55 = vmatpush1.msra.mxu0 0.0
  %56 = vmatprep.subr.mxu0 0.0
  %57 = vmatpush1.msra.mxu0 0.0
  %58 = vmatprep.subr.mxu0 0.0
  %59 = vmatpush1.msra.mxu0 0.0
  %60 = vmatprep.subr.mxu0 0.0
  %61 = vmatpush1.msra.mxu0 0.0
  %62 = vmatprep.subr.mxu0 0.0
  %63 = vmatpush1.msra.mxu0 0.0
  %64 = vmatprep.subr.mxu0 0.0
  %65 = vmatpush1.msra.mxu0 0.0
  %66 = vmatprep.subr.mxu0 0.0
  %67 = vmatpush1.msra.mxu0 0.0
  %68 = vmatprep.subr.mxu0 0.0
  %69 = vmatpush1.msra.mxu0 %v38
  %70 = vmatprep.subr.mxu0 0.0
  %71 = vmatpush1.msra.mxu0 %v37
  %72 = vmatprep.subr.mxu0 0.0
  %73 = vmatpush1.msra.mxu0 %v36
  %74 = vmatprep.subr.mxu0 0.0
  %75 = vmatpush1.msra.mxu0 %v35
  %76 = vmatprep.subr.mxu0 0.0
  %77 = vmatpush1.msra.mxu0 %v34
  %78 = vmatprep.subr.mxu0 0.0
  %79 = vmatpush1.msra.mxu0 %v33
  %80 = vmatprep.subr.mxu0 0.0
  %81 = vmatpush1.msra.mxu0 %v32
  %82 = vmatprep.subr.mxu0 0.0
  %83 = vmatpush1.msra.mxu0 %v31
  %84 = vmatprep.subr.mxu0 0.0
  %85 = vmatpush2.msra.mxu0 0.0
  %86 = vmatprep.subr.mxu0 0.0
  %87 = vmatpush2.msra.mxu0 0.0
  %88 = vmatprep.subr.mxu0 0.0
  %89 = vmatpush2.msra.mxu0 0.0
  %90 = vmatprep.subr.mxu0 0.0
  %91 = vmatpush2.msra.mxu0 0.0
  %92 = vmatprep.subr.mxu0 0.0
  %93 = vmatpush2.msra.mxu0 0.0
  %94 = vmatprep.subr.mxu0 0.0
  %95 = vmatpush2.msra.mxu0 0.0
  %96 = vmatprep.subr.mxu0 0.0
  %97 = vmatpush2.msra.mxu0 0.0
  %98 = vmatprep.subr.mxu0 0.0
  %99 = vmatpush2.msra.mxu0 0.0
  %100 = vmatprep.subr.mxu0 0.0
  %101 = vmatpush2.msra.mxu0 0.0
  %102 = vmatprep.subr.mxu0 0.0
  %103 = vmatpush2.msra.mxu0 0.0
  %104 = vmatprep.subr.mxu0 0.0
  %105 = vmatpush2.msra.mxu0 0.0
  %106 = vmatprep.subr.mxu0 0.0
  %107 = vmatpush2.msra.mxu0 0.0
  %108 = vmatprep.subr.mxu0 0.0
  %109 = vmatpush2.msra.mxu0 0.0
  %110 = vmatprep.subr.mxu0 0.0
  %111 = vmatpush2.msra.mxu0 0.0
  %112 = vmatprep.subr.mxu0 0.0
  %113 = vmatpush2.msra.mxu0 0.0
  %114 = vmatprep.subr.mxu0 0.0
  %115 = vmatpush2.msra.mxu0 0.0
  %116 = vmatprep.mubr.f32.mxu0 0.0
  %117 = vmatmul.mubr.f32.gmra.mxu0 %v41
  %v118 = vpop.f32.mrf.mxu0
  %v119 = vadd.f32 0.0, %v118
  %v120 = vpop.f32.mrf.mxu0
  %121 = vmatprep.mubr.f32.mxu0 0.0
  %122 = vmatmul.mubr.f32.gmra.mxu0 %v44
  %v123 = vpop.f32.mrf.mxu0
  %v124 = vadd.f32 0.0, %v123
  %v125 = vpop.f32.mrf.mxu0
  %126 = vmatprep.mubr.f32.mxu0 0.0
  %127 = vmatmul.mubr.f32.gmra.mxu0 %v47
  %v128 = vpop.f32.mrf.mxu0
  %v129 = vadd.f32 0.0, %v128
  %v130 = vpop.f32.mrf.mxu0
  %131 = vmatprep.mubr.f32.mxu0 0.0
  %132 = vmatmul.mubr.f32.gmra.mxu0 %v50
  %v133 = vpop.f32.mrf.mxu0
  %v134 = vadd.f32 0.0, %v133
  %v135 = vpop.f32.mrf.mxu0
  %136 = vdwg.mxu0
  %v137 = vadd.f32 %v23, %v119
  %v138 = vadd.f32 %v24, %v124
  %v139 = vadd.f32 %v25, %v129
  %v140 = vadd.f32 %v26, %v134
  %141 = vst.msk [vmem:[#allocation2] sm:$0xff] %vm39, %v137
  %142 = vst.msk [vmem:[#allocation2 + $0x8] sm:$0xff] %vm39, %v138
  %143 = vst.msk [vmem:[#allocation2 + $0x10] sm:$0xff] %vm39, %v139
  %144 = vst.msk [vmem:[#allocation2 + $0x18] sm:$0xff] %vm39, %v140
  // Predicated region
  $region18: #{block_forward.18} parent=0 // pred_check
    %p145 = pneg %p14
  $region19: #{block_forward.18} parent=0 // pred_check_branch
    %147 = sbr.rel (%p145) target = $region21
  $region20: #{block_forward.18} parent=0 // pred_region
    %v148 = vld [vmem:[#allocation2] sm:$0xff]
    %v149 = vld [vmem:[#allocation2 + $0x8] sm:$0xff]
    %v150 = vld [vmem:[#allocation2 + $0x10] sm:$0xff]
    %v151 = vld [vmem:[#allocation2 + $0x18] sm:$0xff]
    %v152 = vld [vmem:[%s2] sm:$0x1]
    %v154 = vlaneseq
    %v155 = vshrl.u32 %v154, 7
    %v156 = vsub.s32 0, %v155
    %v157 = vrot.slane %v152, %v156
    %v159 = vadd.f32 %v148, %v157
    %v160 = vadd.f32 %v149, %v157
    %v161 = vadd.f32 %v150, %v157
    %v162 = vadd.f32 %v151, %v157
    %163 = vst.msk [vmem:[%s3] sm:$0xff] %vm39, %v159
    %164 = vst.msk [vmem:[%s3 + $0x8] sm:$0xff] %vm39, %v160
    %165 = vst.msk [vmem:[%s3 + $0x10] sm:$0xff] %vm39, %v161
    %166 = vst.msk [vmem:[%s3 + $0x18] sm:$0xff] %vm39, %v162
  $region21: #{block_forward.18} parent=0 // pred_fallthru
    _
  // Predicated region
  $region22: #{block_forward.18} parent=0 // pred_check
    _
  $region23: #{block_forward.18} parent=0 // pred_check_branch
    %168 = sbr.rel (0) target = $region25
  $region24: #{block_forward.18} parent=0 // pred_region
    _
  $region25: #{block_forward.18} parent=0 // pred_fallthru
    _
  // Predicated region
  $region26: #{block_forward.18} parent=0 // pred_check
    _
  $region27: #{block_forward.18} parent=0 // pred_check_branch
    %170 = sbr.rel (0) target = $region29
  $region28: #{block_forward.18} parent=0 // pred_region
    _
  $region29: #{block_forward.18} parent=0 // pred_fallthru
    _

// kernel: block_forward.19
$region0: #{block_forward.19}
  #allocation0 [shape = 'u32[]', space=smem, size = 0x4, offset = 0x4, fixed_abs, tag = 'smem constant byte address 0x4 - core index']
  #allocation1 [shape = 'u32[144,128]{1,0:T(1,128)}', space=vmem, size = 0x12000, scoped, tag = 'internal scratch']
  #allocation2 [shape = 'f32[31,64]{1,0:T(8,128)}', space=vmem, size = 0x4000, scoped, tag = 'scratch operand']
  %s0 = inlined_call_operand.vmem [shape: f32[31,64], index: 0, kind: input, shape index: {}]
  %s1 = inlined_call_operand.vmem [shape: f32[64,64], index: 1, kind: input, shape index: {}]
  %s2 = inlined_call_operand.vmem [shape: f32[1,64], index: 2, kind: input, shape index: {}]
  %s3 = inlined_call_operand.vmem [shape: f32[31,64], index: 3, kind: output, shape index: {}]
  %s4 = sld [smem:[#allocation0]]
  $region30: #{block_forward.19} parent=0
    _
  %s6 = ssub.s32 1, %s4
  %s7 = scalar_select 0, %s6, %s4
  // Predicated region
  $region2: #{block_forward.19} parent=0 // pred_check
    _
  $region3: #{block_forward.19} parent=0 // pred_check_branch
    %9 = sbr.rel (0) target = $region5
  $region4: #{block_forward.19} parent=0 // pred_region
    _
  $region5: #{block_forward.19} parent=0 // pred_fallthru
    _
  // Predicated region
  $region6: #{block_forward.19} parent=0 // pred_check
    _
  $region7: #{block_forward.19} parent=0 // pred_check_branch
    %11 = sbr.rel (0) target = $region9
  $region8: #{block_forward.19} parent=0 // pred_region
    _
  $region9: #{block_forward.19} parent=0 // pred_fallthru
    _
  // Predicated region
  $region10: #{block_forward.19} parent=0 // pred_check
    _
  $region11: #{block_forward.19} parent=0 // pred_check_branch
    %13 = sbr.rel (0) target = $region13
  $region12: #{block_forward.19} parent=0 // pred_region
    _
  $region13: #{block_forward.19} parent=0 // pred_fallthru
    _
  %p14 = scmp.eq.s32.totalorder 0, 0
  // Predicated region
  $region14: #{block_forward.19} parent=0 // pred_check
    %p15 = pneg %p14
  $region15: #{block_forward.19} parent=0 // pred_check_branch
    %17 = sbr.rel (%p15) target = $region17
  $region16: #{block_forward.19} parent=0 // pred_region
    %vm18 = vcmask 523264
    %19 = vst.msk [vmem:[#allocation2] sm:$0xff] %vm18, 0.0
    %20 = vst.msk [vmem:[#allocation2 + $0x8] sm:$0xff] %vm18, 0.0
    %21 = vst.msk [vmem:[#allocation2 + $0x10] sm:$0xff] %vm18, 0.0
    %vm22 = vcmask 522240
    %23 = vst.msk [vmem:[#allocation2 + $0x18] sm:$0x7f] %vm22, 0.0
  $region17: #{block_forward.19} parent=0 // pred_fallthru
    _
  %v24 = vld [vmem:[#allocation2] sm:$0xff]
  %v25 = vld [vmem:[#allocation2 + $0x8] sm:$0xff]
  %v26 = vld [vmem:[#allocation2 + $0x10] sm:$0xff]
  %v27 = vld [vmem:[#allocation2 + $0x18] sm:$0x7f]
  %v28 = vld [vmem:[%s0] sm:$0xff]
  %v29 = vld [vmem:[%s0 + $0x8] sm:$0xff]
  %v30 = vld [vmem:[%s0 + $0x10] sm:$0xff]
  %v31 = vld [vmem:[%s0 + $0x18] sm:$0x7f]
  %v32 = vld [vmem:[%s1] sm:$0xff]
  %v33 = vld [vmem:[%s1 + $0x8] sm:$0xff]
  %v34 = vld [vmem:[%s1 + $0x10] sm:$0xff]
  %v35 = vld [vmem:[%s1 + $0x18] sm:$0xff]
  %v36 = vld [vmem:[%s1 + $0x20] sm:$0xff]
  %v37 = vld [vmem:[%s1 + $0x28] sm:$0xff]
  %v38 = vld [vmem:[%s1 + $0x30] sm:$0xff]
  %v39 = vld [vmem:[%s1 + $0x38] sm:$0xff]
  %vm40 = vcmask 523264
  %v42 = vsel %vm40, %v28, 0
  %v45 = vsel %vm40, %v29, 0
  %v48 = vsel %vm40, %v30, 0
  %v51 = vsel %vm40, %v31, 0
  %53 = vmatprep.subr.mxu0 0.0
  %54 = vmatpush1.msra.mxu0 0.0
  %55 = vmatprep.subr.mxu0 0.0
  %56 = vmatpush1.msra.mxu0 0.0
  %57 = vmatprep.subr.mxu0 0.0
  %58 = vmatpush1.msra.mxu0 0.0
  %59 = vmatprep.subr.mxu0 0.0
  %60 = vmatpush1.msra.mxu0 0.0
  %61 = vmatprep.subr.mxu0 0.0
  %62 = vmatpush1.msra.mxu0 0.0
  %63 = vmatprep.subr.mxu0 0.0
  %64 = vmatpush1.msra.mxu0 0.0
  %65 = vmatprep.subr.mxu0 0.0
  %66 = vmatpush1.msra.mxu0 0.0
  %67 = vmatprep.subr.mxu0 0.0
  %68 = vmatpush1.msra.mxu0 0.0
  %69 = vmatprep.subr.mxu0 0.0
  %70 = vmatpush1.msra.mxu0 %v39
  %71 = vmatprep.subr.mxu0 0.0
  %72 = vmatpush1.msra.mxu0 %v38
  %73 = vmatprep.subr.mxu0 0.0
  %74 = vmatpush1.msra.mxu0 %v37
  %75 = vmatprep.subr.mxu0 0.0
  %76 = vmatpush1.msra.mxu0 %v36
  %77 = vmatprep.subr.mxu0 0.0
  %78 = vmatpush1.msra.mxu0 %v35
  %79 = vmatprep.subr.mxu0 0.0
  %80 = vmatpush1.msra.mxu0 %v34
  %81 = vmatprep.subr.mxu0 0.0
  %82 = vmatpush1.msra.mxu0 %v33
  %83 = vmatprep.subr.mxu0 0.0
  %84 = vmatpush1.msra.mxu0 %v32
  %85 = vmatprep.subr.mxu0 0.0
  %86 = vmatpush2.msra.mxu0 0.0
  %87 = vmatprep.subr.mxu0 0.0
  %88 = vmatpush2.msra.mxu0 0.0
  %89 = vmatprep.subr.mxu0 0.0
  %90 = vmatpush2.msra.mxu0 0.0
  %91 = vmatprep.subr.mxu0 0.0
  %92 = vmatpush2.msra.mxu0 0.0
  %93 = vmatprep.subr.mxu0 0.0
  %94 = vmatpush2.msra.mxu0 0.0
  %95 = vmatprep.subr.mxu0 0.0
  %96 = vmatpush2.msra.mxu0 0.0
  %97 = vmatprep.subr.mxu0 0.0
  %98 = vmatpush2.msra.mxu0 0.0
  %99 = vmatprep.subr.mxu0 0.0
  %100 = vmatpush2.msra.mxu0 0.0
  %101 = vmatprep.subr.mxu0 0.0
  %102 = vmatpush2.msra.mxu0 0.0
  %103 = vmatprep.subr.mxu0 0.0
  %104 = vmatpush2.msra.mxu0 0.0
  %105 = vmatprep.subr.mxu0 0.0
  %106 = vmatpush2.msra.mxu0 0.0
  %107 = vmatprep.subr.mxu0 0.0
  %108 = vmatpush2.msra.mxu0 0.0
  %109 = vmatprep.subr.mxu0 0.0
  %110 = vmatpush2.msra.mxu0 0.0
  %111 = vmatprep.subr.mxu0 0.0
  %112 = vmatpush2.msra.mxu0 0.0
  %113 = vmatprep.subr.mxu0 0.0
  %114 = vmatpush2.msra.mxu0 0.0
  %115 = vmatprep.subr.mxu0 0.0
  %116 = vmatpush2.msra.mxu0 0.0
  %117 = vmatprep.mubr.f32.mxu0 0.0
  %118 = vmatmul.mubr.f32.gmra.mxu0 %v42
  %v119 = vpop.f32.mrf.mxu0
  %v120 = vadd.f32 0.0, %v119
  %v121 = vpop.f32.mrf.mxu0
  %122 = vmatprep.mubr.f32.mxu0 0.0
  %123 = vmatmul.mubr.f32.gmra.mxu0 %v45
  %v124 = vpop.f32.mrf.mxu0
  %v125 = vadd.f32 0.0, %v124
  %v126 = vpop.f32.mrf.mxu0
  %127 = vmatprep.mubr.f32.mxu0 0.0
  %128 = vmatmul.mubr.f32.gmra.mxu0 %v48
  %v129 = vpop.f32.mrf.mxu0
  %v130 = vadd.f32 0.0, %v129
  %v131 = vpop.f32.mrf.mxu0
  %132 = vmatprep.mubr.f32.mxu0 0.0
  %133 = vmatmul.mubr.f32.gmra.mxu0 %v51
  %v134 = vpop.f32.mrf.mxu0
  %v135 = vadd.f32 0.0, %v134
  %v136 = vpop.f32.mrf.mxu0
  %137 = vdwg.mxu0
  %v138 = vadd.f32 %v24, %v120
  %v139 = vadd.f32 %v25, %v125
  %v140 = vadd.f32 %v26, %v130
  %v141 = vadd.f32 %v27, %v135
  %142 = vst.msk [vmem:[#allocation2] sm:$0xff] %vm40, %v138
  %143 = vst.msk [vmem:[#allocation2 + $0x8] sm:$0xff] %vm40, %v139
  %144 = vst.msk [vmem:[#allocation2 + $0x10] sm:$0xff] %vm40, %v140
  %vm145 = vcmask 522240
  %146 = vst.msk [vmem:[#allocation2 + $0x18] sm:$0x7f] %vm145, %v141
  // Predicated region
  $region18: #{block_forward.19} parent=0 // pred_check
    %p147 = pneg %p14
  $region19: #{block_forward.19} parent=0 // pred_check_branch
    %149 = sbr.rel (%p147) target = $region21
  $region20: #{block_forward.19} parent=0 // pred_region
    %v150 = vld [vmem:[#allocation2] sm:$0xff]
    %v151 = vld [vmem:[#allocation2 + $0x8] sm:$0xff]
    %v152 = vld [vmem:[#allocation2 + $0x10] sm:$0xff]
    %v153 = vld [vmem:[#allocation2 + $0x18] sm:$0x7f]
    %v154 = vld [vmem:[%s2] sm:$0x1]
    %v156 = vlaneseq
    %v157 = vshrl.u32 %v156, 7
    %v158 = vsub.s32 0, %v157
    %v159 = vrot.slane %v154, %v158
    %v161 = vadd.f32 %v150, %v159
    %v162 = vadd.f32 %v151, %v159
    %v163 = vadd.f32 %v152, %v159
    %v164 = vadd.f32 %v153, %v159
    %165 = vst.msk [vmem:[%s3] sm:$0xff] %vm40, %v161
    %166 = vst.msk [vmem:[%s3 + $0x8] sm:$0xff] %vm40, %v162
    %167 = vst.msk [vmem:[%s3 + $0x10] sm:$0xff] %vm40, %v163
    %168 = vst.msk [vmem:[%s3 + $0x18] sm:$0x7f] %vm145, %v164
  $region21: #{block_forward.19} parent=0 // pred_fallthru
    _
  // Predicated region
  $region22: #{block_forward.19} parent=0 // pred_check
    _
  $region23: #{block_forward.19} parent=0 // pred_check_branch
    %170 = sbr.rel (0) target = $region25
  $region24: #{block_forward.19} parent=0 // pred_region
    _
  $region25: #{block_forward.19} parent=0 // pred_fallthru
    _
  // Predicated region
  $region26: #{block_forward.19} parent=0 // pred_check
    _
  $region27: #{block_forward.19} parent=0 // pred_check_branch
    %172 = sbr.rel (0) target = $region29
  $region28: #{block_forward.19} parent=0 // pred_region
    _
  $region29: #{block_forward.19} parent=0 // pred_fallthru
    _

// kernel: block_forward.21
$region0: #{block_forward.21}
  #allocation0 [shape = 'u32[]', space=smem, size = 0x4, offset = 0x4, fixed_abs, tag = 'smem constant byte address 0x4 - core index']
  #allocation1 [shape = 'u32[144,128]{1,0:T(1,128)}', space=vmem, size = 0x12000, scoped, tag = 'internal scratch']
  %s0 = inlined_call_operand.vmem [shape: f32[32,64], index: 0, kind: input, shape index: {}]
  %s1 = inlined_call_operand.vmem [shape: f32[1,64], index: 1, kind: input, shape index: {}]
  %s2 = inlined_call_operand.vmem [shape: f32[1,64], index: 2, kind: input, shape index: {}]
  %s3 = inlined_call_operand.vmem [shape: f32[32,64], index: 3, kind: output, shape index: {}]
  %s4 = sld [smem:[#allocation0]]
  $region22: #{block_forward.21} parent=0
    _
  %s6 = ssub.s32 1, %s4
  %s7 = scalar_select 0, %s6, %s4
  // Predicated region
  $region2: #{block_forward.21} parent=0 // pred_check
    _
  $region3: #{block_forward.21} parent=0 // pred_check_branch
    %9 = sbr.rel (0) target = $region5
  $region4: #{block_forward.21} parent=0 // pred_region
    _
  $region5: #{block_forward.21} parent=0 // pred_fallthru
    _
  // Predicated region
  $region6: #{block_forward.21} parent=0 // pred_check
    _
  $region7: #{block_forward.21} parent=0 // pred_check_branch
    %11 = sbr.rel (0) target = $region9
  $region8: #{block_forward.21} parent=0 // pred_region
    _
  $region9: #{block_forward.21} parent=0 // pred_fallthru
    _
  // Predicated region
  $region10: #{block_forward.21} parent=0 // pred_check
    _
  $region11: #{block_forward.21} parent=0 // pred_check_branch
    %13 = sbr.rel (0) target = $region13
  $region12: #{block_forward.21} parent=0 // pred_region
    _
  $region13: #{block_forward.21} parent=0 // pred_fallthru
    _
  %v14 = vld [vmem:[%s0] sm:$0xff]
  %v15 = vld [vmem:[%s0 + $0x8] sm:$0xff]
  %v16 = vld [vmem:[%s0 + $0x10] sm:$0xff]
  %v17 = vld [vmem:[%s0 + $0x18] sm:$0xff]
  %vm18 = vcmask 523264
  %v19 = vsel %vm18, %v14, 0.0
  %20 = vadd.xlane.f32.xlu0 %v19
  %v21 = vpop.xlane.xlu0 %20
  %v22 = vsel %vm18, %v15, 0.0
  %23 = vadd.xlane.f32.xlu0 %v22
  %v24 = vpop.xlane.xlu0 %23
  %v25 = vsel %vm18, %v16, 0.0
  %26 = vadd.xlane.f32.xlu0 %v25
  %v27 = vpop.xlane.xlu0 %26
  %v28 = vsel %vm18, %v17, 0.0
  %29 = vadd.xlane.f32.xlu0 %v28
  %v30 = vpop.xlane.xlu0 %29
  %v31 = vrcp.pop 64.0
  %v32 = vmul.f32 %v21, %v31
  %v33 = vmul.f32 %v24, %v31
  %v34 = vmul.f32 %v27, %v31
  %v35 = vmul.f32 %v30, %v31
  %v36 = vsub.f32 %v14, %v32
  %v37 = vsub.f32 %v15, %v33
  %v38 = vsub.f32 %v16, %v34
  %v39 = vsub.f32 %v17, %v35
  %v40 = vmul.f32 %v36, %v36
  %v41 = vmul.f32 %v37, %v37
  %v42 = vmul.f32 %v38, %v38
  %v43 = vmul.f32 %v39, %v39
  %v44 = vsel %vm18, %v40, 0.0
  %45 = vadd.xlane.f32.xlu0 %v44
  %v46 = vpop.xlane.xlu0 %45
  %v47 = vsel %vm18, %v41, 0.0
  %48 = vadd.xlane.f32.xlu0 %v47
  %v49 = vpop.xlane.xlu0 %48
  %v50 = vsel %vm18, %v42, 0.0
  %51 = vadd.xlane.f32.xlu0 %v50
  %v52 = vpop.xlane.xlu0 %51
  %v53 = vsel %vm18, %v43, 0.0
  %54 = vadd.xlane.f32.xlu0 %v53
  %v55 = vpop.xlane.xlu0 %54
  %v56 = vmul.f32 %v46, %v31
  %v57 = vmul.f32 %v49, %v31
  %v58 = vmul.f32 %v52, %v31
  %v59 = vmul.f32 %v55, %v31
  %v60 = vadd.f32 %v56, 1e-05
  %v61 = vadd.f32 %v57, 1e-05
  %v62 = vadd.f32 %v58, 1e-05
  %v63 = vadd.f32 %v59, 1e-05
  %v64 = vrsqrt.pop %v60
  %v65 = vrsqrt.pop %v61
  %v66 = vrsqrt.pop %v62
  %v67 = vrsqrt.pop %v63
  %v68 = vmul.f32 %v36, %v64
  %v69 = vmul.f32 %v37, %v65
  %v70 = vmul.f32 %v38, %v66
  %v71 = vmul.f32 %v39, %v67
  %v72 = vld [vmem:[%s1] sm:$0x1]
  %v74 = vlaneseq
  %v75 = vshrl.u32 %v74, 7
  %v76 = vsub.s32 0, %v75
  %v77 = vrot.slane %v72, %v76
  %v79 = vmul.f32 %v68, %v77
  %v80 = vmul.f32 %v69, %v77
  %v81 = vmul.f32 %v70, %v77
  %v82 = vmul.f32 %v71, %v77
  %v83 = vld [vmem:[%s2] sm:$0x1]
  %v85 = vlaneseq
  %v86 = vshrl.u32 %v85, 7
  %v87 = vsub.s32 0, %v86
  %v88 = vrot.slane %v83, %v87
  %v90 = vadd.f32 %v79, %v88
  %v91 = vadd.f32 %v80, %v88
  %v92 = vadd.f32 %v81, %v88
  %v93 = vadd.f32 %v82, %v88
  %94 = vst.msk [vmem:[%s3] sm:$0xff] %vm18, %v90
  %95 = vst.msk [vmem:[%s3 + $0x8] sm:$0xff] %vm18, %v91
  %96 = vst.msk [vmem:[%s3 + $0x10] sm:$0xff] %vm18, %v92
  %97 = vst.msk [vmem:[%s3 + $0x18] sm:$0xff] %vm18, %v93
  // Predicated region
  $region14: #{block_forward.21} parent=0 // pred_check
    _
  $region15: #{block_forward.21} parent=0 // pred_check_branch
    %99 = sbr.rel (0) target = $region17
  $region16: #{block_forward.21} parent=0 // pred_region
    _
  $region17: #{block_forward.21} parent=0 // pred_fallthru
    _
  // Predicated region
  $region18: #{block_forward.21} parent=0 // pred_check
    _
  $region19: #{block_forward.21} parent=0 // pred_check_branch
    %101 = sbr.rel (0) target = $region21
  $region20: #{block_forward.21} parent=0 // pred_region
    _
  $region21: #{block_forward.21} parent=0 // pred_fallthru
    _

// kernel: block_forward.22
$region0: #{block_forward.22}
  #allocation0 [shape = 'u32[]', space=smem, size = 0x4, offset = 0x4, fixed_abs, tag = 'smem constant byte address 0x4 - core index']
  #allocation1 [shape = 'u32[144,128]{1,0:T(1,128)}', space=vmem, size = 0x12000, scoped, tag = 'internal scratch']
  #allocation2 [shape = 'f32[32,256]{1,0:T(8,128)}', space=vmem, size = 0x8000, scoped, tag = 'scratch operand']
  %s0 = inlined_call_operand.vmem [shape: f32[32,64], index: 0, kind: input, shape index: {}]
  %s1 = inlined_call_operand.vmem [shape: f32[64,256], index: 1, kind: input, shape index: {}]
  %s2 = inlined_call_operand.vmem [shape: f32[1,256], index: 2, kind: input, shape index: {}]
  %s3 = inlined_call_operand.vmem [shape: f32[32,256], index: 3, kind: output, shape index: {}]
  %s4 = sld [smem:[#allocation0]]
  $region30: #{block_forward.22} parent=0
    _
  %s6 = ssub.s32 1, %s4
  %s7 = scalar_select 0, %s6, %s4
  // Predicated region
  $region2: #{block_forward.22} parent=0 // pred_check
    _
  $region3: #{block_forward.22} parent=0 // pred_check_branch
    %9 = sbr.rel (0) target = $region5
  $region4: #{block_forward.22} parent=0 // pred_region
    _
  $region5: #{block_forward.22} parent=0 // pred_fallthru
    _
  // Predicated region
  $region6: #{block_forward.22} parent=0 // pred_check
    _
  $region7: #{block_forward.22} parent=0 // pred_check_branch
    %11 = sbr.rel (0) target = $region9
  $region8: #{block_forward.22} parent=0 // pred_region
    _
  $region9: #{block_forward.22} parent=0 // pred_fallthru
    _
  // Predicated region
  $region10: #{block_forward.22} parent=0 // pred_check
    _
  $region11: #{block_forward.22} parent=0 // pred_check_branch
    %13 = sbr.rel (0) target = $region13
  $region12: #{block_forward.22} parent=0 // pred_region
    _
  $region13: #{block_forward.22} parent=0 // pred_fallthru
    _
  %p14 = scmp.eq.s32.totalorder 0, 0
  // Predicated region
  $region14: #{block_forward.22} parent=0 // pred_check
    %p15 = pneg %p14
  $region15: #{block_forward.22} parent=0 // pred_check_branch
    %17 = sbr.rel (%p15) target = $region17
  $region16: #{block_forward.22} parent=0 // pred_region
    %18 = vst [vmem:[#allocation2] sm:$0xff] 0.0
    %19 = vst [vmem:[#allocation2 + $0x8] sm:$0xff] 0.0
    %20 = vst [vmem:[#allocation2 + $0x10] sm:$0xff] 0.0
    %21 = vst [vmem:[#allocation2 + $0x18] sm:$0xff] 0.0
    %22 = vst [vmem:[#allocation2 + $0x20] sm:$0xff] 0.0
    %23 = vst [vmem:[#allocation2 + $0x28] sm:$0xff] 0.0
    %24 = vst [vmem:[#allocation2 + $0x30] sm:$0xff] 0.0
    %25 = vst [vmem:[#allocation2 + $0x38] sm:$0xff] 0.0
  $region17: #{block_forward.22} parent=0 // pred_fallthru
    _
  %v26 = vld [vmem:[#allocation2] sm:$0xff]
  %v27 = vld [vmem:[#allocation2 + $0x8] sm:$0xff]
  %v28 = vld [vmem:[#allocation2 + $0x10] sm:$0xff]
  %v29 = vld [vmem:[#allocation2 + $0x18] sm:$0xff]
  %v30 = vld [vmem:[#allocation2 + $0x20] sm:$0xff]
  %v31 = vld [vmem:[#allocation2 + $0x28] sm:$0xff]
  %v32 = vld [vmem:[#allocation2 + $0x30] sm:$0xff]
  %v33 = vld [vmem:[#allocation2 + $0x38] sm:$0xff]
  %v34 = vld [vmem:[%s0] sm:$0xff]
  %v35 = vld [vmem:[%s0 + $0x8] sm:$0xff]
  %v36 = vld [vmem:[%s0 + $0x10] sm:$0xff]
  %v37 = vld [vmem:[%s0 + $0x18] sm:$0xff]
  %v38 = vld [vmem:[%s1] sm:$0xff]
  %v39 = vld [vmem:[%s1 + $0x8] sm:$0xff]
  %v40 = vld [vmem:[%s1 + $0x10] sm:$0xff]
  %v41 = vld [vmem:[%s1 + $0x18] sm:$0xff]
  %v42 = vld [vmem:[%s1 + $0x20] sm:$0xff]
  %v43 = vld [vmem:[%s1 + $0x28] sm:$0xff]
  %v44 = vld [vmem:[%s1 + $0x30] sm:$0xff]
  %v45 = vld [vmem:[%s1 + $0x38] sm:$0xff]
  %v46 = vld [vmem:[%s1 + $0x40] sm:$0xff]
  %v47 = vld [vmem:[%s1 + $0x48] sm:$0xff]
  %v48 = vld [vmem:[%s1 + $0x50] sm:$0xff]
  %v49 = vld [vmem:[%s1 + $0x58] sm:$0xff]
  %v50 = vld [vmem:[%s1 + $0x60] sm:$0xff]
  %v51 = vld [vmem:[%s1 + $0x68] sm:$0xff]
  %v52 = vld [vmem:[%s1 + $0x70] sm:$0xff]
  %v53 = vld [vmem:[%s1 + $0x78] sm:$0xff]
  %vm54 = vcmask 523264
  %v56 = vsel %vm54, %v34, 0
  %v59 = vsel %vm54, %v35, 0
  %v62 = vsel %vm54, %v36, 0
  %v65 = vsel %vm54, %v37, 0
  %67 = vmatprep.subr.mxu0 0.0
  %68 = vmatpush1.msra.mxu0 0.0
  %69 = vmatprep.subr.mxu0 0.0
  %70 = vmatpush1.msra.mxu0 0.0
  %71 = vmatprep.subr.mxu0 0.0
  %72 = vmatpush1.msra.mxu0 0.0
  %73 = vmatprep.subr.mxu0 0.0
  %74 = vmatpush1.msra.mxu0 0.0
  %75 = vmatprep.subr.mxu0 0.0
  %76 = vmatpush1.msra.mxu0 0.0
  %77 = vmatprep.subr.mxu0 0.0
  %78 = vmatpush1.msra.mxu0 0.0
  %79 = vmatprep.subr.mxu0 0.0
  %80 = vmatpush1.msra.mxu0 0.0
  %81 = vmatprep.subr.mxu0 0.0
  %82 = vmatpush1.msra.mxu0 0.0
  %83 = vmatprep.subr.mxu0 %v53
  %84 = vmatpush1.msra.mxu0 %v52
  %85 = vmatprep.subr.mxu0 %v51
  %86 = vmatpush1.msra.mxu0 %v50
  %87 = vmatprep.subr.mxu0 %v49
  %88 = vmatpush1.msra.mxu0 %v48
  %89 = vmatprep.subr.mxu0 %v47
  %90 = vmatpush1.msra.mxu0 %v46
  %91 = vmatprep.subr.mxu0 %v45
  %92 = vmatpush1.msra.mxu0 %v44
  %93 = vmatprep.subr.mxu0 %v43
  %94 = vmatpush1.msra.mxu0 %v42
  %95 = vmatprep.subr.mxu0 %v41
  %96 = vmatpush1.msra.mxu0 %v40
  %97 = vmatprep.subr.mxu0 %v39
  %98 = vmatpush1.msra.mxu0 %v38
  %99 = vmatprep.subr.mxu0 0.0
  %100 = vmatpush2.msra.mxu0 0.0
  %101 = vmatprep.subr.mxu0 0.0
  %102 = vmatpush2.msra.mxu0 0.0
  %103 = vmatprep.subr.mxu0 0.0
  %104 = vmatpush2.msra.mxu0 0.0
  %105 = vmatprep.subr.mxu0 0.0
  %106 = vmatpush2.msra.mxu0 0.0
  %107 = vmatprep.subr.mxu0 0.0
  %108 = vmatpush2.msra.mxu0 0.0
  %109 = vmatprep.subr.mxu0 0.0
  %110 = vmatpush2.msra.mxu0 0.0
  %111 = vmatprep.subr.mxu0 0.0
  %112 = vmatpush2.msra.mxu0 0.0
  %113 = vmatprep.subr.mxu0 0.0
  %114 = vmatpush2.msra.mxu0 0.0
  %115 = vmatprep.subr.mxu0 0.0
  %116 = vmatpush2.msra.mxu0 0.0
  %117 = vmatprep.subr.mxu0 0.0
  %118 = vmatpush2.msra.mxu0 0.0
  %119 = vmatprep.subr.mxu0 0.0
  %120 = vmatpush2.msra.mxu0 0.0
  %121 = vmatprep.subr.mxu0 0.0
  %122 = vmatpush2.msra.mxu0 0.0
  %123 = vmatprep.subr.mxu0 0.0
  %124 = vmatpush2.msra.mxu0 0.0
  %125 = vmatprep.subr.mxu0 0.0
  %126 = vmatpush2.msra.mxu0 0.0
  %127 = vmatprep.subr.mxu0 0.0
  %128 = vmatpush2.msra.mxu0 0.0
  %129 = vmatprep.subr.mxu0 0.0
  %130 = vmatpush2.msra.mxu0 0.0
  %131 = vmatprep.mubr.f32.mxu0 0.0
  %132 = vmatmul.mubr.f32.gmra.mxu0 %v56
  %v133 = vpop.f32.mrf.mxu0
  %v134 = vadd.f32 0.0, %v133
  %v135 = vpop.f32.mrf.mxu0
  %v136 = vadd.f32 0.0, %v135
  %137 = vmatprep.mubr.f32.mxu0 0.0
  %138 = vmatmul.mubr.f32.gmra.mxu0 %v59
  %v139 = vpop.f32.mrf.mxu0
  %v140 = vadd.f32 0.0, %v139
  %v141 = vpop.f32.mrf.mxu0
  %v142 = vadd.f32 0.0, %v141
  %143 = vmatprep.mubr.f32.mxu0 0.0
  %144 = vmatmul.mubr.f32.gmra.mxu0 %v62
  %v145 = vpop.f32.mrf.mxu0
  %v146 = vadd.f32 0.0, %v145
  %v147 = vpop.f32.mrf.mxu0
  %v148 = vadd.f32 0.0, %v147
  %149 = vmatprep.mubr.f32.mxu0 0.0
  %150 = vmatmul.mubr.f32.gmra.mxu0 %v65
  %v151 = vpop.f32.mrf.mxu0
  %v152 = vadd.f32 0.0, %v151
  %v153 = vpop.f32.mrf.mxu0
  %v154 = vadd.f32 0.0, %v153
  %155 = vdwg.mxu0
  %v156 = vadd.f32 %v26, %v134
  %v157 = vadd.f32 %v27, %v136
  %v158 = vadd.f32 %v28, %v140
  %v159 = vadd.f32 %v29, %v142
  %v160 = vadd.f32 %v30, %v146
  %v161 = vadd.f32 %v31, %v148
  %v162 = vadd.f32 %v32, %v152
  %v163 = vadd.f32 %v33, %v154
  %164 = vst [vmem:[#allocation2] sm:$0xff] %v156
  %165 = vst [vmem:[#allocation2 + $0x8] sm:$0xff] %v157
  %166 = vst [vmem:[#allocation2 + $0x10] sm:$0xff] %v158
  %167 = vst [vmem:[#allocation2 + $0x18] sm:$0xff] %v159
  %168 = vst [vmem:[#allocation2 + $0x20] sm:$0xff] %v160
  %169 = vst [vmem:[#allocation2 + $0x28] sm:$0xff] %v161
  %170 = vst [vmem:[#allocation2 + $0x30] sm:$0xff] %v162
  %171 = vst [vmem:[#allocation2 + $0x38] sm:$0xff] %v163
  // Predicated region
  $region18: #{block_forward.22} parent=0 // pred_check
    %p172 = pneg %p14
  $region19: #{block_forward.22} parent=0 // pred_check_branch
    %174 = sbr.rel (%p172) target = $region21
  $region20: #{block_forward.22} parent=0 // pred_region
    %v175 = vld [vmem:[#allocation2] sm:$0xff]
    %v176 = vld [vmem:[#allocation2 + $0x8] sm:$0xff]
    %v177 = vld [vmem:[#allocation2 + $0x10] sm:$0xff]
    %v178 = vld [vmem:[#allocation2 + $0x18] sm:$0xff]
    %v179 = vld [vmem:[#allocation2 + $0x20] sm:$0xff]
    %v180 = vld [vmem:[#allocation2 + $0x28] sm:$0xff]
    %v181 = vld [vmem:[#allocation2 + $0x30] sm:$0xff]
    %v182 = vld [vmem:[#allocation2 + $0x38] sm:$0xff]
    %v183 = vld [vmem:[%s2] sm:$0x3]
    %v185 = vlaneseq
    %v186 = vshrl.u32 %v185, 7
    %v187 = vsub.s32 0, %v186
    %v188 = vrot.slane %v183, %v187
    %v189 = vlaneseq
    %v190 = vshrl.u32 %v189, 7
    %v191 = vsub.s32 1, %v190
    %v192 = vrot.slane %v183, %v191
    %v195 = vadd.f32 %v175, %v188
    %v196 = vadd.f32 %v176, %v192
    %v197 = vadd.f32 %v177, %v188
    %v198 = vadd.f32 %v178, %v192
    %v199 = vadd.f32 %v179, %v188
    %v200 = vadd.f32 %v180, %v192
    %v201 = vadd.f32 %v181, %v188
    %v202 = vadd.f32 %v182, %v192
    %v203 = vxor.u32 %v195, 2147483648
    %v204 = vxor.u32 %v196, 2147483648
    %v205 = vxor.u32 %v197, 2147483648
    %v206 = vxor.u32 %v198, 2147483648
    %v207 = vxor.u32 %v199, 2147483648
    %v208 = vxor.u32 %v200, 2147483648
    %v209 = vxor.u32 %v201, 2147483648
    %v210 = vxor.u32 %v202, 2147483648
    %v211 = vmul.f32 %v203, 1.442695
    %v212 = vpow.pop %v211
    %v213 = vmul.f32 %v204, 1.442695
    %v214 = vpow.pop %v213
    %v215 = vmul.f32 %v205, 1.442695
    %v216 = vpow.pop %v215
    %v217 = vmul.f32 %v206, 1.442695
    %v218 = vpow.pop %v217
    %v219 = vmul.f32 %v207, 1.442695
    %v220 = vpow.pop %v219
    %v221 = vmul.f32 %v208, 1.442695
    %v222 = vpow.pop %v221
    %v223 = vmul.f32 %v209, 1.442695
    %v224 = vpow.pop %v223
    %v225 = vmul.f32 %v210, 1.442695
    %v226 = vpow.pop %v225
    %v227 = vadd.f32 %v212, 1.0
    %v228 = vadd.f32 %v214, 1.0
    %v229 = vadd.f32 %v216, 1.0
    %v230 = vadd.f32 %v218, 1.0
    %v231 = vadd.f32 %v220, 1.0
    %v232 = vadd.f32 %v222, 1.0
    %v233 = vadd.f32 %v224, 1.0
    %v234 = vadd.f32 %v226, 1.0
    %v235 = vrcp.pop %v227
    %v236 = vmul.f32 1.0, %v235
    %v237 = vrcp.pop %v228
    %v238 = vmul.f32 1.0, %v237
    %v239 = vrcp.pop %v229
    %v240 = vmul.f32 1.0, %v239
    %v241 = vrcp.pop %v230
    %v242 = vmul.f32 1.0, %v241
    %v243 = vrcp.pop %v231
    %v244 = vmul.f32 1.0, %v243
    %v245 = vrcp.pop %v232
    %v246 = vmul.f32 1.0, %v245
    %v247 = vrcp.pop %v233
    %v248 = vmul.f32 1.0, %v247
    %v249 = vrcp.pop %v234
    %v250 = vmul.f32 1.0, %v249
    %v251 = vmul.f32 %v195, %v236
    %v252 = vmul.f32 %v196, %v238
    %v253 = vmul.f32 %v197, %v240
    %v254 = vmul.f32 %v198, %v242
    %v255 = vmul.f32 %v199, %v244
    %v256 = vmul.f32 %v200, %v246
    %v257 = vmul.f32 %v201, %v248
    %v258 = vmul.f32 %v202, %v250
    %259 = vst [vmem:[%s3] sm:$0xff] %v251
    %260 = vst [vmem:[%s3 + $0x8] sm:$0xff] %v252
    %261 = vst [vmem:[%s3 + $0x10] sm:$0xff] %v253
    %262 = vst [vmem:[%s3 + $0x18] sm:$0xff] %v254
    %263 = vst [vmem:[%s3 + $0x20] sm:$0xff] %v255
    %264 = vst [vmem:[%s3 + $0x28] sm:$0xff] %v256
    %265 = vst [vmem:[%s3 + $0x30] sm:$0xff] %v257
    %266 = vst [vmem:[%s3 + $0x38] sm:$0xff] %v258
  $region21: #{block_forward.22} parent=0 // pred_fallthru
    _
  // Predicated region
  $region22: #{block_forward.22} parent=0 // pred_check
    _
  $region23: #{block_forward.22} parent=0 // pred_check_branch
    %268 = sbr.rel (0) target = $region25
  $region24: #{block_forward.22} parent=0 // pred_region
    _
  $region25: #{block_forward.22} parent=0 // pred_fallthru
    _
  // Predicated region
  $region26: #{block_forward.22} parent=0 // pred_check
    _
  $region27: #{block_forward.22} parent=0 // pred_check_branch
    %270 = sbr.rel (0) target = $region29
  $region28: #{block_forward.22} parent=0 // pred_region
    _
  $region29: #{block_forward.22} parent=0 // pred_fallthru
    _

// kernel: block_forward.23
$region0: #{block_forward.23}
  #allocation0 [shape = 'u32[]', space=smem, size = 0x4, offset = 0x4, fixed_abs, tag = 'smem constant byte address 0x4 - core index']
  #allocation1 [shape = 'u32[144,128]{1,0:T(1,128)}', space=vmem, size = 0x12000, scoped, tag = 'internal scratch']
  #allocation2 [shape = 'f32[32,64]{1,0:T(8,128)}', space=vmem, size = 0x4000, scoped, tag = 'scratch operand']
  %s0 = inlined_call_operand.vmem [shape: f32[32,256], index: 0, kind: input, shape index: {}]
  %s1 = inlined_call_operand.vmem [shape: f32[256,64], index: 1, kind: input, shape index: {}]
  %s2 = inlined_call_operand.vmem [shape: f32[1,64], index: 2, kind: input, shape index: {}]
  %s3 = inlined_call_operand.vmem [shape: f32[32,64], index: 3, kind: output, shape index: {}]
  %s4 = sld [smem:[#allocation0]]
  $region30: #{block_forward.23} parent=0
    _
  %s6 = ssub.s32 1, %s4
  %s7 = scalar_select 0, %s6, %s4
  // Predicated region
  $region2: #{block_forward.23} parent=0 // pred_check
    _
  $region3: #{block_forward.23} parent=0 // pred_check_branch
    %9 = sbr.rel (0) target = $region5
  $region4: #{block_forward.23} parent=0 // pred_region
    _
  $region5: #{block_forward.23} parent=0 // pred_fallthru
    _
  // Predicated region
  $region6: #{block_forward.23} parent=0 // pred_check
    _
  $region7: #{block_forward.23} parent=0 // pred_check_branch
    %11 = sbr.rel (0) target = $region9
  $region8: #{block_forward.23} parent=0 // pred_region
    _
  $region9: #{block_forward.23} parent=0 // pred_fallthru
    _
  // Predicated region
  $region10: #{block_forward.23} parent=0 // pred_check
    _
  $region11: #{block_forward.23} parent=0 // pred_check_branch
    %13 = sbr.rel (0) target = $region13
  $region12: #{block_forward.23} parent=0 // pred_region
    _
  $region13: #{block_forward.23} parent=0 // pred_fallthru
    _
  %p14 = scmp.eq.s32.totalorder 0, 0
  // Predicated region
  $region14: #{block_forward.23} parent=0 // pred_check
    %p15 = pneg %p14
  $region15: #{block_forward.23} parent=0 // pred_check_branch
    %17 = sbr.rel (%p15) target = $region17
  $region16: #{block_forward.23} parent=0 // pred_region
    %vm18 = vcmask 523264
    %19 = vst.msk [vmem:[#allocation2] sm:$0xff] %vm18, 0.0
    %20 = vst.msk [vmem:[#allocation2 + $0x8] sm:$0xff] %vm18, 0.0
    %21 = vst.msk [vmem:[#allocation2 + $0x10] sm:$0xff] %vm18, 0.0
    %22 = vst.msk [vmem:[#allocation2 + $0x18] sm:$0xff] %vm18, 0.0
  $region17: #{block_forward.23} parent=0 // pred_fallthru
    _
  %v23 = vld [vmem:[#allocation2] sm:$0xff]
  %v24 = vld [vmem:[#allocation2 + $0x8] sm:$0xff]
  %v25 = vld [vmem:[#allocation2 + $0x10] sm:$0xff]
  %v26 = vld [vmem:[#allocation2 + $0x18] sm:$0xff]
  %v27 = vld [vmem:[%s0] sm:$0xff]
  %v28 = vld [vmem:[%s0 + $0x8] sm:$0xff]
  %v29 = vld [vmem:[%s0 + $0x10] sm:$0xff]
  %v30 = vld [vmem:[%s0 + $0x18] sm:$0xff]
  %v31 = vld [vmem:[%s0 + $0x20] sm:$0xff]
  %v32 = vld [vmem:[%s0 + $0x28] sm:$0xff]
  %v33 = vld [vmem:[%s0 + $0x30] sm:$0xff]
  %v34 = vld [vmem:[%s0 + $0x38] sm:$0xff]
  %v35 = vld [vmem:[%s1] sm:$0xff]
  %v36 = vld [vmem:[%s1 + $0x8] sm:$0xff]
  %v37 = vld [vmem:[%s1 + $0x10] sm:$0xff]
  %v38 = vld [vmem:[%s1 + $0x18] sm:$0xff]
  %v39 = vld [vmem:[%s1 + $0x20] sm:$0xff]
  %v40 = vld [vmem:[%s1 + $0x28] sm:$0xff]
  %v41 = vld [vmem:[%s1 + $0x30] sm:$0xff]
  %v42 = vld [vmem:[%s1 + $0x38] sm:$0xff]
  %v43 = vld [vmem:[%s1 + $0x40] sm:$0xff]
  %v44 = vld [vmem:[%s1 + $0x48] sm:$0xff]
  %v45 = vld [vmem:[%s1 + $0x50] sm:$0xff]
  %v46 = vld [vmem:[%s1 + $0x58] sm:$0xff]
  %v47 = vld [vmem:[%s1 + $0x60] sm:$0xff]
  %v48 = vld [vmem:[%s1 + $0x68] sm:$0xff]
  %v49 = vld [vmem:[%s1 + $0x70] sm:$0xff]
  %v50 = vld [vmem:[%s1 + $0x78] sm:$0xff]
  %v51 = vld [vmem:[%s1 + $0x80] sm:$0xff]
  %v52 = vld [vmem:[%s1 + $0x88] sm:$0xff]
  %v53 = vld [vmem:[%s1 + $0x90] sm:$0xff]
  %v54 = vld [vmem:[%s1 + $0x98] sm:$0xff]
  %v55 = vld [vmem:[%s1 + $0xa0] sm:$0xff]
  %v56 = vld [vmem:[%s1 + $0xa8] sm:$0xff]
  %v57 = vld [vmem:[%s1 + $0xb0] sm:$0xff]
  %v58 = vld [vmem:[%s1 + $0xb8] sm:$0xff]
  %v59 = vld [vmem:[%s1 + $0xc0] sm:$0xff]
  %v60 = vld [vmem:[%s1 + $0xc8] sm:$0xff]
  %v61 = vld [vmem:[%s1 + $0xd0] sm:$0xff]
  %v62 = vld [vmem:[%s1 + $0xd8] sm:$0xff]
  %v63 = vld [vmem:[%s1 + $0xe0] sm:$0xff]
  %v64 = vld [vmem:[%s1 + $0xe8] sm:$0xff]
  %v65 = vld [vmem:[%s1 + $0xf0] sm:$0xff]
  %v66 = vld [vmem:[%s1 + $0xf8] sm:$0xff]
  %67 = vmatprep.subr.mxu0 0.0
  %68 = vmatpush1.msra.mxu0 %v50
  %69 = vmatprep.subr.mxu0 0.0
  %70 = vmatpush1.msra.mxu0 %v49
  %71 = vmatprep.subr.mxu0 0.0
  %72 = vmatpush1.msra.mxu0 %v48
  %73 = vmatprep.subr.mxu0 0.0
  %74 = vmatpush1.msra.mxu0 %v47
  %75 = vmatprep.subr.mxu0 0.0
  %76 = vmatpush1.msra.mxu0 %v46
  %77 = vmatprep.subr.mxu0 0.0
  %78 = vmatpush1.msra.mxu0 %v45
  %79 = vmatprep.subr.mxu0 0.0
  %80 = vmatpush1.msra.mxu0 %v44
  %81 = vmatprep.subr.mxu0 0.0
  %82 = vmatpush1.msra.mxu0 %v43
  %83 = vmatprep.subr.mxu0 0.0
  %84 = vmatpush1.msra.mxu0 %v42
  %85 = vmatprep.subr.mxu0 0.0
  %86 = vmatpush1.msra.mxu0 %v41
  %87 = vmatprep.subr.mxu0 0.0
  %88 = vmatpush1.msra.mxu0 %v40
  %89 = vmatprep.subr.mxu0 0.0
  %90 = vmatpush1.msra.mxu0 %v39
  %91 = vmatprep.subr.mxu0 0.0
  %92 = vmatpush1.msra.mxu0 %v38
  %93 = vmatprep.subr.mxu0 0.0
  %94 = vmatpush1.msra.mxu0 %v37
  %95 = vmatprep.subr.mxu0 0.0
  %96 = vmatpush1.msra.mxu0 %v36
  %97 = vmatprep.subr.mxu0 0.0
  %98 = vmatpush1.msra.mxu0 %v35
  %99 = vmatprep.subr.mxu0 0.0
  %100 = vmatpush2.msra.mxu0 %v66
  %101 = vmatprep.subr.mxu0 0.0
  %102 = vmatpush2.msra.mxu0 %v65
  %103 = vmatprep.subr.mxu0 0.0
  %104 = vmatpush2.msra.mxu0 %v64
  %105 = vmatprep.subr.mxu0 0.0
  %106 = vmatpush2.msra.mxu0 %v63
  %107 = vmatprep.subr.mxu0 0.0
  %108 = vmatpush2.msra.mxu0 %v62
  %109 = vmatprep.subr.mxu0 0.0
  %110 = vmatpush2.msra.mxu0 %v61
  %111 = vmatprep.subr.mxu0 0.0
  %112 = vmatpush2.msra.mxu0 %v60
  %113 = vmatprep.subr.mxu0 0.0
  %114 = vmatpush2.msra.mxu0 %v59
  %115 = vmatprep.subr.mxu0 0.0
  %116 = vmatpush2.msra.mxu0 %v58
  %117 = vmatprep.subr.mxu0 0.0
  %118 = vmatpush2.msra.mxu0 %v57
  %119 = vmatprep.subr.mxu0 0.0
  %120 = vmatpush2.msra.mxu0 %v56
  %121 = vmatprep.subr.mxu0 0.0
  %122 = vmatpush2.msra.mxu0 %v55
  %123 = vmatprep.subr.mxu0 0.0
  %124 = vmatpush2.msra.mxu0 %v54
  %125 = vmatprep.subr.mxu0 0.0
  %126 = vmatpush2.msra.mxu0 %v53
  %127 = vmatprep.subr.mxu0 0.0
  %128 = vmatpush2.msra.mxu0 %v52
  %129 = vmatprep.subr.mxu0 0.0
  %130 = vmatpush2.msra.mxu0 %v51
  %131 = vmatprep.mubr.f32.mxu0 %v28
  %132 = vmatmul.mubr.f32.gmra.mxu0 %v27
  %v133 = vpop.f32.mrf.mxu0
  %v134 = vadd.f32 0.0, %v133
  %v135 = vpop.f32.mrf.mxu0
  %136 = vmatprep.mubr.f32.mxu0 %v30
  %137 = vmatmul.mubr.f32.gmra.mxu0 %v29
  %v138 = vpop.f32.mrf.mxu0
  %v139 = vadd.f32 0.0, %v138
  %v140 = vpop.f32.mrf.mxu0
  %141 = vmatprep.mubr.f32.mxu0 %v32
  %142 = vmatmul.mubr.f32.gmra.mxu0 %v31
  %v143 = vpop.f32.mrf.mxu0
  %v144 = vadd.f32 0.0, %v143
  %v145 = vpop.f32.mrf.mxu0
  %146 = vmatprep.mubr.f32.mxu0 %v34
  %147 = vmatmul.mubr.f32.gmra.mxu0 %v33
  %v148 = vpop.f32.mrf.mxu0
  %v149 = vadd.f32 0.0, %v148
  %v150 = vpop.f32.mrf.mxu0
  %151 = vdwg.mxu0
  %v152 = vadd.f32 %v23, %v134
  %v153 = vadd.f32 %v24, %v139
  %v154 = vadd.f32 %v25, %v144
  %v155 = vadd.f32 %v26, %v149
  %vm156 = vcmask 523264
  %157 = vst.msk [vmem:[#allocation2] sm:$0xff] %vm156, %v152
  %158 = vst.msk [vmem:[#allocation2 + $0x8] sm:$0xff] %vm156, %v153
  %159 = vst.msk [vmem:[#allocation2 + $0x10] sm:$0xff] %vm156, %v154
  %160 = vst.msk [vmem:[#allocation2 + $0x18] sm:$0xff] %vm156, %v155
  // Predicated region
  $region18: #{block_forward.23} parent=0 // pred_check
    %p161 = pneg %p14
  $region19: #{block_forward.23} parent=0 // pred_check_branch
    %163 = sbr.rel (%p161) target = $region21
  $region20: #{block_forward.23} parent=0 // pred_region
    %v164 = vld [vmem:[#allocation2] sm:$0xff]
    %v165 = vld [vmem:[#allocation2 + $0x8] sm:$0xff]
    %v166 = vld [vmem:[#allocation2 + $0x10] sm:$0xff]
    %v167 = vld [vmem:[#allocation2 + $0x18] sm:$0xff]
    %v168 = vld [vmem:[%s2] sm:$0x1]
    %v170 = vlaneseq
    %v171 = vshrl.u32 %v170, 7
    %v172 = vsub.s32 0, %v171
    %v173 = vrot.slane %v168, %v172
    %v175 = vadd.f32 %v164, %v173
    %v176 = vadd.f32 %v165, %v173
    %v177 = vadd.f32 %v166, %v173
    %v178 = vadd.f32 %v167, %v173
    %179 = vst.msk [vmem:[%s3] sm:$0xff] %vm156, %v175
    %180 = vst.msk [vmem:[%s3 + $0x8] sm:$0xff] %vm156, %v176
    %181 = vst.msk [vmem:[%s3 + $0x10] sm:$0xff] %vm156, %v177
    %182 = vst.msk [vmem:[%s3 + $0x18] sm:$0xff] %vm156, %v178
  $region21: #{block_forward.23} parent=0 // pred_fallthru
    _
  // Predicated region
  $region22: #{block_forward.23} parent=0 // pred_check
    _
  $region23: #{block_forward.23} parent=0 // pred_check_branch
    %184 = sbr.rel (0) target = $region25
  $region24: #{block_forward.23} parent=0 // pred_region
    _
  $region25: #{block_forward.23} parent=0 // pred_fallthru
    _
  // Predicated region
  $region26: #{block_forward.23} parent=0 // pred_check
    _
  $region27: #{block_forward.23} parent=0 // pred_check_branch
    %186 = sbr.rel (0) target = $region29
  $region28: #{block_forward.23} parent=0 // pred_region
    _
  $region29: #{block_forward.23} parent=0 // pred_fallthru
    _

// kernel: block_forward.24
$region0: #{block_forward.24}
  #allocation0 [shape = 'u32[]', space=smem, size = 0x4, offset = 0x4, fixed_abs, tag = 'smem constant byte address 0x4 - core index']
  #allocation1 [shape = 'u32[144,128]{1,0:T(1,128)}', space=vmem, size = 0x12000, scoped, tag = 'internal scratch']
  %s0 = inlined_call_operand.vmem [shape: f32[32,64], index: 0, kind: input, shape index: {}]
  %s1 = inlined_call_operand.vmem [shape: f32[32,64], index: 1, kind: input, shape index: {}]
  %s2 = inlined_call_operand.vmem [shape: f32[1,64], index: 2, kind: input, shape index: {}]
  %s3 = inlined_call_operand.vmem [shape: f32[1,64], index: 3, kind: input, shape index: {}]
  %s4 = inlined_call_operand.vmem [shape: f32[32,64], index: 4, kind: output, shape index: {}]
  %s5 = sld [smem:[#allocation0]]
  $region26: #{block_forward.24} parent=0
    _
  %s7 = ssub.s32 1, %s5
  %s8 = scalar_select 0, %s7, %s5
  // Predicated region
  $region2: #{block_forward.24} parent=0 // pred_check
    _
  $region3: #{block_forward.24} parent=0 // pred_check_branch
    %10 = sbr.rel (0) target = $region5
  $region4: #{block_forward.24} parent=0 // pred_region
    _
  $region5: #{block_forward.24} parent=0 // pred_fallthru
    _
  // Predicated region
  $region6: #{block_forward.24} parent=0 // pred_check
    _
  $region7: #{block_forward.24} parent=0 // pred_check_branch
    %12 = sbr.rel (0) target = $region9
  $region8: #{block_forward.24} parent=0 // pred_region
    _
  $region9: #{block_forward.24} parent=0 // pred_fallthru
    _
  // Predicated region
  $region10: #{block_forward.24} parent=0 // pred_check
    _
  $region11: #{block_forward.24} parent=0 // pred_check_branch
    %14 = sbr.rel (0) target = $region13
  $region12: #{block_forward.24} parent=0 // pred_region
    _
  $region13: #{block_forward.24} parent=0 // pred_fallthru
    _
  // Predicated region
  $region14: #{block_forward.24} parent=0 // pred_check
    _
  $region15: #{block_forward.24} parent=0 // pred_check_branch
    %16 = sbr.rel (0) target = $region17
  $region16: #{block_forward.24} parent=0 // pred_region
    _
  $region17: #{block_forward.24} parent=0 // pred_fallthru
    _
  %v17 = vld [vmem:[%s0] sm:$0xff]
  %v18 = vld [vmem:[%s0 + $0x8] sm:$0xff]
  %v19 = vld [vmem:[%s0 + $0x10] sm:$0xff]
  %v20 = vld [vmem:[%s0 + $0x18] sm:$0xff]
  %v21 = vld [vmem:[%s1] sm:$0xff]
  %v22 = vld [vmem:[%s1 + $0x8] sm:$0xff]
  %v23 = vld [vmem:[%s1 + $0x10] sm:$0xff]
  %v24 = vld [vmem:[%s1 + $0x18] sm:$0xff]
  %v25 = vadd.f32 %v17, %v21
  %v26 = vadd.f32 %v18, %v22
  %v27 = vadd.f32 %v19, %v23
  %v28 = vadd.f32 %v20, %v24
  %vm29 = vcmask 523264
  %v30 = vsel %vm29, %v25, 0.0
  %31 = vadd.xlane.f32.xlu0 %v30
  %v32 = vpop.xlane.xlu0 %31
  %v33 = vsel %vm29, %v26, 0.0
  %34 = vadd.xlane.f32.xlu0 %v33
  %v35 = vpop.xlane.xlu0 %34
  %v36 = vsel %vm29, %v27, 0.0
  %37 = vadd.xlane.f32.xlu0 %v36
  %v38 = vpop.xlane.xlu0 %37
  %v39 = vsel %vm29, %v28, 0.0
  %40 = vadd.xlane.f32.xlu0 %v39
  %v41 = vpop.xlane.xlu0 %40
  %v42 = vrcp.pop 64.0
  %v43 = vmul.f32 %v32, %v42
  %v44 = vmul.f32 %v35, %v42
  %v45 = vmul.f32 %v38, %v42
  %v46 = vmul.f32 %v41, %v42
  %v47 = vsub.f32 %v25, %v43
  %v48 = vsub.f32 %v26, %v44
  %v49 = vsub.f32 %v27, %v45
  %v50 = vsub.f32 %v28, %v46
  %v51 = vmul.f32 %v47, %v47
  %v52 = vmul.f32 %v48, %v48
  %v53 = vmul.f32 %v49, %v49
  %v54 = vmul.f32 %v50, %v50
  %v55 = vsel %vm29, %v51, 0.0
  %56 = vadd.xlane.f32.xlu0 %v55
  %v57 = vpop.xlane.xlu0 %56
  %v58 = vsel %vm29, %v52, 0.0
  %59 = vadd.xlane.f32.xlu0 %v58
  %v60 = vpop.xlane.xlu0 %59
  %v61 = vsel %vm29, %v53, 0.0
  %62 = vadd.xlane.f32.xlu0 %v61
  %v63 = vpop.xlane.xlu0 %62
  %v64 = vsel %vm29, %v54, 0.0
  %65 = vadd.xlane.f32.xlu0 %v64
  %v66 = vpop.xlane.xlu0 %65
  %v67 = vmul.f32 %v57, %v42
  %v68 = vmul.f32 %v60, %v42
  %v69 = vmul.f32 %v63, %v42
  %v70 = vmul.f32 %v66, %v42
  %v71 = vadd.f32 %v67, 1e-05
  %v72 = vadd.f32 %v68, 1e-05
  %v73 = vadd.f32 %v69, 1e-05
  %v74 = vadd.f32 %v70, 1e-05
  %v75 = vrsqrt.pop %v71
  %v76 = vrsqrt.pop %v72
  %v77 = vrsqrt.pop %v73
  %v78 = vrsqrt.pop %v74
  %v79 = vmul.f32 %v47, %v75
  %v80 = vmul.f32 %v48, %v76
  %v81 = vmul.f32 %v49, %v77
  %v82 = vmul.f32 %v50, %v78
  %v83 = vld [vmem:[%s2] sm:$0x1]
  %v85 = vlaneseq
  %v86 = vshrl.u32 %v85, 7
  %v87 = vsub.s32 0, %v86
  %v88 = vrot.slane %v83, %v87
  %v90 = vmul.f32 %v79, %v88
  %v91 = vmul.f32 %v80, %v88
  %v92 = vmul.f32 %v81, %v88
  %v93 = vmul.f32 %v82, %v88
  %v94 = vld [vmem:[%s3] sm:$0x1]
  %v96 = vlaneseq
  %v97 = vshrl.u32 %v96, 7
  %v98 = vsub.s32 0, %v97
  %v99 = vrot.slane %v94, %v98
  %v101 = vadd.f32 %v90, %v99
  %v102 = vadd.f32 %v91, %v99
  %v103 = vadd.f32 %v92, %v99
  %v104 = vadd.f32 %v93, %v99
  %105 = vst.msk [vmem:[%s4] sm:$0xff] %vm29, %v101
  %106 = vst.msk [vmem:[%s4 + $0x8] sm:$0xff] %vm29, %v102
  %107 = vst.msk [vmem:[%s4 + $0x10] sm:$0xff] %vm29, %v103
  %108 = vst.msk [vmem:[%s4 + $0x18] sm:$0xff] %vm29, %v104
  // Predicated region
  $region18: #{block_forward.24} parent=0 // pred_check
    _
  $region19: #{block_forward.24} parent=0 // pred_check_branch
    %110 = sbr.rel (0) target = $region21
  $region20: #{block_forward.24} parent=0 // pred_region
    _
  $region21: #{block_forward.24} parent=0 // pred_fallthru
    _
  // Predicated region
  $region22: #{block_forward.24} parent=0 // pred_check
    _
  $region23: #{block_forward.24} parent=0 // pred_check_branch
    %112 = sbr.rel (0) target = $region25
  $region24: #{block_forward.24} parent=0 // pred_region
    _
  $region25: #{block_forward.24} parent=0 // pred_fallthru
    _

// kernel: block_forward.25
$region0: #{block_forward.25}
  #allocation0 [shape = 'u32[]', space=smem, size = 0x4, offset = 0x4, fixed_abs, tag = 'smem constant byte address 0x4 - core index']
  #allocation1 [shape = 'u32[144,128]{1,0:T(1,128)}', space=vmem, size = 0x12000, scoped, tag = 'internal scratch']
  #allocation2 [shape = 'f32[16,64]{1,0:T(8,128)}', space=vmem, size = 0x2000, scoped, tag = 'scratch operand']
  #allocation3 [shape = 'f32[16,64]{1,0:T(8,128)}', space=vmem, size = 0x2000, scoped, tag = 'scratch operand']
  %s0 = inlined_call_operand.vmem [shape: f32[16,64], index: 0, kind: input, shape index: {}]
  %s1 = inlined_call_operand.vmem [shape: f32[64,64], index: 1, kind: input, shape index: {}]
  %s2 = inlined_call_operand.vmem [shape: f32[64,64], index: 2, kind: input, shape index: {}]
  %s3 = inlined_call_operand.vmem [shape: f32[1,64], index: 3, kind: input, shape index: {}]
  %s4 = inlined_call_operand.vmem [shape: f32[1,64], index: 4, kind: input, shape index: {}]
  %s5 = inlined_call_operand.vmem [shape: f32[16,64], index: 5, kind: output, shape index: {}]
  %s6 = sld [smem:[#allocation0]]
  $region38: #{block_forward.25} parent=0
    _
  %s8 = ssub.s32 1, %s6
  %s9 = scalar_select 0, %s8, %s6
  // Predicated region
  $region2: #{block_forward.25} parent=0 // pred_check
    _
  $region3: #{block_forward.25} parent=0 // pred_check_branch
    %11 = sbr.rel (0) target = $region5
  $region4: #{block_forward.25} parent=0 // pred_region
    _
  $region5: #{block_forward.25} parent=0 // pred_fallthru
    _
  // Predicated region
  $region6: #{block_forward.25} parent=0 // pred_check
    _
  $region7: #{block_forward.25} parent=0 // pred_check_branch
    %13 = sbr.rel (0) target = $region9
  $region8: #{block_forward.25} parent=0 // pred_region
    _
  $region9: #{block_forward.25} parent=0 // pred_fallthru
    _
  // Predicated region
  $region10: #{block_forward.25} parent=0 // pred_check
    _
  $region11: #{block_forward.25} parent=0 // pred_check_branch
    %15 = sbr.rel (0) target = $region13
  $region12: #{block_forward.25} parent=0 // pred_region
    _
  $region13: #{block_forward.25} parent=0 // pred_fallthru
    _
  // Predicated region
  $region14: #{block_forward.25} parent=0 // pred_check
    _
  $region15: #{block_forward.25} parent=0 // pred_check_branch
    %17 = sbr.rel (0) target = $region17
  $region16: #{block_forward.25} parent=0 // pred_region
    _
  $region17: #{block_forward.25} parent=0 // pred_fallthru
    _
  // Predicated region
  $region18: #{block_forward.25} parent=0 // pred_check
    _
  $region19: #{block_forward.25} parent=0 // pred_check_branch
    %19 = sbr.rel (0) target = $region21
  $region20: #{block_forward.25} parent=0 // pred_region
    _
  $region21: #{block_forward.25} parent=0 // pred_fallthru
    _
  %p20 = scmp.eq.s32.totalorder 0, 0
  // Predicated region
  $region22: #{block_forward.25} parent=0 // pred_check
    %p21 = pneg %p20
  $region23: #{block_forward.25} parent=0 // pred_check_branch
    %23 = sbr.rel (%p21) target = $region25
  $region24: #{block_forward.25} parent=0 // pred_region
    %vm24 = vcmask 523264
    %25 = vst.msk [vmem:[#allocation2] sm:$0xff] %vm24, 0.0
    %26 = vst.msk [vmem:[#allocation2 + $0x8] sm:$0xff] %vm24, 0.0
    %27 = vst.msk [vmem:[#allocation3] sm:$0xff] %vm24, 0.0
    %28 = vst.msk [vmem:[#allocation3 + $0x8] sm:$0xff] %vm24, 0.0
  $region25: #{block_forward.25} parent=0 // pred_fallthru
    _
  %v29 = vld [vmem:[%s0] sm:$0xff]
  %v30 = vld [vmem:[%s0 + $0x8] sm:$0xff]
  %v31 = vld [vmem:[#allocation2] sm:$0xff]
  %v32 = vld [vmem:[#allocation2 + $0x8] sm:$0xff]
  %v33 = vld [vmem:[%s1] sm:$0xff]
  %v34 = vld [vmem:[%s1 + $0x8] sm:$0xff]
  %v35 = vld [vmem:[%s1 + $0x10] sm:$0xff]
  %v36 = vld [vmem:[%s1 + $0x18] sm:$0xff]
  %v37 = vld [vmem:[%s1 + $0x20] sm:$0xff]
  %v38 = vld [vmem:[%s1 + $0x28] sm:$0xff]
  %v39 = vld [vmem:[%s1 + $0x30] sm:$0xff]
  %v40 = vld [vmem:[%s1 + $0x38] sm:$0xff]
  %vm41 = vcmask 523264
  %v43 = vsel %vm41, %v29, 0
  %v46 = vsel %vm41, %v30, 0
  %48 = vmatprep.subr.mxu0 0.0
  %49 = vmatpush1.msra.mxu0 0.0
  %50 = vmatprep.subr.mxu0 0.0
  %51 = vmatpush1.msra.mxu0 0.0
  %52 = vmatprep.subr.mxu0 0.0
  %53 = vmatpush1.msra.mxu0 0.0
  %54 = vmatprep.subr.mxu0 0.0
  %55 = vmatpush1.msra.mxu0 0.0
  %56 = vmatprep.subr.mxu0 0.0
  %57 = vmatpush1.msra.mxu0 0.0
  %58 = vmatprep.subr.mxu0 0.0
  %59 = vmatpush1.msra.mxu0 0.0
  %60 = vmatprep.subr.mxu0 0.0
  %61 = vmatpush1.msra.mxu0 0.0
  %62 = vmatprep.subr.mxu0 0.0
  %63 = vmatpush1.msra.mxu0 0.0
  %64 = vmatprep.subr.mxu0 0.0
  %65 = vmatpush1.msra.mxu0 %v40
  %66 = vmatprep.subr.mxu0 0.0
  %67 = vmatpush1.msra.mxu0 %v39
  %68 = vmatprep.subr.mxu0 0.0
  %69 = vmatpush1.msra.mxu0 %v38
  %70 = vmatprep.subr.mxu0 0.0
  %71 = vmatpush1.msra.mxu0 %v37
  %72 = vmatprep.subr.mxu0 0.0
  %73 = vmatpush1.msra.mxu0 %v36
  %74 = vmatprep.subr.mxu0 0.0
  %75 = vmatpush1.msra.mxu0 %v35
  %76 = vmatprep.subr.mxu0 0.0
  %77 = vmatpush1.msra.mxu0 %v34
  %78 = vmatprep.subr.mxu0 0.0
  %79 = vmatpush1.msra.mxu0 %v33
  %80 = vmatprep.subr.mxu0 0.0
  %81 = vmatpush2.msra.mxu0 0.0
  %82 = vmatprep.subr.mxu0 0.0
  %83 = vmatpush2.msra.mxu0 0.0
  %84 = vmatprep.subr.mxu0 0.0
  %85 = vmatpush2.msra.mxu0 0.0
  %86 = vmatprep.subr.mxu0 0.0
  %87 = vmatpush2.msra.mxu0 0.0
  %88 = vmatprep.subr.mxu0 0.0
  %89 = vmatpush2.msra.mxu0 0.0
  %90 = vmatprep.subr.mxu0 0.0
  %91 = vmatpush2.msra.mxu0 0.0
  %92 = vmatprep.subr.mxu0 0.0
  %93 = vmatpush2.msra.mxu0 0.0
  %94 = vmatprep.subr.mxu0 0.0
  %95 = vmatpush2.msra.mxu0 0.0
  %96 = vmatprep.subr.mxu0 0.0
  %97 = vmatpush2.msra.mxu0 0.0
  %98 = vmatprep.subr.mxu0 0.0
  %99 = vmatpush2.msra.mxu0 0.0
  %100 = vmatprep.subr.mxu0 0.0
  %101 = vmatpush2.msra.mxu0 0.0
  %102 = vmatprep.subr.mxu0 0.0
  %103 = vmatpush2.msra.mxu0 0.0
  %104 = vmatprep.subr.mxu0 0.0
  %105 = vmatpush2.msra.mxu0 0.0
  %106 = vmatprep.subr.mxu0 0.0
  %107 = vmatpush2.msra.mxu0 0.0
  %108 = vmatprep.subr.mxu0 0.0
  %109 = vmatpush2.msra.mxu0 0.0
  %110 = vmatprep.subr.mxu0 0.0
  %111 = vmatpush2.msra.mxu0 0.0
  %112 = vmatprep.mubr.f32.mxu0 0.0
  %113 = vmatmul.mubr.f32.gmra.mxu0 %v43
  %v114 = vpop.f32.mrf.mxu0
  %v115 = vadd.f32 0.0, %v114
  %v116 = vpop.f32.mrf.mxu0
  %117 = vmatprep.mubr.f32.mxu0 0.0
  %118 = vmatmul.mubr.f32.gmra.mxu0 %v46
  %v119 = vpop.f32.mrf.mxu0
  %v120 = vadd.f32 0.0, %v119
  %v121 = vpop.f32.mrf.mxu0
  %122 = vdwg.mxu0
  %v123 = vadd.f32 %v31, %v115
  %v124 = vadd.f32 %v32, %v120
  %125 = vst.msk [vmem:[#allocation2] sm:$0xff] %vm41, %v123
  %126 = vst.msk [vmem:[#allocation2 + $0x8] sm:$0xff] %vm41, %v124
  %v127 = vld [vmem:[#allocation3] sm:$0xff]
  %v128 = vld [vmem:[#allocation3 + $0x8] sm:$0xff]
  %v129 = vld [vmem:[%s2] sm:$0xff]
  %v130 = vld [vmem:[%s2 + $0x8] sm:$0xff]
  %v131 = vld [vmem:[%s2 + $0x10] sm:$0xff]
  %v132 = vld [vmem:[%s2 + $0x18] sm:$0xff]
  %v133 = vld [vmem:[%s2 + $0x20] sm:$0xff]
  %v134 = vld [vmem:[%s2 + $0x28] sm:$0xff]
  %v135 = vld [vmem:[%s2 + $0x30] sm:$0xff]
  %v136 = vld [vmem:[%s2 + $0x38] sm:$0xff]
  %137 = vmatprep.subr.mxu0 0.0
  %138 = vmatpush1.msra.mxu0 0.0
  %139 = vmatprep.subr.mxu0 0.0
  %140 = vmatpush1.msra.mxu0 0.0
  %141 = vmatprep.subr.mxu0 0.0
  %142 = vmatpush1.msra.mxu0 0.0
  %143 = vmatprep.subr.mxu0 0.0
  %144 = vmatpush1.msra.mxu0 0.0
  %145 = vmatprep.subr.mxu0 0.0
  %146 = vmatpush1.msra.mxu0 0.0
  %147 = vmatprep.subr.mxu0 0.0
  %148 = vmatpush1.msra.mxu0 0.0
  %149 = vmatprep.subr.mxu0 0.0
  %150 = vmatpush1.msra.mxu0 0.0
  %151 = vmatprep.subr.mxu0 0.0
  %152 = vmatpush1.msra.mxu0 0.0
  %153 = vmatprep.subr.mxu0 0.0
  %154 = vmatpush1.msra.mxu0 %v136
  %155 = vmatprep.subr.mxu0 0.0
  %156 = vmatpush1.msra.mxu0 %v135
  %157 = vmatprep.subr.mxu0 0.0
  %158 = vmatpush1.msra.mxu0 %v134
  %159 = vmatprep.subr.mxu0 0.0
  %160 = vmatpush1.msra.mxu0 %v133
  %161 = vmatprep.subr.mxu0 0.0
  %162 = vmatpush1.msra.mxu0 %v132
  %163 = vmatprep.subr.mxu0 0.0
  %164 = vmatpush1.msra.mxu0 %v131
  %165 = vmatprep.subr.mxu0 0.0
  %166 = vmatpush1.msra.mxu0 %v130
  %167 = vmatprep.subr.mxu0 0.0
  %168 = vmatpush1.msra.mxu0 %v129
  %169 = vmatprep.subr.mxu0 0.0
  %170 = vmatpush2.msra.mxu0 0.0
  %171 = vmatprep.subr.mxu0 0.0
  %172 = vmatpush2.msra.mxu0 0.0
  %173 = vmatprep.subr.mxu0 0.0
  %174 = vmatpush2.msra.mxu0 0.0
  %175 = vmatprep.subr.mxu0 0.0
  %176 = vmatpush2.msra.mxu0 0.0
  %177 = vmatprep.subr.mxu0 0.0
  %178 = vmatpush2.msra.mxu0 0.0
  %179 = vmatprep.subr.mxu0 0.0
  %180 = vmatpush2.msra.mxu0 0.0
  %181 = vmatprep.subr.mxu0 0.0
  %182 = vmatpush2.msra.mxu0 0.0
  %183 = vmatprep.subr.mxu0 0.0
  %184 = vmatpush2.msra.mxu0 0.0
  %185 = vmatprep.subr.mxu0 0.0
  %186 = vmatpush2.msra.mxu0 0.0
  %187 = vmatprep.subr.mxu0 0.0
  %188 = vmatpush2.msra.mxu0 0.0
  %189 = vmatprep.subr.mxu0 0.0
  %190 = vmatpush2.msra.mxu0 0.0
  %191 = vmatprep.subr.mxu0 0.0
  %192 = vmatpush2.msra.mxu0 0.0
  %193 = vmatprep.subr.mxu0 0.0
  %194 = vmatpush2.msra.mxu0 0.0
  %195 = vmatprep.subr.mxu0 0.0
  %196 = vmatpush2.msra.mxu0 0.0
  %197 = vmatprep.subr.mxu0 0.0
  %198 = vmatpush2.msra.mxu0 0.0
  %199 = vmatprep.subr.mxu0 0.0
  %200 = vmatpush2.msra.mxu0 0.0
  %201 = vmatprep.mubr.f32.mxu0 0.0
  %202 = vmatmul.mubr.f32.gmra.mxu0 %v43
  %v203 = vpop.f32.mrf.mxu0
  %v204 = vadd.f32 0.0, %v203
  %v205 = vpop.f32.mrf.mxu0
  %206 = vmatprep.mubr.f32.mxu0 0.0
  %207 = vmatmul.mubr.f32.gmra.mxu0 %v46
  %v208 = vpop.f32.mrf.mxu0
  %v209 = vadd.f32 0.0, %v208
  %v210 = vpop.f32.mrf.mxu0
  %211 = vdwg.mxu0
  %v212 = vadd.f32 %v127, %v204
  %v213 = vadd.f32 %v128, %v209
  %214 = vst.msk [vmem:[#allocation3] sm:$0xff] %vm41, %v212
  %215 = vst.msk [vmem:[#allocation3 + $0x8] sm:$0xff] %vm41, %v213
  // Predicated region
  $region26: #{block_forward.25} parent=0 // pred_check
    %p216 = pneg %p20
  $region27: #{block_forward.25} parent=0 // pred_check_branch
    %218 = sbr.rel (%p216) target = $region29
  $region28: #{block_forward.25} parent=0 // pred_region
    %v219 = vld [vmem:[#allocation2] sm:$0xff]
    %v220 = vld [vmem:[#allocation2 + $0x8] sm:$0xff]
    %v221 = vld [vmem:[%s3] sm:$0x1]
    %v223 = vlaneseq
    %v224 = vshrl.u32 %v223, 7
    %v225 = vsub.s32 0, %v224
    %v226 = vrot.slane %v221, %v225
    %v228 = vadd.f32 %v219, %v226
    %v229 = vadd.f32 %v220, %v226
    %v230 = vld [vmem:[#allocation3] sm:$0xff]
    %v231 = vld [vmem:[#allocation3 + $0x8] sm:$0xff]
    %v232 = vld [vmem:[%s4] sm:$0x1]
    %v234 = vlaneseq
    %v235 = vshrl.u32 %v234, 7
    %v236 = vsub.s32 0, %v235
    %v237 = vrot.slane %v232, %v236
    %v239 = vadd.f32 %v230, %v237
    %v240 = vadd.f32 %v231, %v237
    %v241 = vxor.u32 %v239, 2147483648
    %v242 = vxor.u32 %v240, 2147483648
    %v243 = vmul.f32 %v241, 1.442695
    %v244 = vpow.pop %v243
    %v245 = vmul.f32 %v242, 1.442695
    %v246 = vpow.pop %v245
    %v247 = vadd.f32 %v244, 1.0
    %v248 = vadd.f32 %v246, 1.0
    %v249 = vrcp.pop %v247
    %v250 = vmul.f32 1.0, %v249
    %v251 = vrcp.pop %v248
    %v252 = vmul.f32 1.0, %v251
    %v253 = vmul.f32 %v228, %v250
    %v254 = vmul.f32 %v229, %v252
    %255 = vst.msk [vmem:[%s5] sm:$0xff] %vm41, %v253
    %256 = vst.msk [vmem:[%s5 + $0x8] sm:$0xff] %vm41, %v254
  $region29: #{block_forward.25} parent=0 // pred_fallthru
    _
  // Predicated region
  $region30: #{block_forward.25} parent=0 // pred_check
    _
  $region31: #{block_forward.25} parent=0 // pred_check_branch
    %258 = sbr.rel (0) target = $region33
  $region32: #{block_forward.25} parent=0 // pred_region
    _
  $region33: #{block_forward.25} parent=0 // pred_fallthru
    _
  // Predicated region
  $region34: #{block_forward.25} parent=0 // pred_check
    _
  $region35: #{block_forward.25} parent=0 // pred_check_branch
    %260 = sbr.rel (0) target = $region37
  $region36: #{block_forward.25} parent=0 // pred_region
    _
  $region37: #{block_forward.25} parent=0 // pred_fallthru
    _

// kernel: block_forward.26
$region0: #{block_forward.26}
  #allocation0 [shape = 'u32[]', space=smem, size = 0x4, offset = 0x4, fixed_abs, tag = 'smem constant byte address 0x4 - core index']
  #allocation1 [shape = 'u32[144,128]{1,0:T(1,128)}', space=vmem, size = 0x12000, scoped, tag = 'internal scratch']
  %s0 = inlined_call_operand.vmem [shape: f32[2,14,64], index: 0, kind: input, shape index: {}]
  %s1 = inlined_call_operand.vmem [shape: f32[7,64], index: 1, kind: input, shape index: {}]
  %s2 = inlined_call_operand.vmem [shape: f32[1,64], index: 2, kind: input, shape index: {}]
  %s3 = inlined_call_operand.vmem [shape: f32[1,64], index: 3, kind: input, shape index: {}]
  %s4 = inlined_call_operand.vmem [shape: f32[2,8,64], index: 4, kind: output, shape index: {}]
  %s5 = sld [smem:[#allocation0]]
  $region49: #{block_forward.26} parent=0
    _
  %s7 = ssub.s32 1, %s5
  %s8 = scalar_select 0, %s7, %s5
  loop: start=0, step=1, limit=4
  $region2: #{block_forward.26} parent=0 // loop_pre_header
    _
  $region3: #{block_forward.26} parent=0 // loop_header
    %s10 = sphi 0, %s14
    %p11 = scmp.ge.s32.totalorder %s10, 4
    %s20 = sphi 0, %s22
    %s23 = sphi 0, %s20
    %s24 = sphi 0, %s23
    %s40 = sphi 0, %s24
    %s44 = sphi 0, %s44
    %s46 = sphi 0, %s44
    %s47 = sphi 0, %s46
    %s61 = sphi 0, %s47
    %s65 = sphi 0, %s65
    %s67 = sphi 0, %s65
    %s68 = sphi 0, %s67
    %s82 = sphi 0, %s68
    %s86 = sphi 0, %s86
    %s88 = sphi 0, %s86
    %s89 = sphi 0, %s88
    %s103 = sphi 0, %s89
    %s109 = sphi 0, %s111
    %s112 = sphi 0, %s109
    %s113 = sphi 0, %s112
    %s129 = sphi 0, %s113
  $region4: #{block_forward.26} parent=0 // loop_header_branch
    %13 = sbr.rel (%p11) target = $region8
  $region5: #{block_forward.26} parent=0 // loop_body
    %s15 = ssub.s32 %s10, 1
    %s16 = ssub.s32 %s10, 2
    %s17 = sadd.s32 %s10, 1
    %s18 = ssub.s32 %s10, %s17
    %p19 = scmp.eq.s32.totalorder %s18, 0
    %s21 = sadd.s32 %s20, 1
    %s22 = scalar_select %p19, %s20, %s21
    %p25 = pneg %p19
    %p26 = scmp.eq.s32.totalorder %s10, 1
    %p27 = por %p25, %p26
    %p28 = scmp.ne.s32.totalorder %s20, %s23
    %p29 = scmp.eq.s32.totalorder %s10, 0
    %p30 = por %p28, %p29
    %p31 = scmp.ne.s32.totalorder %s20, %s23
    %p32 = scmp.eq.s32.totalorder %s15, 1
    %p33 = por %p31, %p32
    %p34 = scmp.ne.s32.totalorder %s23, %s24
    %p35 = scmp.eq.s32.totalorder %s15, 0
    %p36 = por %p34, %p35
    %p37 = scmp.ne.s32.totalorder %s23, %s24
    %p38 = scmp.eq.s32.totalorder %s16, 1
    %p39 = por %p37, %p38
    %p41 = scmp.ne.s32.totalorder %s24, %s40
    %p42 = scmp.eq.s32.totalorder %s16, 0
    %p43 = por %p41, %p42
    %s45 = sadd.s32 %s44, 1
    %p48 = scmp.eq.s32.totalorder %s10, 1
    %p49 = scmp.ne.s32.totalorder %s44, %s46
    %p50 = scmp.eq.s32.totalorder %s10, 0
    %p51 = por %p49, %p50
    %p52 = scmp.ne.s32.totalorder %s44, %s46
    %p53 = scmp.eq.s32.totalorder %s15, 1
    %p54 = por %p52, %p53
    %p55 = scmp.ne.s32.totalorder %s46, %s47
    %p56 = scmp.eq.s32.totalorder %s15, 0
    %p57 = por %p55, %p56
    %p58 = scmp.ne.s32.totalorder %s46, %s47
    %p59 = scmp.eq.s32.totalorder %s16, 1
    %p60 = por %p58, %p59
    %p62 = scmp.ne.s32.totalorder %s47, %s61
    %p63 = scmp.eq.s32.totalorder %s16, 0
    %p64 = por %p62, %p63
    %s66 = sadd.s32 %s65, 1
    %p69 = scmp.eq.s32.totalorder %s10, 1
    %p70 = scmp.ne.s32.totalorder %s65, %s67
    %p71 = scmp.eq.s32.totalorder %s10, 0
    %p72 = por %p70, %p71
    %p73 = scmp.ne.s32.totalorder %s65, %s67
    %p74 = scmp.eq.s32.totalorder %s15, 1
    %p75 = por %p73, %p74
    %p76 = scmp.ne.s32.totalorder %s67, %s68
    %p77 = scmp.eq.s32.totalorder %s15, 0
    %p78 = por %p76, %p77
    %p79 = scmp.ne.s32.totalorder %s67, %s68
    %p80 = scmp.eq.s32.totalorder %s16, 1
    %p81 = por %p79, %p80
    %p83 = scmp.ne.s32.totalorder %s68, %s82
    %p84 = scmp.eq.s32.totalorder %s16, 0
    %p85 = por %p83, %p84
    %s87 = sadd.s32 %s86, 1
    %p90 = scmp.eq.s32.totalorder %s10, 1
    %p91 = scmp.ne.s32.totalorder %s86, %s88
    %p92 = scmp.eq.s32.totalorder %s10, 0
    %p93 = por %p91, %p92
    %p94 = scmp.ne.s32.totalorder %s86, %s88
    %p95 = scmp.eq.s32.totalorder %s15, 1
    %p96 = por %p94, %p95
    %p97 = scmp.ne.s32.totalorder %s88, %s89
    %p98 = scmp.eq.s32.totalorder %s15, 0
    %p99 = por %p97, %p98
    %p100 = scmp.ne.s32.totalorder %s88, %s89
    %p101 = scmp.eq.s32.totalorder %s16, 1
    %p102 = por %p100, %p101
    %p104 = scmp.ne.s32.totalorder %s89, %s103
    %p105 = scmp.eq.s32.totalorder %s16, 0
    %p106 = por %p104, %p105
    %s107 = ssub.s32 %s10, %s17
    %p108 = scmp.eq.s32.totalorder %s107, 0
    %s110 = sadd.s32 %s109, 1
    %s111 = scalar_select %p108, %s109, %s110
    %p114 = pneg %p108
    %p115 = scmp.eq.s32.totalorder %s10, 1
    %p116 = por %p114, %p115
    %p117 = scmp.ne.s32.totalorder %s109, %s112
    %p118 = scmp.eq.s32.totalorder %s10, 0
    %p119 = por %p117, %p118
    %p120 = scmp.ne.s32.totalorder %s109, %s112
    %p121 = scmp.eq.s32.totalorder %s15, 1
    %p122 = por %p120, %p121
    %p123 = scmp.ne.s32.totalorder %s112, %s113
    %p124 = scmp.eq.s32.totalorder %s15, 0
    %p125 = por %p123, %p124
    %p126 = scmp.ne.s32.totalorder %s112, %s113
    %p127 = scmp.eq.s32.totalorder %s16, 1
    %p128 = por %p126, %p127
    %p130 = scmp.ne.s32.totalorder %s113, %s129
    %p131 = scmp.eq.s32.totalorder %s16, 0
    %p132 = por %p130, %p131
    %p133 = scmp.le.s32.totalorder 1, %s10
    %p134 = scmp.lt.s32.totalorder %s10, 3
    %p135 = pnand %p133, %p134
    %p136 = pneg %p135
    // Predicated region
    $region9: #{block_forward.26} parent=5 // pred_check
      _
    $region10: #{block_forward.26} parent=5 // pred_check_branch
      %138 = sbr.rel (%p135) target = $region12
    $region11: #{block_forward.26} parent=5 // pred_region
      %s139 = ssub.s32 %s10, 1
      // Predicated region
      $region13: #{block_forward.26} parent=11 // pred_check
        %p140 = pneg %p57
      $region14: #{block_forward.26} parent=11 // pred_check_branch
        %142 = sbr.rel (%p140) target = $region16
      $region15: #{block_forward.26} parent=11 // pred_region
        _
      $region16: #{block_forward.26} parent=11 // pred_fallthru
        _
      // Predicated region
      $region17: #{block_forward.26} parent=11 // pred_check
        %p143 = pneg %p78
      $region18: #{block_forward.26} parent=11 // pred_check_branch
        %145 = sbr.rel (%p143) target = $region20
      $region19: #{block_forward.26} parent=11 // pred_region
        _
      $region20: #{block_forward.26} parent=11 // pred_fallthru
        _
      // Predicated region
      $region21: #{block_forward.26} parent=11 // pred_check
        %p146 = pneg %p99
      $region22: #{block_forward.26} parent=11 // pred_check_branch
        %148 = sbr.rel (%p146) target = $region24
      $region23: #{block_forward.26} parent=11 // pred_region
        _
      $region24: #{block_forward.26} parent=11 // pred_fallthru
        _
    $region12: #{block_forward.26} parent=5 // pred_fallthru
      _
    %p149 = scmp.lt.s32.totalorder %s10, 2
    // Predicated region
    $region25: #{block_forward.26} parent=5 // pred_check
      %p150 = pneg %p149
    $region26: #{block_forward.26} parent=5 // pred_check_branch
      %152 = sbr.rel (%p150) target = $region28
    $region27: #{block_forward.26} parent=5 // pred_region
      // Predicated region
      $region29: #{block_forward.26} parent=27 // pred_check
        %p153 = pneg %p30
      $region30: #{block_forward.26} parent=27 // pred_check_branch
        %155 = sbr.rel (%p153) target = $region32
      $region31: #{block_forward.26} parent=27 // pred_region
        %p156 = scmp.lt.s32.totalorder %s10, 1
        %s157 = scalar_select %p156, %s10, 1
        %s158 = smul.addr %s157, 2
        %s159 = smul.addr %s158, 8
        %s160 = scalar_lea.vmem %s0, %s159
      $region32: #{block_forward.26} parent=27 // pred_fallthru
        _
    $region28: #{block_forward.26} parent=5 // pred_fallthru
      _
    %p161 = scmp.le.s32.totalorder 1, %s10
    %p162 = scmp.lt.s32.totalorder %s10, 3
    %p163 = pnand %p161, %p162
    %p164 = pneg %p163
    // Predicated region
    $region33: #{block_forward.26} parent=5 // pred_check
      _
    $region34: #{block_forward.26} parent=5 // pred_check_branch
      %166 = sbr.rel (%p163) target = $region36
    $region35: #{block_forward.26} parent=5 // pred_region
      %s167 = ssub.s32 %s10, 1
      %p168 = scmp.lt.s32.totalorder %s15, 1
      %s169 = scalar_select %p168, %s15, 1
      %s170 = smul.addr %s169, 2
      %s171 = smul.addr %s170, 8
      %s172 = scalar_lea.vmem %s0, %s171
      %p173 = pneg %p36
      %p174 = pneg %p33
      %p175 = pneg %p57
      %p176 = pneg %p54
      %p177 = pneg %p78
      %p178 = pneg %p75
      %p179 = pneg %p99
      %p180 = pneg %p96
      %p181 = pneg %p125
      %p182 = pneg %p122
      %p183 = scmp.lt.s32.totalorder %s15, 1
      %s184 = scalar_select %p183, %s15, 1
      %s185 = smul.addr %s184, 8
      %s186 = scalar_lea.vmem %s4, %s185
      %p187 = scmp.lt.s32.totalorder %s15, 1
      %s188 = scalar_select %p187, %s15, 1
      %s189 = smul.addr %s188, 2
      %s190 = smul.addr %s189, 8
      %s191 = scalar_lea.vmem %s0, %s190
      %p192 = scmp.lt.s32.totalorder %s15, 1
      %s193 = scalar_select %p192, %s15, 1
      %s194 = smul.addr %s193, 8
      %s195 = scalar_lea.vmem %s4, %s194
      %v196 = vld [vmem:[%s191] sm:$0xff]
      %v197 = vld [vmem:[%s191 + $0x8] sm:$0x3f]
      %v198 = vld [vmem:[%s1] sm:$0x7f]
      %v199 = vlaneseq
      %v200 = vshrl.u32 %v199, 7
      %v201 = vsub.s32 0, %v200
      %v202 = vrot.slane %v198, %v201
      %v203 = vmul.f32 %v196, %v202
      %v204 = vadd.f32 %v203, 0.0
      %v205 = vlaneseq
      %v206 = vshrl.u32 %v205, 7
      %v207 = vsub.s32 1, %v206
      %v208 = vrot.slane %v198, %v207
      %v209 = vmul.f32 %v196, %v208
      %v210 = vmul.f32 %v197, %v208
      %vm213 = vcmask 1046528
      %v214 = vrot.slane %v209, 1
      %v215 = vrot.slane %v210, 1
      %v216 = vsel %vm213, %v214, %v215
      %v218 = vadd.f32 %v204, %v216
      %v219 = vlaneseq
      %v220 = vshrl.u32 %v219, 7
      %v221 = vsub.s32 2, %v220
      %v222 = vrot.slane %v198, %v221
      %v223 = vmul.f32 %v196, %v222
      %v224 = vmul.f32 %v197, %v222
      %vm227 = vcmask 1045504
      %v228 = vrot.slane %v223, 2
      %v229 = vrot.slane %v224, 2
      %v230 = vsel %vm227, %v228, %v229
      %v232 = vadd.f32 %v218, %v230
      %v233 = vlaneseq
      %v234 = vshrl.u32 %v233, 7
      %v235 = vsub.s32 3, %v234
      %v236 = vrot.slane %v198, %v235
      %v237 = vmul.f32 %v196, %v236
      %v238 = vmul.f32 %v197, %v236
      %vm241 = vcmask 1044480
      %v242 = vrot.slane %v237, 3
      %v243 = vrot.slane %v238, 3
      %v244 = vsel %vm241, %v242, %v243
      %v246 = vadd.f32 %v232, %v244
      %v247 = vlaneseq
      %v248 = vshrl.u32 %v247, 7
      %v249 = vsub.s32 4, %v248
      %v250 = vrot.slane %v198, %v249
      %v251 = vmul.f32 %v196, %v250
      %v252 = vmul.f32 %v197, %v250
      %vm255 = vcmask 1043456
      %v256 = vrot.slane %v251, 4
      %v257 = vrot.slane %v252, 4
      %v258 = vsel %vm255, %v256, %v257
      %v260 = vadd.f32 %v246, %v258
      %v261 = vlaneseq
      %v262 = vshrl.u32 %v261, 7
      %v263 = vsub.s32 5, %v262
      %v264 = vrot.slane %v198, %v263
      %v265 = vmul.f32 %v196, %v264
      %v266 = vmul.f32 %v197, %v264
      %vm269 = vcmask 1042432
      %v270 = vrot.slane %v265, 5
      %v271 = vrot.slane %v266, 5
      %v272 = vsel %vm269, %v270, %v271
      %v274 = vadd.f32 %v260, %v272
      %v275 = vlaneseq
      %v276 = vshrl.u32 %v275, 7
      %v277 = vsub.s32 6, %v276
      %v278 = vrot.slane %v198, %v277
      %v279 = vmul.f32 %v196, %v278
      %v280 = vmul.f32 %v197, %v278
      %vm283 = vcmask 1041408
      %v284 = vrot.slane %v279, 6
      %v285 = vrot.slane %v280, 6
      %v286 = vsel %vm283, %v284, %v285
      %v288 = vadd.f32 %v274, %v286
      %v289 = vld [vmem:[%s2] sm:$0x1]
      %v291 = vlaneseq
      %v292 = vshrl.u32 %v291, 7
      %v293 = vsub.s32 0, %v292
      %v294 = vrot.slane %v289, %v293
      %v296 = vmul.f32 %v288, %v294
      %v297 = vld [vmem:[%s3] sm:$0x1]
      %v299 = vlaneseq
      %v300 = vshrl.u32 %v299, 7
      %v301 = vsub.s32 0, %v300
      %v302 = vrot.slane %v297, %v301
      %v304 = vadd.f32 %v296, %v302
      %v305 = vxor.u32 %v304, 2147483648
      %v306 = vmul.f32 %v305, 1.442695
      %v307 = vpow.pop %v306
      %v308 = vadd.f32 %v307, 1.0
      %v309 = vrcp.pop %v308
      %v310 = vmul.f32 1.0, %v309
      %v311 = vmul.f32 %v304, %v310
      %vm312 = vcmask 523264
      %313 = vst.msk [vmem:[%s195] sm:$0xff] %vm312, %v311
      %p314 = scmp.lt.s32.totalorder %s15, 1
      %s315 = scalar_select %p314, %s15, 1
      %s316 = smul.addr %s315, 8
      %s317 = scalar_lea.vmem %s4, %s316
      // Predicated region
      $region37: #{block_forward.26} parent=35 // pred_check
        %p318 = pneg %p122
      $region38: #{block_forward.26} parent=35 // pred_check_branch
        %320 = sbr.rel (%p318) target = $region40
      $region39: #{block_forward.26} parent=35 // pred_region
        _
      $region40: #{block_forward.26} parent=35 // pred_fallthru
        _
    $region36: #{block_forward.26} parent=5 // pred_fallthru
      _
    %p321 = scmp.le.s32.totalorder 2, %s10
    // Predicated region
    $region41: #{block_forward.26} parent=5 // pred_check
      %p322 = pneg %p321
    $region42: #{block_forward.26} parent=5 // pred_check_branch
      %324 = sbr.rel (%p322) target = $region44
    $region43: #{block_forward.26} parent=5 // pred_region
      %s325 = ssub.s32 %s10, 2
      // Predicated region
      $region45: #{block_forward.26} parent=43 // pred_check
        %p326 = pneg %p128
      $region46: #{block_forward.26} parent=43 // pred_check_branch
        %328 = sbr.rel (%p326) target = $region48
      $region47: #{block_forward.26} parent=43 // pred_region
        %p329 = scmp.lt.s32.totalorder %s16, 1
        %s330 = scalar_select %p329, %s16, 1
        %s331 = smul.addr %s330, 8
        %s332 = scalar_lea.vmem %s4, %s331
      $region48: #{block_forward.26} parent=43 // pred_fallthru
        _
    $region44: #{block_forward.26} parent=5 // pred_fallthru
      _
  $region6: #{block_forward.26} parent=0 // loop_footer
    %s14 = sadd.s32 1, %s10
  $region7: #{block_forward.26} parent=0 // loop_footer_branch
    %9 = sbr.rel target = $region3
  $region8: #{block_forward.26} parent=0 // loop_exit
    _

// kernel: block_forward.27
$region0: #{block_forward.27}
  #allocation0 [shape = 'u32[]', space=smem, size = 0x4, offset = 0x4, fixed_abs, tag = 'smem constant byte address 0x4 - core index']
  #allocation1 [shape = 'u32[144,128]{1,0:T(1,128)}', space=vmem, size = 0x12000, scoped, tag = 'internal scratch']
  #allocation2 [shape = 'f32[8,64]{1,0:T(8,128)}', space=vmem, size = 0x1000, scoped, tag = 'scratch operand']
  %s0 = inlined_call_operand.vmem [shape: f32[8,64], index: 0, kind: input, shape index: {}]
  %s1 = inlined_call_operand.vmem [shape: f32[64,64], index: 1, kind: input, shape index: {}]
  %s2 = inlined_call_operand.vmem [shape: f32[1,64], index: 2, kind: input, shape index: {}]
  %s3 = inlined_call_operand.vmem [shape: f32[8,64], index: 3, kind: output, shape index: {}]
  %s4 = sld [smem:[#allocation0]]
  $region30: #{block_forward.27} parent=0
    _
  %s6 = ssub.s32 1, %s4
  %s7 = scalar_select 0, %s6, %s4
  // Predicated region
  $region2: #{block_forward.27} parent=0 // pred_check
    _
  $region3: #{block_forward.27} parent=0 // pred_check_branch
    %9 = sbr.rel (0) target = $region5
  $region4: #{block_forward.27} parent=0 // pred_region
    _
  $region5: #{block_forward.27} parent=0 // pred_fallthru
    _
  // Predicated region
  $region6: #{block_forward.27} parent=0 // pred_check
    _
  $region7: #{block_forward.27} parent=0 // pred_check_branch
    %11 = sbr.rel (0) target = $region9
  $region8: #{block_forward.27} parent=0 // pred_region
    _
  $region9: #{block_forward.27} parent=0 // pred_fallthru
    _
  // Predicated region
  $region10: #{block_forward.27} parent=0 // pred_check
    _
  $region11: #{block_forward.27} parent=0 // pred_check_branch
    %13 = sbr.rel (0) target = $region13
  $region12: #{block_forward.27} parent=0 // pred_region
    _
  $region13: #{block_forward.27} parent=0 // pred_fallthru
    _
  %p14 = scmp.eq.s32.totalorder 0, 0
  // Predicated region
  $region14: #{block_forward.27} parent=0 // pred_check
    %p15 = pneg %p14
  $region15: #{block_forward.27} parent=0 // pred_check_branch
    %17 = sbr.rel (%p15) target = $region17
  $region16: #{block_forward.27} parent=0 // pred_region
    %vm18 = vcmask 523264
    %19 = vst.msk [vmem:[#allocation2] sm:$0xff] %vm18, 0.0
  $region17: #{block_forward.27} parent=0 // pred_fallthru
    _
  %v20 = vld [vmem:[#allocation2] sm:$0xff]
  %v21 = vld [vmem:[%s0] sm:$0xff]
  %v22 = vld [vmem:[%s1] sm:$0xff]
  %v23 = vld [vmem:[%s1 + $0x8] sm:$0xff]
  %v24 = vld [vmem:[%s1 + $0x10] sm:$0xff]
  %v25 = vld [vmem:[%s1 + $0x18] sm:$0xff]
  %v26 = vld [vmem:[%s1 + $0x20] sm:$0xff]
  %v27 = vld [vmem:[%s1 + $0x28] sm:$0xff]
  %v28 = vld [vmem:[%s1 + $0x30] sm:$0xff]
  %v29 = vld [vmem:[%s1 + $0x38] sm:$0xff]
  %vm30 = vcmask 523264
  %v32 = vsel %vm30, %v21, 0
  %34 = vmatprep.subr.mxu0 0.0
  %35 = vmatpush1.msra.mxu0 0.0
  %36 = vmatprep.subr.mxu0 0.0
  %37 = vmatpush1.msra.mxu0 0.0
  %38 = vmatprep.subr.mxu0 0.0
  %39 = vmatpush1.msra.mxu0 0.0
  %40 = vmatprep.subr.mxu0 0.0
  %41 = vmatpush1.msra.mxu0 0.0
  %42 = vmatprep.subr.mxu0 0.0
  %43 = vmatpush1.msra.mxu0 0.0
  %44 = vmatprep.subr.mxu0 0.0
  %45 = vmatpush1.msra.mxu0 0.0
  %46 = vmatprep.subr.mxu0 0.0
  %47 = vmatpush1.msra.mxu0 0.0
  %48 = vmatprep.subr.mxu0 0.0
  %49 = vmatpush1.msra.mxu0 0.0
  %50 = vmatprep.subr.mxu0 0.0
  %51 = vmatpush1.msra.mxu0 %v29
  %52 = vmatprep.subr.mxu0 0.0
  %53 = vmatpush1.msra.mxu0 %v28
  %54 = vmatprep.subr.mxu0 0.0
  %55 = vmatpush1.msra.mxu0 %v27
  %56 = vmatprep.subr.mxu0 0.0
  %57 = vmatpush1.msra.mxu0 %v26
  %58 = vmatprep.subr.mxu0 0.0
  %59 = vmatpush1.msra.mxu0 %v25
  %60 = vmatprep.subr.mxu0 0.0
  %61 = vmatpush1.msra.mxu0 %v24
  %62 = vmatprep.subr.mxu0 0.0
  %63 = vmatpush1.msra.mxu0 %v23
  %64 = vmatprep.subr.mxu0 0.0
  %65 = vmatpush1.msra.mxu0 %v22
  %66 = vmatprep.subr.mxu0 0.0
  %67 = vmatpush2.msra.mxu0 0.0
  %68 = vmatprep.subr.mxu0 0.0
  %69 = vmatpush2.msra.mxu0 0.0
  %70 = vmatprep.subr.mxu0 0.0
  %71 = vmatpush2.msra.mxu0 0.0
  %72 = vmatprep.subr.mxu0 0.0
  %73 = vmatpush2.msra.mxu0 0.0
  %74 = vmatprep.subr.mxu0 0.0
  %75 = vmatpush2.msra.mxu0 0.0
  %76 = vmatprep.subr.mxu0 0.0
  %77 = vmatpush2.msra.mxu0 0.0
  %78 = vmatprep.subr.mxu0 0.0
  %79 = vmatpush2.msra.mxu0 0.0
  %80 = vmatprep.subr.mxu0 0.0
  %81 = vmatpush2.msra.mxu0 0.0
  %82 = vmatprep.subr.mxu0 0.0
  %83 = vmatpush2.msra.mxu0 0.0
  %84 = vmatprep.subr.mxu0 0.0
  %85 = vmatpush2.msra.mxu0 0.0
  %86 = vmatprep.subr.mxu0 0.0
  %87 = vmatpush2.msra.mxu0 0.0
  %88 = vmatprep.subr.mxu0 0.0
  %89 = vmatpush2.msra.mxu0 0.0
  %90 = vmatprep.subr.mxu0 0.0
  %91 = vmatpush2.msra.mxu0 0.0
  %92 = vmatprep.subr.mxu0 0.0
  %93 = vmatpush2.msra.mxu0 0.0
  %94 = vmatprep.subr.mxu0 0.0
  %95 = vmatpush2.msra.mxu0 0.0
  %96 = vmatprep.subr.mxu0 0.0
  %97 = vmatpush2.msra.mxu0 0.0
  %98 = vmatprep.mubr.f32.mxu0 0.0
  %99 = vmatmul.mubr.f32.gmra.mxu0 %v32
  %v100 = vpop.f32.mrf.mxu0
  %v101 = vadd.f32 0.0, %v100
  %v102 = vpop.f32.mrf.mxu0
  %103 = vdwg.mxu0
  %v104 = vadd.f32 %v20, %v101
  %105 = vst.msk [vmem:[#allocation2] sm:$0xff] %vm30, %v104
  // Predicated region
  $region18: #{block_forward.27} parent=0 // pred_check
    %p106 = pneg %p14
  $region19: #{block_forward.27} parent=0 // pred_check_branch
    %108 = sbr.rel (%p106) target = $region21
  $region20: #{block_forward.27} parent=0 // pred_region
    %v109 = vld [vmem:[#allocation2] sm:$0xff]
    %v110 = vld [vmem:[%s2] sm:$0x1]
    %v112 = vlaneseq
    %v113 = vshrl.u32 %v112, 7
    %v114 = vsub.s32 0, %v113
    %v115 = vrot.slane %v110, %v114
    %v117 = vadd.f32 %v109, %v115
    %118 = vst.msk [vmem:[%s3] sm:$0xff] %vm30, %v117
  $region21: #{block_forward.27} parent=0 // pred_fallthru
    _
  // Predicated region
  $region22: #{block_forward.27} parent=0 // pred_check
    _
  $region23: #{block_forward.27} parent=0 // pred_check_branch
    %120 = sbr.rel (0) target = $region25
  $region24: #{block_forward.27} parent=0 // pred_region
    _
  $region25: #{block_forward.27} parent=0 // pred_fallthru
    _
  // Predicated region
  $region26: #{block_forward.27} parent=0 // pred_check
    _
  $region27: #{block_forward.27} parent=0 // pred_check_branch
    %122 = sbr.rel (0) target = $region29
  $region28: #{block_forward.27} parent=0 // pred_region
    _
  $region29: #{block_forward.27} parent=0 // pred_fallthru
    _

// kernel: block_forward.28
$region0: #{block_forward.28}
  #allocation0 [shape = 'u32[]', space=smem, size = 0x4, offset = 0x4, fixed_abs, tag = 'smem constant byte address 0x4 - core index']
  #allocation1 [shape = 'u32[144,128]{1,0:T(1,128)}', space=vmem, size = 0x12000, scoped, tag = 'internal scratch']
  %s0 = inlined_call_operand.vmem [shape: f32[8,64], index: 0, kind: input, shape index: {}]
  %s1 = inlined_call_operand.vmem [shape: f32[1,64], index: 1, kind: input, shape index: {}]
  %s2 = inlined_call_operand.vmem [shape: f32[1,64], index: 2, kind: input, shape index: {}]
  %s3 = inlined_call_operand.vmem [shape: f32[8,64], index: 3, kind: output, shape index: {}]
  %s4 = sld [smem:[#allocation0]]
  $region22: #{block_forward.28} parent=0
    _
  %s6 = ssub.s32 1, %s4
  %s7 = scalar_select 0, %s6, %s4
  // Predicated region
  $region2: #{block_forward.28} parent=0 // pred_check
    _
  $region3: #{block_forward.28} parent=0 // pred_check_branch
    %9 = sbr.rel (0) target = $region5
  $region4: #{block_forward.28} parent=0 // pred_region
    _
  $region5: #{block_forward.28} parent=0 // pred_fallthru
    _
  // Predicated region
  $region6: #{block_forward.28} parent=0 // pred_check
    _
  $region7: #{block_forward.28} parent=0 // pred_check_branch
    %11 = sbr.rel (0) target = $region9
  $region8: #{block_forward.28} parent=0 // pred_region
    _
  $region9: #{block_forward.28} parent=0 // pred_fallthru
    _
  // Predicated region
  $region10: #{block_forward.28} parent=0 // pred_check
    _
  $region11: #{block_forward.28} parent=0 // pred_check_branch
    %13 = sbr.rel (0) target = $region13
  $region12: #{block_forward.28} parent=0 // pred_region
    _
  $region13: #{block_forward.28} parent=0 // pred_fallthru
    _
  %v14 = vld [vmem:[%s0] sm:$0xff]
  %vm15 = vcmask 523264
  %v16 = vsel %vm15, %v14, 0.0
  %17 = vadd.xlane.f32.xlu0 %v16
  %v18 = vpop.xlane.xlu0 %17
  %v19 = vrcp.pop 64.0
  %v20 = vmul.f32 %v18, %v19
  %v21 = vsub.f32 %v14, %v20
  %v22 = vmul.f32 %v21, %v21
  %v23 = vsel %vm15, %v22, 0.0
  %24 = vadd.xlane.f32.xlu0 %v23
  %v25 = vpop.xlane.xlu0 %24
  %v26 = vmul.f32 %v25, %v19
  %v27 = vadd.f32 %v26, 1e-05
  %v28 = vrsqrt.pop %v27
  %v29 = vmul.f32 %v21, %v28
  %v30 = vld [vmem:[%s1] sm:$0x1]
  %v32 = vlaneseq
  %v33 = vshrl.u32 %v32, 7
  %v34 = vsub.s32 0, %v33
  %v35 = vrot.slane %v30, %v34
  %v37 = vmul.f32 %v29, %v35
  %v38 = vld [vmem:[%s2] sm:$0x1]
  %v40 = vlaneseq
  %v41 = vshrl.u32 %v40, 7
  %v42 = vsub.s32 0, %v41
  %v43 = vrot.slane %v38, %v42
  %v45 = vadd.f32 %v37, %v43
  %46 = vst.msk [vmem:[%s3] sm:$0xff] %vm15, %v45
  // Predicated region
  $region14: #{block_forward.28} parent=0 // pred_check
    _
  $region15: #{block_forward.28} parent=0 // pred_check_branch
    %48 = sbr.rel (0) target = $region17
  $region16: #{block_forward.28} parent=0 // pred_region
    _
  $region17: #{block_forward.28} parent=0 // pred_fallthru
    _
  // Predicated region
  $region18: #{block_forward.28} parent=0 // pred_check
    _
  $region19: #{block_forward.28} parent=0 // pred_check_branch
    %50 = sbr.rel (0) target = $region21
  $region20: #{block_forward.28} parent=0 // pred_region
    _
  $region21: #{block_forward.28} parent=0 // pred_fallthru
    _

// kernel: block_forward.29
$region0: #{block_forward.29}
  #allocation0 [shape = 'u32[]', space=smem, size = 0x4, offset = 0x4, fixed_abs, tag = 'smem constant byte address 0x4 - core index']
  #allocation1 [shape = 'u32[144,128]{1,0:T(1,128)}', space=vmem, size = 0x12000, scoped, tag = 'internal scratch']
  #allocation2 [shape = 'f32[8,256]{1,0:T(8,128)}', space=vmem, size = 0x2000, scoped, tag = 'scratch operand']
  %s0 = inlined_call_operand.vmem [shape: f32[8,64], index: 0, kind: input, shape index: {}]
  %s1 = inlined_call_operand.vmem [shape: f32[64,256], index: 1, kind: input, shape index: {}]
  %s2 = inlined_call_operand.vmem [shape: f32[1,256], index: 2, kind: input, shape index: {}]
  %s3 = inlined_call_operand.vmem [shape: f32[8,256], index: 3, kind: output, shape index: {}]
  %s4 = sld [smem:[#allocation0]]
  $region30: #{block_forward.29} parent=0
    _
  %s6 = ssub.s32 1, %s4
  %s7 = scalar_select 0, %s6, %s4
  // Predicated region
  $region2: #{block_forward.29} parent=0 // pred_check
    _
  $region3: #{block_forward.29} parent=0 // pred_check_branch
    %9 = sbr.rel (0) target = $region5
  $region4: #{block_forward.29} parent=0 // pred_region
    _
  $region5: #{block_forward.29} parent=0 // pred_fallthru
    _
  // Predicated region
  $region6: #{block_forward.29} parent=0 // pred_check
    _
  $region7: #{block_forward.29} parent=0 // pred_check_branch
    %11 = sbr.rel (0) target = $region9
  $region8: #{block_forward.29} parent=0 // pred_region
    _
  $region9: #{block_forward.29} parent=0 // pred_fallthru
    _
  // Predicated region
  $region10: #{block_forward.29} parent=0 // pred_check
    _
  $region11: #{block_forward.29} parent=0 // pred_check_branch
    %13 = sbr.rel (0) target = $region13
  $region12: #{block_forward.29} parent=0 // pred_region
    _
  $region13: #{block_forward.29} parent=0 // pred_fallthru
    _
  %p14 = scmp.eq.s32.totalorder 0, 0
  // Predicated region
  $region14: #{block_forward.29} parent=0 // pred_check
    %p15 = pneg %p14
  $region15: #{block_forward.29} parent=0 // pred_check_branch
    %17 = sbr.rel (%p15) target = $region17
  $region16: #{block_forward.29} parent=0 // pred_region
    %18 = vst [vmem:[#allocation2] sm:$0xff] 0.0
    %19 = vst [vmem:[#allocation2 + $0x8] sm:$0xff] 0.0
  $region17: #{block_forward.29} parent=0 // pred_fallthru
    _
  %v20 = vld [vmem:[#allocation2] sm:$0xff]
  %v21 = vld [vmem:[#allocation2 + $0x8] sm:$0xff]
  %v22 = vld [vmem:[%s0] sm:$0xff]
  %v23 = vld [vmem:[%s1] sm:$0xff]
  %v24 = vld [vmem:[%s1 + $0x8] sm:$0xff]
  %v25 = vld [vmem:[%s1 + $0x10] sm:$0xff]
  %v26 = vld [vmem:[%s1 + $0x18] sm:$0xff]
  %v27 = vld [vmem:[%s1 + $0x20] sm:$0xff]
  %v28 = vld [vmem:[%s1 + $0x28] sm:$0xff]
  %v29 = vld [vmem:[%s1 + $0x30] sm:$0xff]
  %v30 = vld [vmem:[%s1 + $0x38] sm:$0xff]
  %v31 = vld [vmem:[%s1 + $0x40] sm:$0xff]
  %v32 = vld [vmem:[%s1 + $0x48] sm:$0xff]
  %v33 = vld [vmem:[%s1 + $0x50] sm:$0xff]
  %v34 = vld [vmem:[%s1 + $0x58] sm:$0xff]
  %v35 = vld [vmem:[%s1 + $0x60] sm:$0xff]
  %v36 = vld [vmem:[%s1 + $0x68] sm:$0xff]
  %v37 = vld [vmem:[%s1 + $0x70] sm:$0xff]
  %v38 = vld [vmem:[%s1 + $0x78] sm:$0xff]
  %vm39 = vcmask 523264
  %v41 = vsel %vm39, %v22, 0
  %43 = vmatprep.subr.mxu0 0.0
  %44 = vmatpush1.msra.mxu0 0.0
  %45 = vmatprep.subr.mxu0 0.0
  %46 = vmatpush1.msra.mxu0 0.0
  %47 = vmatprep.subr.mxu0 0.0
  %48 = vmatpush1.msra.mxu0 0.0
  %49 = vmatprep.subr.mxu0 0.0
  %50 = vmatpush1.msra.mxu0 0.0
  %51 = vmatprep.subr.mxu0 0.0
  %52 = vmatpush1.msra.mxu0 0.0
  %53 = vmatprep.subr.mxu0 0.0
  %54 = vmatpush1.msra.mxu0 0.0
  %55 = vmatprep.subr.mxu0 0.0
  %56 = vmatpush1.msra.mxu0 0.0
  %57 = vmatprep.subr.mxu0 0.0
  %58 = vmatpush1.msra.mxu0 0.0
  %59 = vmatprep.subr.mxu0 %v38
  %60 = vmatpush1.msra.mxu0 %v37
  %61 = vmatprep.subr.mxu0 %v36
  %62 = vmatpush1.msra.mxu0 %v35
  %63 = vmatprep.subr.mxu0 %v34
  %64 = vmatpush1.msra.mxu0 %v33
  %65 = vmatprep.subr.mxu0 %v32
  %66 = vmatpush1.msra.mxu0 %v31
  %67 = vmatprep.subr.mxu0 %v30
  %68 = vmatpush1.msra.mxu0 %v29
  %69 = vmatprep.subr.mxu0 %v28
  %70 = vmatpush1.msra.mxu0 %v27
  %71 = vmatprep.subr.mxu0 %v26
  %72 = vmatpush1.msra.mxu0 %v25
  %73 = vmatprep.subr.mxu0 %v24
  %74 = vmatpush1.msra.mxu0 %v23
  %75 = vmatprep.subr.mxu0 0.0
  %76 = vmatpush2.msra.mxu0 0.0
  %77 = vmatprep.subr.mxu0 0.0
  %78 = vmatpush2.msra.mxu0 0.0
  %79 = vmatprep.subr.mxu0 0.0
  %80 = vmatpush2.msra.mxu0 0.0
  %81 = vmatprep.subr.mxu0 0.0
  %82 = vmatpush2.msra.mxu0 0.0
  %83 = vmatprep.subr.mxu0 0.0
  %84 = vmatpush2.msra.mxu0 0.0
  %85 = vmatprep.subr.mxu0 0.0
  %86 = vmatpush2.msra.mxu0 0.0
  %87 = vmatprep.subr.mxu0 0.0
  %88 = vmatpush2.msra.mxu0 0.0
  %89 = vmatprep.subr.mxu0 0.0
  %90 = vmatpush2.msra.mxu0 0.0
  %91 = vmatprep.subr.mxu0 0.0
  %92 = vmatpush2.msra.mxu0 0.0
  %93 = vmatprep.subr.mxu0 0.0
  %94 = vmatpush2.msra.mxu0 0.0
  %95 = vmatprep.subr.mxu0 0.0
  %96 = vmatpush2.msra.mxu0 0.0
  %97 = vmatprep.subr.mxu0 0.0
  %98 = vmatpush2.msra.mxu0 0.0
  %99 = vmatprep.subr.mxu0 0.0
  %100 = vmatpush2.msra.mxu0 0.0
  %101 = vmatprep.subr.mxu0 0.0
  %102 = vmatpush2.msra.mxu0 0.0
  %103 = vmatprep.subr.mxu0 0.0
  %104 = vmatpush2.msra.mxu0 0.0
  %105 = vmatprep.subr.mxu0 0.0
  %106 = vmatpush2.msra.mxu0 0.0
  %107 = vmatprep.mubr.f32.mxu0 0.0
  %108 = vmatmul.mubr.f32.gmra.mxu0 %v41
  %v109 = vpop.f32.mrf.mxu0
  %v110 = vadd.f32 0.0, %v109
  %v111 = vpop.f32.mrf.mxu0
  %v112 = vadd.f32 0.0, %v111
  %113 = vdwg.mxu0
  %v114 = vadd.f32 %v20, %v110
  %v115 = vadd.f32 %v21, %v112
  %116 = vst [vmem:[#allocation2] sm:$0xff] %v114
  %117 = vst [vmem:[#allocation2 + $0x8] sm:$0xff] %v115
  // Predicated region
  $region18: #{block_forward.29} parent=0 // pred_check
    %p118 = pneg %p14
  $region19: #{block_forward.29} parent=0 // pred_check_branch
    %120 = sbr.rel (%p118) target = $region21
  $region20: #{block_forward.29} parent=0 // pred_region
    %v121 = vld [vmem:[#allocation2] sm:$0xff]
    %v122 = vld [vmem:[#allocation2 + $0x8] sm:$0xff]
    %v123 = vld [vmem:[%s2] sm:$0x3]
    %v125 = vlaneseq
    %v126 = vshrl.u32 %v125, 7
    %v127 = vsub.s32 0, %v126
    %v128 = vrot.slane %v123, %v127
    %v129 = vlaneseq
    %v130 = vshrl.u32 %v129, 7
    %v131 = vsub.s32 1, %v130
    %v132 = vrot.slane %v123, %v131
    %v135 = vadd.f32 %v121, %v128
    %v136 = vadd.f32 %v122, %v132
    %v137 = vxor.u32 %v135, 2147483648
    %v138 = vxor.u32 %v136, 2147483648
    %v139 = vmul.f32 %v137, 1.442695
    %v140 = vpow.pop %v139
    %v141 = vmul.f32 %v138, 1.442695
    %v142 = vpow.pop %v141
    %v143 = vadd.f32 %v140, 1.0
    %v144 = vadd.f32 %v142, 1.0
    %v145 = vrcp.pop %v143
    %v146 = vmul.f32 1.0, %v145
    %v147 = vrcp.pop %v144
    %v148 = vmul.f32 1.0, %v147
    %v149 = vmul.f32 %v135, %v146
    %v150 = vmul.f32 %v136, %v148
    %151 = vst [vmem:[%s3] sm:$0xff] %v149
    %152 = vst [vmem:[%s3 + $0x8] sm:$0xff] %v150
  $region21: #{block_forward.29} parent=0 // pred_fallthru
    _
  // Predicated region
  $region22: #{block_forward.29} parent=0 // pred_check
    _
  $region23: #{block_forward.29} parent=0 // pred_check_branch
    %154 = sbr.rel (0) target = $region25
  $region24: #{block_forward.29} parent=0 // pred_region
    _
  $region25: #{block_forward.29} parent=0 // pred_fallthru
    _
  // Predicated region
  $region26: #{block_forward.29} parent=0 // pred_check
    _
  $region27: #{block_forward.29} parent=0 // pred_check_branch
    %156 = sbr.rel (0) target = $region29
  $region28: #{block_forward.29} parent=0 // pred_region
    _
  $region29: #{block_forward.29} parent=0 // pred_fallthru
    _

// kernel: block_forward.30
$region0: #{block_forward.30}
  #allocation0 [shape = 'u32[]', space=smem, size = 0x4, offset = 0x4, fixed_abs, tag = 'smem constant byte address 0x4 - core index']
  #allocation1 [shape = 'u32[144,128]{1,0:T(1,128)}', space=vmem, size = 0x12000, scoped, tag = 'internal scratch']
  #allocation2 [shape = 'f32[8,64]{1,0:T(8,128)}', space=vmem, size = 0x1000, scoped, tag = 'scratch operand']
  %s0 = inlined_call_operand.vmem [shape: f32[8,256], index: 0, kind: input, shape index: {}]
  %s1 = inlined_call_operand.vmem [shape: f32[256,64], index: 1, kind: input, shape index: {}]
  %s2 = inlined_call_operand.vmem [shape: f32[1,64], index: 2, kind: input, shape index: {}]
  %s3 = inlined_call_operand.vmem [shape: f32[8,64], index: 3, kind: output, shape index: {}]
  %s4 = sld [smem:[#allocation0]]
  $region30: #{block_forward.30} parent=0
    _
  %s6 = ssub.s32 1, %s4
  %s7 = scalar_select 0, %s6, %s4
  // Predicated region
  $region2: #{block_forward.30} parent=0 // pred_check
    _
  $region3: #{block_forward.30} parent=0 // pred_check_branch
    %9 = sbr.rel (0) target = $region5
  $region4: #{block_forward.30} parent=0 // pred_region
    _
  $region5: #{block_forward.30} parent=0 // pred_fallthru
    _
  // Predicated region
  $region6: #{block_forward.30} parent=0 // pred_check
    _
  $region7: #{block_forward.30} parent=0 // pred_check_branch
    %11 = sbr.rel (0) target = $region9
  $region8: #{block_forward.30} parent=0 // pred_region
    _
  $region9: #{block_forward.30} parent=0 // pred_fallthru
    _
  // Predicated region
  $region10: #{block_forward.30} parent=0 // pred_check
    _
  $region11: #{block_forward.30} parent=0 // pred_check_branch
    %13 = sbr.rel (0) target = $region13
  $region12: #{block_forward.30} parent=0 // pred_region
    _
  $region13: #{block_forward.30} parent=0 // pred_fallthru
    _
  %p14 = scmp.eq.s32.totalorder 0, 0
  // Predicated region
  $region14: #{block_forward.30} parent=0 // pred_check
    %p15 = pneg %p14
  $region15: #{block_forward.30} parent=0 // pred_check_branch
    %17 = sbr.rel (%p15) target = $region17
  $region16: #{block_forward.30} parent=0 // pred_region
    %vm18 = vcmask 523264
    %19 = vst.msk [vmem:[#allocation2] sm:$0xff] %vm18, 0.0
  $region17: #{block_forward.30} parent=0 // pred_fallthru
    _
  %v20 = vld [vmem:[#allocation2] sm:$0xff]
  %v21 = vld [vmem:[%s0] sm:$0xff]
  %v22 = vld [vmem:[%s0 + $0x8] sm:$0xff]
  %v23 = vld [vmem:[%s1] sm:$0xff]
  %v24 = vld [vmem:[%s1 + $0x8] sm:$0xff]
  %v25 = vld [vmem:[%s1 + $0x10] sm:$0xff]
  %v26 = vld [vmem:[%s1 + $0x18] sm:$0xff]
  %v27 = vld [vmem:[%s1 + $0x20] sm:$0xff]
  %v28 = vld [vmem:[%s1 + $0x28] sm:$0xff]
  %v29 = vld [vmem:[%s1 + $0x30] sm:$0xff]
  %v30 = vld [vmem:[%s1 + $0x38] sm:$0xff]
  %v31 = vld [vmem:[%s1 + $0x40] sm:$0xff]
  %v32 = vld [vmem:[%s1 + $0x48] sm:$0xff]
  %v33 = vld [vmem:[%s1 + $0x50] sm:$0xff]
  %v34 = vld [vmem:[%s1 + $0x58] sm:$0xff]
  %v35 = vld [vmem:[%s1 + $0x60] sm:$0xff]
  %v36 = vld [vmem:[%s1 + $0x68] sm:$0xff]
  %v37 = vld [vmem:[%s1 + $0x70] sm:$0xff]
  %v38 = vld [vmem:[%s1 + $0x78] sm:$0xff]
  %v39 = vld [vmem:[%s1 + $0x80] sm:$0xff]
  %v40 = vld [vmem:[%s1 + $0x88] sm:$0xff]
  %v41 = vld [vmem:[%s1 + $0x90] sm:$0xff]
  %v42 = vld [vmem:[%s1 + $0x98] sm:$0xff]
  %v43 = vld [vmem:[%s1 + $0xa0] sm:$0xff]
  %v44 = vld [vmem:[%s1 + $0xa8] sm:$0xff]
  %v45 = vld [vmem:[%s1 + $0xb0] sm:$0xff]
  %v46 = vld [vmem:[%s1 + $0xb8] sm:$0xff]
  %v47 = vld [vmem:[%s1 + $0xc0] sm:$0xff]
  %v48 = vld [vmem:[%s1 + $0xc8] sm:$0xff]
  %v49 = vld [vmem:[%s1 + $0xd0] sm:$0xff]
  %v50 = vld [vmem:[%s1 + $0xd8] sm:$0xff]
  %v51 = vld [vmem:[%s1 + $0xe0] sm:$0xff]
  %v52 = vld [vmem:[%s1 + $0xe8] sm:$0xff]
  %v53 = vld [vmem:[%s1 + $0xf0] sm:$0xff]
  %v54 = vld [vmem:[%s1 + $0xf8] sm:$0xff]
  %55 = vmatprep.subr.mxu0 0.0
  %56 = vmatpush1.msra.mxu0 %v38
  %57 = vmatprep.subr.mxu0 0.0
  %58 = vmatpush1.msra.mxu0 %v37
  %59 = vmatprep.subr.mxu0 0.0
  %60 = vmatpush1.msra.mxu0 %v36
  %61 = vmatprep.subr.mxu0 0.0
  %62 = vmatpush1.msra.mxu0 %v35
  %63 = vmatprep.subr.mxu0 0.0
  %64 = vmatpush1.msra.mxu0 %v34
  %65 = vmatprep.subr.mxu0 0.0
  %66 = vmatpush1.msra.mxu0 %v33
  %67 = vmatprep.subr.mxu0 0.0
  %68 = vmatpush1.msra.mxu0 %v32
  %69 = vmatprep.subr.mxu0 0.0
  %70 = vmatpush1.msra.mxu0 %v31
  %71 = vmatprep.subr.mxu0 0.0
  %72 = vmatpush1.msra.mxu0 %v30
  %73 = vmatprep.subr.mxu0 0.0
  %74 = vmatpush1.msra.mxu0 %v29
  %75 = vmatprep.subr.mxu0 0.0
  %76 = vmatpush1.msra.mxu0 %v28
  %77 = vmatprep.subr.mxu0 0.0
  %78 = vmatpush1.msra.mxu0 %v27
  %79 = vmatprep.subr.mxu0 0.0
  %80 = vmatpush1.msra.mxu0 %v26
  %81 = vmatprep.subr.mxu0 0.0
  %82 = vmatpush1.msra.mxu0 %v25
  %83 = vmatprep.subr.mxu0 0.0
  %84 = vmatpush1.msra.mxu0 %v24
  %85 = vmatprep.subr.mxu0 0.0
  %86 = vmatpush1.msra.mxu0 %v23
  %87 = vmatprep.subr.mxu0 0.0
  %88 = vmatpush2.msra.mxu0 %v54
  %89 = vmatprep.subr.mxu0 0.0
  %90 = vmatpush2.msra.mxu0 %v53
  %91 = vmatprep.subr.mxu0 0.0
  %92 = vmatpush2.msra.mxu0 %v52
  %93 = vmatprep.subr.mxu0 0.0
  %94 = vmatpush2.msra.mxu0 %v51
  %95 = vmatprep.subr.mxu0 0.0
  %96 = vmatpush2.msra.mxu0 %v50
  %97 = vmatprep.subr.mxu0 0.0
  %98 = vmatpush2.msra.mxu0 %v49
  %99 = vmatprep.subr.mxu0 0.0
  %100 = vmatpush2.msra.mxu0 %v48
  %101 = vmatprep.subr.mxu0 0.0
  %102 = vmatpush2.msra.mxu0 %v47
  %103 = vmatprep.subr.mxu0 0.0
  %104 = vmatpush2.msra.mxu0 %v46
  %105 = vmatprep.subr.mxu0 0.0
  %106 = vmatpush2.msra.mxu0 %v45
  %107 = vmatprep.subr.mxu0 0.0
  %108 = vmatpush2.msra.mxu0 %v44
  %109 = vmatprep.subr.mxu0 0.0
  %110 = vmatpush2.msra.mxu0 %v43
  %111 = vmatprep.subr.mxu0 0.0
  %112 = vmatpush2.msra.mxu0 %v42
  %113 = vmatprep.subr.mxu0 0.0
  %114 = vmatpush2.msra.mxu0 %v41
  %115 = vmatprep.subr.mxu0 0.0
  %116 = vmatpush2.msra.mxu0 %v40
  %117 = vmatprep.subr.mxu0 0.0
  %118 = vmatpush2.msra.mxu0 %v39
  %119 = vmatprep.mubr.f32.mxu0 %v22
  %120 = vmatmul.mubr.f32.gmra.mxu0 %v21
  %v121 = vpop.f32.mrf.mxu0
  %v122 = vadd.f32 0.0, %v121
  %v123 = vpop.f32.mrf.mxu0
  %124 = vdwg.mxu0
  %v125 = vadd.f32 %v20, %v122
  %vm126 = vcmask 523264
  %127 = vst.msk [vmem:[#allocation2] sm:$0xff] %vm126, %v125
  // Predicated region
  $region18: #{block_forward.30} parent=0 // pred_check
    %p128 = pneg %p14
  $region19: #{block_forward.30} parent=0 // pred_check_branch
    %130 = sbr.rel (%p128) target = $region21
  $region20: #{block_forward.30} parent=0 // pred_region
    %v131 = vld [vmem:[#allocation2] sm:$0xff]
    %v132 = vld [vmem:[%s2] sm:$0x1]
    %v134 = vlaneseq
    %v135 = vshrl.u32 %v134, 7
    %v136 = vsub.s32 0, %v135
    %v137 = vrot.slane %v132, %v136
    %v139 = vadd.f32 %v131, %v137
    %140 = vst.msk [vmem:[%s3] sm:$0xff] %vm126, %v139
  $region21: #{block_forward.30} parent=0 // pred_fallthru
    _
  // Predicated region
  $region22: #{block_forward.30} parent=0 // pred_check
    _
  $region23: #{block_forward.30} parent=0 // pred_check_branch
    %142 = sbr.rel (0) target = $region25
  $region24: #{block_forward.30} parent=0 // pred_region
    _
  $region25: #{block_forward.30} parent=0 // pred_fallthru
    _
  // Predicated region
  $region26: #{block_forward.30} parent=0 // pred_check
    _
  $region27: #{block_forward.30} parent=0 // pred_check_branch
    %144 = sbr.rel (0) target = $region29
  $region28: #{block_forward.30} parent=0 // pred_region
    _
  $region29: #{block_forward.30} parent=0 // pred_fallthru
    _

// kernel: block_forward.31
$region0: #{block_forward.31}
  #allocation0 [shape = 'u32[]', space=smem, size = 0x4, offset = 0x4, fixed_abs, tag = 'smem constant byte address 0x4 - core index']
  #allocation1 [shape = 'u32[144,128]{1,0:T(1,128)}', space=vmem, size = 0x12000, scoped, tag = 'internal scratch']
  %s0 = inlined_call_operand.vmem [shape: f32[8,64], index: 0, kind: input, shape index: {}]
  %s1 = inlined_call_operand.vmem [shape: f32[8,64], index: 1, kind: input, shape index: {}]
  %s2 = inlined_call_operand.vmem [shape: f32[1,64], index: 2, kind: input, shape index: {}]
  %s3 = inlined_call_operand.vmem [shape: f32[1,64], index: 3, kind: input, shape index: {}]
  %s4 = inlined_call_operand.vmem [shape: f32[8,64], index: 4, kind: output, shape index: {}]
  %s5 = sld [smem:[#allocation0]]
  $region26: #{block_forward.31} parent=0
    _
  %s7 = ssub.s32 1, %s5
  %s8 = scalar_select 0, %s7, %s5
  // Predicated region
  $region2: #{block_forward.31} parent=0 // pred_check
    _
  $region3: #{block_forward.31} parent=0 // pred_check_branch
    %10 = sbr.rel (0) target = $region5
  $region4: #{block_forward.31} parent=0 // pred_region
    _
  $region5: #{block_forward.31} parent=0 // pred_fallthru
    _
  // Predicated region
  $region6: #{block_forward.31} parent=0 // pred_check
    _
  $region7: #{block_forward.31} parent=0 // pred_check_branch
    %12 = sbr.rel (0) target = $region9
  $region8: #{block_forward.31} parent=0 // pred_region
    _
  $region9: #{block_forward.31} parent=0 // pred_fallthru
    _
  // Predicated region
  $region10: #{block_forward.31} parent=0 // pred_check
    _
  $region11: #{block_forward.31} parent=0 // pred_check_branch
    %14 = sbr.rel (0) target = $region13
  $region12: #{block_forward.31} parent=0 // pred_region
    _
  $region13: #{block_forward.31} parent=0 // pred_fallthru
    _
  // Predicated region
  $region14: #{block_forward.31} parent=0 // pred_check
    _
  $region15: #{block_forward.31} parent=0 // pred_check_branch
    %16 = sbr.rel (0) target = $region17
  $region16: #{block_forward.31} parent=0 // pred_region
    _
  $region17: #{block_forward.31} parent=0 // pred_fallthru
    _
  %v17 = vld [vmem:[%s0] sm:$0xff]
  %v18 = vld [vmem:[%s1] sm:$0xff]
  %v19 = vadd.f32 %v17, %v18
  %vm20 = vcmask 523264
  %v21 = vsel %vm20, %v19, 0.0
  %22 = vadd.xlane.f32.xlu0 %v21
  %v23 = vpop.xlane.xlu0 %22
  %v24 = vrcp.pop 64.0
  %v25 = vmul.f32 %v23, %v24
  %v26 = vsub.f32 %v19, %v25
  %v27 = vmul.f32 %v26, %v26
  %v28 = vsel %vm20, %v27, 0.0
  %29 = vadd.xlane.f32.xlu0 %v28
  %v30 = vpop.xlane.xlu0 %29
  %v31 = vmul.f32 %v30, %v24
  %v32 = vadd.f32 %v31, 1e-05
  %v33 = vrsqrt.pop %v32
  %v34 = vmul.f32 %v26, %v33
  %v35 = vld [vmem:[%s2] sm:$0x1]
  %v37 = vlaneseq
  %v38 = vshrl.u32 %v37, 7
  %v39 = vsub.s32 0, %v38
  %v40 = vrot.slane %v35, %v39
  %v42 = vmul.f32 %v34, %v40
  %v43 = vld [vmem:[%s3] sm:$0x1]
  %v45 = vlaneseq
  %v46 = vshrl.u32 %v45, 7
  %v47 = vsub.s32 0, %v46
  %v48 = vrot.slane %v43, %v47
  %v50 = vadd.f32 %v42, %v48
  %51 = vst.msk [vmem:[%s4] sm:$0xff] %vm20, %v50
  // Predicated region
  $region18: #{block_forward.31} parent=0 // pred_check
    _
  $region19: #{block_forward.31} parent=0 // pred_check_branch
    %53 = sbr.rel (0) target = $region21
  $region20: #{block_forward.31} parent=0 // pred_region
    _
  $region21: #{block_forward.31} parent=0 // pred_fallthru
    _
  // Predicated region
  $region22: #{block_forward.31} parent=0 // pred_check
    _
  $region23: #{block_forward.31} parent=0 // pred_check_branch
    %55 = sbr.rel (0) target = $region25
  $region24: #{block_forward.31} parent=0 // pred_region
    _
  $region25: #{block_forward.31} parent=0 // pred_fallthru
    _

</llo_original>
